<compile_context>
chip_gen: v7x
topology: tpu7x:2x2x1
jax: 0.10.0
libtpu: 0.0.40
codegen_flags: <defaults>
</compile_context>

<pallas_src>
import jax
import jax.numpy as jnp
from jax import lax
from jax.experimental import pallas as pl
from jax.experimental.pallas import tpu as pltpu


# --------------------------- fused kernel ---------------------------------

def _make_fused_kernel(T, Bp, unroll):
    """Encoder MLP + num_layers LSTM + Linear head, all in one kernel.

    Inputs (all full-array VMEM blocks):
      enc_in (T*Bp, C) f32, mask (T*Bp, 1) f32,
      w1 (C, Ep) f32, b1 (1, Ep) f32, w2 (Ep, H) f32, b2 (1, H) f32,
      w_ih (L, H, 4H) bf16, w_hh (L, H, 4H) bf16, b (L, 1, 4H) f32,
      out_w (H, Op) f32, out_b (1, Op) f32
    Outputs: h_T (Bp, H) f32, head output (Bp, Op) f32
    Scratch: x slab (T*Bp, H) f32 (inter-layer activations, overwritten in place),
             gx slab (T*Bp, 4H) f32 (hoisted input-projection pre-activations)
    """

    def kernel(enc_in_ref, mask_ref, w1_ref, b1_ref, w2_ref, b2_ref,
               wih_ref, whh_ref, b_ref, outw_ref, outb_ref,
               h_out_ref, out_ref, x_scr, gx_scr):
        H = x_scr.shape[-1]
        L = wih_ref.shape[0]
        G = 4 * H

        # ---- EventEncoder MLP: relu(x@w1+b1) @ w2 + b2, then * attention mask ----
        h1 = jnp.maximum(
            jnp.dot(enc_in_ref[...], w1_ref[...], preferred_element_type=jnp.float32)
            + b1_ref[...], 0.0)
        ev = jnp.dot(h1, w2_ref[...], preferred_element_type=jnp.float32) + b2_ref[...]
        x_scr[...] = ev * mask_ref[...]                 # mask (T*Bp,1) broadcasts over features

        # Per-lane gate affine constants for the fused [i|f|g|o] lane layout:
        #   sigmoid(x) = 0.5*tanh(0.5*x) + 0.5   (gates i, f, o)
        #   tanh(x)    = 1.0*tanh(1.0*x) + 0.0   (gate g)
        # -> ONE EUP tanh over the full (Bp, 4H) pre-activation handles all four gates.
        lane = lax.broadcasted_iota(jnp.int32, (Bp, G), 1)
        is_g = (lane >= 2 * H) & (lane < 3 * H)
        scale = jnp.where(is_g, 1.0, 0.5).astype(jnp.float32)   # pre- and post-scale coincide
        shift = jnp.where(is_g, 0.0, 0.5).astype(jnp.float32)

        zeros = jnp.zeros((Bp, H), jnp.float32)
        hT = zeros

        for l in range(L):                               # static layer loop (L = 3)
            # Hoisted batched input projection for the whole sequence: one MXU matmul.
            gx_scr[...] = (jnp.dot(x_scr[...].astype(jnp.bfloat16), wih_ref[l],
                                   preferred_element_type=jnp.float32)
                           + b_ref[l])
            whh_l = whh_ref[l]                           # (H, 4H) bf16, loaded once per layer

            def step(t, carry, l=l, whh_l=whh_l):
                h, c = carry
                row = pl.multiple_of(t * Bp, Bp)
                pre = gx_scr[pl.ds(row, Bp), :] + jnp.dot(
                    h.astype(jnp.bfloat16), whh_l, preferred_element_type=jnp.float32)
                act = scale * jnp.tanh(scale * pre) + shift      # one full-vreg EUP push
                i = act[:, 0 * H:1 * H]
                f = act[:, 1 * H:2 * H]
                g = act[:, 2 * H:3 * H]
                o = act[:, 3 * H:4 * H]
                c_new = f * c + i * g
                h_new = o * jnp.tanh(c_new)
                if l < L - 1:                            # last layer's sequence output is unused
                    x_scr[pl.ds(row, Bp), :] = h_new
                return h_new, c_new

            hT, _cT = lax.fori_loop(0, T, step, (zeros, zeros), unroll=unroll)

        # ---- fused output head on h_T (lane-padded to 128 for dense stores) ----
        h_out_ref[...] = hT
        out_ref[...] = (jnp.dot(hT, outw_ref[...], preferred_element_type=jnp.float32)
                        + outb_ref[...])

    return kernel


# --------------------------- wrapper ---------------------------------

def _padded_nbytes(shape, dtype):
    """VMEM footprint estimate with (sublane, 128-lane) layout padding."""
    dt = jnp.dtype(dtype)
    dims = list(shape) if len(shape) >= 2 else [1] + list(shape) + ([1] if not shape else [])
    dims = list(shape)
    if not dims:
        dims = [1, 1]
    if len(dims) == 1:
        dims = [1, dims[0]]
    sub = max(1, 32 // dt.itemsize)
    dims[-1] = -(-dims[-1] // 128) * 128
    dims[-2] = -(-dims[-2] // sub) * sub
    n = 1
    for d in dims:
        n *= d
    return n * dt.itemsize


def _fused_pallas_call(enc_in, mask, w1, b1, w2, b2, w_ih, w_hh, b, out_w, out_b,
                       *, T, Bp, H, unroll):
    Op = out_w.shape[1]
    args = (enc_in, mask, w1, b1, w2, b2, w_ih, w_hh, b, out_w, out_b)
    scratch_specs = [
        pltpu.VMEM((T * Bp, H), jnp.float32),        # inter-layer activation slab
        pltpu.VMEM((T * Bp, 4 * H), jnp.float32),    # fused hoisted gate pre-activations
    ]
    out_shape = (jax.ShapeDtypeStruct((Bp, H), jnp.float32),   # h_T (padded batch)
                 jax.ShapeDtypeStruct((Bp, Op), jnp.float32))  # head output (lane-padded)

    total = sum(_padded_nbytes(a.shape, a.dtype) for a in args)
    total += _padded_nbytes((T * Bp, H), jnp.float32)
    total += _padded_nbytes((T * Bp, 4 * H), jnp.float32)
    total += _padded_nbytes((Bp, H), jnp.float32)
    total += _padded_nbytes((Bp, Op), jnp.float32)
    # 2x headroom + 2 MiB slack, clamped so the request stays safe on v7x (64 MiB physical).
    vmem_limit = int(min(48 << 20, max(8 << 20, 2 * total + (2 << 20))))

    return pl.pallas_call(
        _make_fused_kernel(T, Bp, unroll),
        out_shape=out_shape,
        scratch_shapes=scratch_specs,
        compiler_params=pltpu.CompilerParams(vmem_limit_bytes=vmem_limit),
    )(*args)


# --------------------------- model ---------------------------------

def init_params(key, vocab_sizes, n_cont, enc_hidden, hidden, out_dim, num_layers):
    keys = iter(jax.random.split(key, 64))
    s = 0.1
    params = {}
    params["emb_tables"] = [
        s * jax.random.normal(next(keys), (v, enc_hidden), jnp.float32) for v in vocab_sizes
    ]
    concat_dim = enc_hidden * len(vocab_sizes) + n_cont
    params["enc_w1"] = s * jax.random.normal(next(keys), (concat_dim, enc_hidden), jnp.float32)
    params["enc_b1"] = s * jax.random.normal(next(keys), (1, enc_hidden), jnp.float32)
    params["enc_w2"] = s * jax.random.normal(next(keys), (enc_hidden, hidden), jnp.float32)
    params["enc_b2"] = s * jax.random.normal(next(keys), (1, hidden), jnp.float32)
    # LSTM weights in lane-concatenated gate layout [i|f|g|o] along the last axis:
    #   w_ih[l][:, g*H:(g+1)*H] == torch weight_ih_l{l}[g*H:(g+1)*H, :].T   (same for w_hh)
    #   b[l] == (bias_ih_l{l} + bias_hh_l{l}) reshaped to (1, 4H)
    # Stored bf16 for MXU throughput (f32 accumulation in-kernel); gate math stays f32.
    params["w_ih"] = (s * jax.random.normal(
        next(keys), (num_layers, hidden, 4 * hidden), jnp.float32)).astype(jnp.bfloat16)
    params["w_hh"] = (s * jax.random.normal(
        next(keys), (num_layers, hidden, 4 * hidden), jnp.float32)).astype(jnp.bfloat16)
    params["b"] = s * jax.random.normal(next(keys), (num_layers, 1, 4 * hidden), jnp.float32)
    params["out_w"] = s * jax.random.normal(next(keys), (hidden, out_dim), jnp.float32)
    params["out_b"] = s * jax.random.normal(next(keys), (1, out_dim), jnp.float32)
    return params


def lstm_model_forward(params, cat_features, cont_features, attention_mask,
                       cat_feature_indexes, cont_feature_indexes, *, unroll=8):
    B, T = attention_mask.shape
    H = params["out_w"].shape[0]
    out_dim = params["out_w"].shape[1]

    # ---- glue: embedding gathers / concat, done TIME-MAJOR so no (B,T,H) transpose later ----
    cat_tm = jnp.transpose(cat_features, (1, 0, 2))                       # (T, B, n_cat)
    cont_tm = jnp.transpose(cont_features, (1, 0, 2))                     # (T, B, n_cont)
    mask_tm = jnp.transpose(attention_mask, (1, 0)).astype(jnp.float32)   # (T, B)

    emb_parts = [jnp.take(tab, cat_tm[..., idx], axis=0)
                 for tab, idx in zip(params["emb_tables"], cat_feature_indexes)]
    cont_sel = cont_tm[..., jnp.array(cont_feature_indexes)].astype(jnp.float32)
    enc_in = jnp.concatenate(emb_parts + [cont_sel], axis=-1)             # (T, B, C)

    # pad batch to a sublane-friendly multiple of 8; padded rows masked to 0, sliced off at end
    Bp = max(8, ((B + 7) // 8) * 8)
    if Bp != B:
        enc_in = jnp.pad(enc_in, ((0, 0), (0, Bp - B), (0, 0)))
        mask_tm = jnp.pad(mask_tm, ((0, 0), (0, Bp - B)))

    C = enc_in.shape[-1]
    enc_in_flat = enc_in.reshape(T * Bp, C)
    mask_flat = mask_tm.reshape(T * Bp, 1)

    # ---- pad encoder hidden to 128 lanes (zero-padded cols/rows -> math unchanged) ----
    Eh = params["enc_w1"].shape[1]
    Ep = -(-max(Eh, 128) // 128) * 128
    w1 = jnp.pad(params["enc_w1"], ((0, 0), (0, Ep - Eh)))
    b1 = jnp.pad(params["enc_b1"], ((0, 0), (0, Ep - Eh)))
    w2 = jnp.pad(params["enc_w2"], ((0, Ep - Eh), (0, 0)))
    b2 = params["enc_b2"]

    # ---- pad output head to 128 lanes for dense stores ----
    Op = -(-max(out_dim, 128) // 128) * 128
    out_w = jnp.pad(params["out_w"], ((0, 0), (0, Op - out_dim)))
    out_b = jnp.pad(params["out_b"], ((0, 0), (0, Op - out_dim)))

    hT_p, out_p = _fused_pallas_call(
        enc_in_flat, mask_flat, w1, b1, w2, b2,
        params["w_ih"], params["w_hh"], params["b"], out_w, out_b,
        T=T, Bp=Bp, H=H, unroll=max(1, min(unroll, T)))

    embedding = hT_p[:B]                     # h[-1] : (B, H)
    out = out_p[:B, :out_dim]                # (B, output_dim)
    return embedding, out


# --------------------------- main ---------------------------------

if __name__ == "__main__":
    B, T = 2, 8
    encoder_hidden_dim = 16
    hidden_dim = 32
    output_dim = 8
    num_layers = 3
    cat_feature_indexes = [0, 1, 2]
    vocab_sizes = [11, 7, 5]
    cont_feature_indexes = [0, 1]
    n_cat, n_cont = len(cat_feature_indexes), len(cont_feature_indexes)

    key = jax.random.PRNGKey(0)
    k_par, k_cat, k_cont, k_mask = jax.random.split(key, 4)

    params = init_params(k_par, vocab_sizes, n_cont, encoder_hidden_dim,
                         hidden_dim, output_dim, num_layers)

    cat_features = jnp.stack(
        [jax.random.randint(jax.random.fold_in(k_cat, i), (B, T), 0, v)
         for i, v in enumerate(vocab_sizes)], axis=-1).astype(jnp.int32)      # (B, T, n_cat)
    cont_features = jax.random.normal(k_cont, (B, T, n_cont), jnp.float32)     # (B, T, n_cont)
    attention_mask = (jax.random.uniform(k_mask, (B, T)) > 0.2).astype(jnp.int32)  # (B, T)

    embedding, out = jax.jit(
        lambda c, f, m: lstm_model_forward(
            params, c, f, m, cat_feature_indexes, cont_feature_indexes)
    )(cat_features, cont_features, attention_mask)

    jax.block_until_ready((embedding, out))
    assert embedding.shape == (B, hidden_dim)
    assert out.shape == (B, output_dim)
    assert bool(jnp.all(jnp.isfinite(embedding))) and bool(jnp.all(jnp.isfinite(out)))
    print("KERNEL_OK")
</pallas_src>

<mosaic_0001>
module attributes {stable_mosaic.version = 11 : i64} {
  func.func @kernel(%arg0: memref<64x50xf32, #tpu.memory_space<vmem>>, %arg1: memref<64x1xf32, #tpu.memory_space<vmem>>, %arg2: memref<50x128xf32, #tpu.memory_space<vmem>>, %arg3: memref<1x128xf32, #tpu.memory_space<vmem>>, %arg4: memref<128x32xf32, #tpu.memory_space<vmem>>, %arg5: memref<1x32xf32, #tpu.memory_space<vmem>>, %arg6: memref<3x32x128xbf16, #tpu.memory_space<vmem>>, %arg7: memref<3x32x128xbf16, #tpu.memory_space<vmem>>, %arg8: memref<3x1x128xf32, #tpu.memory_space<vmem>>, %arg9: memref<32x128xf32, #tpu.memory_space<vmem>>, %arg10: memref<1x128xf32, #tpu.memory_space<vmem>>, %arg11: memref<8x32xf32, #tpu.memory_space<vmem>>, %arg12: memref<8x128xf32, #tpu.memory_space<vmem>>, %arg13: memref<64x32xf32, #tpu.memory_space<vmem>>, %arg14: memref<64x128xf32, #tpu.memory_space<vmem>>) attributes {dimension_semantics = [], scalar_prefetch = 0 : i64, scratch_operands = 2 : i64, tpu.core_type = #tpu.core_type<tc>} {
    %c0 = arith.constant 0 : index
    %c0_0 = arith.constant 0 : index
    %0 = vector.load %arg0[%c0, %c0_0] : memref<64x50xf32, #tpu.memory_space<vmem>>, vector<64x50xf32>
    %c0_1 = arith.constant 0 : index
    %c0_2 = arith.constant 0 : index
    %1 = vector.load %arg2[%c0_1, %c0_2] : memref<50x128xf32, #tpu.memory_space<vmem>>, vector<50x128xf32>
    %cst = arith.constant dense<0.000000e+00> : vector<64x128xf32>
    %2 = tpu.matmul %0, %1, %cst {dimension_numbers = #tpu.dot_dimension_numbers<[1], [0], [0], [1], [0, 0, 1, 1], [], []>} : vector<64x50xf32>, vector<50x128xf32>, vector<64x128xf32> -> vector<64x128xf32>
    %c0_3 = arith.constant 0 : index
    %c0_4 = arith.constant 0 : index
    %3 = vector.load %arg3[%c0_3, %c0_4] : memref<1x128xf32, #tpu.memory_space<vmem>>, vector<1x128xf32>
    %4 = vector.broadcast %3 : vector<1x128xf32> to vector<64x128xf32>
    %5 = arith.addf %2, %4 : vector<64x128xf32>
    %cst_5 = arith.constant 0.000000e+00 : f32
    %6 = vector.broadcast %cst_5 : f32 to vector<64x128xf32>
    %7 = arith.maximumf %5, %6 : vector<64x128xf32>
    %c0_6 = arith.constant 0 : index
    %c0_7 = arith.constant 0 : index
    %8 = vector.load %arg4[%c0_6, %c0_7] : memref<128x32xf32, #tpu.memory_space<vmem>>, vector<128x32xf32>
    %cst_8 = arith.constant dense<0.000000e+00> : vector<64x32xf32>
    %9 = tpu.matmul %7, %8, %cst_8 {dimension_numbers = #tpu.dot_dimension_numbers<[1], [0], [0], [1], [0, 0, 1, 1], [], []>} : vector<64x128xf32>, vector<128x32xf32>, vector<64x32xf32> -> vector<64x32xf32>
    %c0_9 = arith.constant 0 : index
    %c0_10 = arith.constant 0 : index
    %10 = vector.load %arg5[%c0_9, %c0_10] : memref<1x32xf32, #tpu.memory_space<vmem>>, vector<1x32xf32>
    %11 = vector.broadcast %10 : vector<1x32xf32> to vector<64x32xf32>
    %12 = arith.addf %9, %11 : vector<64x32xf32>
    %c0_11 = arith.constant 0 : index
    %c0_12 = arith.constant 0 : index
    %13 = vector.load %arg1[%c0_11, %c0_12] : memref<64x1xf32, #tpu.memory_space<vmem>>, vector<64x1xf32>
    %14 = vector.broadcast %13 : vector<64x1xf32> to vector<64x32xf32>
    %15 = arith.mulf %12, %14 : vector<64x32xf32>
    %c0_13 = arith.constant 0 : index
    %c0_14 = arith.constant 0 : index
    %16 = vector.load %arg13[%c0_13, %c0_14] : memref<64x32xf32, #tpu.memory_space<vmem>>, vector<64x32xf32>
    tpu.vector_store %arg13[%c0_13, %c0_14], %15 {strides = array<i32>} : memref<64x32xf32, #tpu.memory_space<vmem>>, vector<64x32xf32>,
    %17 = tpu.iota {dimensions = array<i32: 1>} : vector<8x128xi32>
    %c64_i32 = arith.constant 64 : i32
    %18 = vector.broadcast %c64_i32 : i32 to vector<8x128xi32>
    %19 = arith.cmpi sge, %17, %18 : vector<8x128xi32>
    %c96_i32 = arith.constant 96 : i32
    %20 = vector.broadcast %c96_i32 : i32 to vector<8x128xi32>
    %21 = arith.cmpi slt, %17, %20 : vector<8x128xi32>
    %22 = arith.andi %19, %21 : vector<8x128xi1>
    %cst_15 = arith.constant 1.000000e+00 : f32
    %cst_16 = arith.constant 5.000000e-01 : f32
    %23 = vector.broadcast %cst_15 : f32 to vector<8x128xf32>
    %24 = vector.broadcast %cst_16 : f32 to vector<8x128xf32>
    %25 = arith.select %22, %23, %24 : vector<8x128xi1>, vector<8x128xf32>
    %cst_17 = arith.constant 0.000000e+00 : f32
    %cst_18 = arith.constant 5.000000e-01 : f32
    %26 = vector.broadcast %cst_17 : f32 to vector<8x128xf32>
    %27 = vector.broadcast %cst_18 : f32 to vector<8x128xf32>
    %28 = arith.select %22, %26, %27 : vector<8x128xi1>, vector<8x128xf32>
    %cst_19 = arith.constant 0.000000e+00 : f32
    %29 = vector.broadcast %cst_19 : f32 to vector<8x32xf32>
    %c0_20 = arith.constant 0 : index
    %c0_21 = arith.constant 0 : index
    %30 = vector.load %arg13[%c0_20, %c0_21] : memref<64x32xf32, #tpu.memory_space<vmem>>, vector<64x32xf32>
    %31 = arith.truncf %30 : vector<64x32xf32> to vector<64x32xbf16>
    %c0_22 = arith.constant 0 : index
    %c0_23 = arith.constant 0 : index
    %c0_24 = arith.constant 0 : index
    %32 = vector.load %arg6[%c0_22, %c0_23, %c0_24] : memref<3x32x128xbf16, #tpu.memory_space<vmem>>, vector<1x32x128xbf16>
    %33 = vector.shape_cast %32 : vector<1x32x128xbf16> to vector<32x128xbf16>
    %cst_25 = arith.constant dense<0.000000e+00> : vector<64x128xf32>
    %34 = tpu.matmul %31, %33, %cst_25 {dimension_numbers = #tpu.dot_dimension_numbers<[1], [0], [0], [1], [0, 0, 1, 1], [], []>} : vector<64x32xbf16>, vector<32x128xbf16>, vector<64x128xf32> -> vector<64x128xf32>
    %c0_26 = arith.constant 0 : index
    %c0_27 = arith.constant 0 : index
    %c0_28 = arith.constant 0 : index
    %35 = vector.load %arg8[%c0_26, %c0_27, %c0_28] : memref<3x1x128xf32, #tpu.memory_space<vmem>>, vector<1x1x128xf32>
    %36 = vector.shape_cast %35 : vector<1x1x128xf32> to vector<1x128xf32>
    %37 = vector.broadcast %36 : vector<1x128xf32> to vector<64x128xf32>
    %38 = arith.addf %34, %37 : vector<64x128xf32>
    %c0_29 = arith.constant 0 : index
    %c0_30 = arith.constant 0 : index
    %39 = vector.load %arg14[%c0_29, %c0_30] : memref<64x128xf32, #tpu.memory_space<vmem>>, vector<64x128xf32>
    tpu.vector_store %arg14[%c0_29, %c0_30], %38 {strides = array<i32>} : memref<64x128xf32, #tpu.memory_space<vmem>>, vector<64x128xf32>,
    %c0_31 = arith.constant 0 : index
    %c0_32 = arith.constant 0 : index
    %c0_33 = arith.constant 0 : index
    %40 = vector.load %arg7[%c0_31, %c0_32, %c0_33] : memref<3x32x128xbf16, #tpu.memory_space<vmem>>, vector<1x32x128xbf16>
    %41 = vector.shape_cast %40 : vector<1x32x128xbf16> to vector<32x128xbf16>
    %c0_i32 = arith.constant 0 : i32
    %c8_i32 = arith.constant 8 : i32
    %42 = arith.muli %c0_i32, %c8_i32 : i32
    %43 = tpu.assume_multiple %42, 8 : i32
    %44 = arith.index_cast %43 : i32 to index
    %c0_34 = arith.constant 0 : index
    %45 = vector.load %arg14[%44, %c0_34] : memref<64x128xf32, #tpu.memory_space<vmem>>, vector<8x128xf32>
    %46 = arith.truncf %29 : vector<8x32xf32> to vector<8x32xbf16>
    %cst_35 = arith.constant dense<0.000000e+00> : vector<8x128xf32>
    %47 = tpu.matmul %46, %41, %cst_35 {dimension_numbers = #tpu.dot_dimension_numbers<[1], [0], [0], [1], [0, 0, 1, 1], [], []>} : vector<8x32xbf16>, vector<32x128xbf16>, vector<8x128xf32> -> vector<8x128xf32>
    %48 = arith.addf %45, %47 : vector<8x128xf32>
    %49 = arith.mulf %25, %48 : vector<8x128xf32>
    %50 = math.tanh %49 : vector<8x128xf32>
    %51 = arith.mulf %25, %50 : vector<8x128xf32>
    %52 = arith.addf %51, %28 : vector<8x128xf32>
    %53 = vector.extract_strided_slice %52 {offsets = [0, 0], sizes = [8, 32], strides = [1, 1]} : vector<8x128xf32> to vector<8x32xf32>
    %54 = vector.extract_strided_slice %52 {offsets = [0, 32], sizes = [8, 32], strides = [1, 1]} : vector<8x128xf32> to vector<8x32xf32>
    %55 = vector.extract_strided_slice %52 {offsets = [0, 64], sizes = [8, 32], strides = [1, 1]} : vector<8x128xf32> to vector<8x32xf32>
    %56 = vector.extract_strided_slice %52 {offsets = [0, 96], sizes = [8, 32], strides = [1, 1]} : vector<8x128xf32> to vector<8x32xf32>
    %57 = arith.mulf %54, %29 : vector<8x32xf32>
    %58 = arith.mulf %53, %55 : vector<8x32xf32>
    %59 = arith.addf %57, %58 : vector<8x32xf32>
    %60 = math.tanh %59 : vector<8x32xf32>
    %61 = arith.mulf %56, %60 : vector<8x32xf32>
    %62 = arith.index_cast %43 : i32 to index
    %c0_36 = arith.constant 0 : index
    %63 = vector.load %arg13[%62, %c0_36] : memref<64x32xf32, #tpu.memory_space<vmem>>, vector<8x32xf32>
    tpu.vector_store %arg13[%62, %c0_36], %61 {strides = array<i32>} : memref<64x32xf32, #tpu.memory_space<vmem>>, vector<8x32xf32>,
    %c1_i32 = arith.constant 1 : i32
    %c8_i32_37 = arith.constant 8 : i32
    %64 = arith.muli %c1_i32, %c8_i32_37 : i32
    %65 = tpu.assume_multiple %64, 8 : i32
    %66 = arith.index_cast %65 : i32 to index
    %c0_38 = arith.constant 0 : index
    %67 = vector.load %arg14[%66, %c0_38] : memref<64x128xf32, #tpu.memory_space<vmem>>, vector<8x128xf32>
    %68 = arith.truncf %61 : vector<8x32xf32> to vector<8x32xbf16>
    %cst_39 = arith.constant dense<0.000000e+00> : vector<8x128xf32>
    %69 = tpu.matmul %68, %41, %cst_39 {dimension_numbers = #tpu.dot_dimension_numbers<[1], [0], [0], [1], [0, 0, 1, 1], [], []>} : vector<8x32xbf16>, vector<32x128xbf16>, vector<8x128xf32> -> vector<8x128xf32>
    %70 = arith.addf %67, %69 : vector<8x128xf32>
    %71 = arith.mulf %25, %70 : vector<8x128xf32>
    %72 = math.tanh %71 : vector<8x128xf32>
    %73 = arith.mulf %25, %72 : vector<8x128xf32>
    %74 = arith.addf %73, %28 : vector<8x128xf32>
    %75 = vector.extract_strided_slice %74 {offsets = [0, 0], sizes = [8, 32], strides = [1, 1]} : vector<8x128xf32> to vector<8x32xf32>
    %76 = vector.extract_strided_slice %74 {offsets = [0, 32], sizes = [8, 32], strides = [1, 1]} : vector<8x128xf32> to vector<8x32xf32>
    %77 = vector.extract_strided_slice %74 {offsets = [0, 64], sizes = [8, 32], strides = [1, 1]} : vector<8x128xf32> to vector<8x32xf32>
    %78 = vector.extract_strided_slice %74 {offsets = [0, 96], sizes = [8, 32], strides = [1, 1]} : vector<8x128xf32> to vector<8x32xf32>
    %79 = arith.mulf %76, %59 : vector<8x32xf32>
    %80 = arith.mulf %75, %77 : vector<8x32xf32>
    %81 = arith.addf %79, %80 : vector<8x32xf32>
    %82 = math.tanh %81 : vector<8x32xf32>
    %83 = arith.mulf %78, %82 : vector<8x32xf32>
    %84 = arith.index_cast %65 : i32 to index
    %c0_40 = arith.constant 0 : index
    %85 = vector.load %arg13[%84, %c0_40] : memref<64x32xf32, #tpu.memory_space<vmem>>, vector<8x32xf32>
    tpu.vector_store %arg13[%84, %c0_40], %83 {strides = array<i32>} : memref<64x32xf32, #tpu.memory_space<vmem>>, vector<8x32xf32>,
    %c2_i32 = arith.constant 2 : i32
    %c8_i32_41 = arith.constant 8 : i32
    %86 = arith.muli %c2_i32, %c8_i32_41 : i32
    %87 = tpu.assume_multiple %86, 8 : i32
    %88 = arith.index_cast %87 : i32 to index
    %c0_42 = arith.constant 0 : index
    %89 = vector.load %arg14[%88, %c0_42] : memref<64x128xf32, #tpu.memory_space<vmem>>, vector<8x128xf32>
    %90 = arith.truncf %83 : vector<8x32xf32> to vector<8x32xbf16>
    %cst_43 = arith.constant dense<0.000000e+00> : vector<8x128xf32>
    %91 = tpu.matmul %90, %41, %cst_43 {dimension_numbers = #tpu.dot_dimension_numbers<[1], [0], [0], [1], [0, 0, 1, 1], [], []>} : vector<8x32xbf16>, vector<32x128xbf16>, vector<8x128xf32> -> vector<8x128xf32>
    %92 = arith.addf %89, %91 : vector<8x128xf32>
    %93 = arith.mulf %25, %92 : vector<8x128xf32>
    %94 = math.tanh %93 : vector<8x128xf32>
    %95 = arith.mulf %25, %94 : vector<8x128xf32>
    %96 = arith.addf %95, %28 : vector<8x128xf32>
    %97 = vector.extract_strided_slice %96 {offsets = [0, 0], sizes = [8, 32], strides = [1, 1]} : vector<8x128xf32> to vector<8x32xf32>
    %98 = vector.extract_strided_slice %96 {offsets = [0, 32], sizes = [8, 32], strides = [1, 1]} : vector<8x128xf32> to vector<8x32xf32>
    %99 = vector.extract_strided_slice %96 {offsets = [0, 64], sizes = [8, 32], strides = [1, 1]} : vector<8x128xf32> to vector<8x32xf32>
    %100 = vector.extract_strided_slice %96 {offsets = [0, 96], sizes = [8, 32], strides = [1, 1]} : vector<8x128xf32> to vector<8x32xf32>
    %101 = arith.mulf %98, %81 : vector<8x32xf32>
    %102 = arith.mulf %97, %99 : vector<8x32xf32>
    %103 = arith.addf %101, %102 : vector<8x32xf32>
    %104 = math.tanh %103 : vector<8x32xf32>
    %105 = arith.mulf %100, %104 : vector<8x32xf32>
    %106 = arith.index_cast %87 : i32 to index
    %c0_44 = arith.constant 0 : index
    %107 = vector.load %arg13[%106, %c0_44] : memref<64x32xf32, #tpu.memory_space<vmem>>, vector<8x32xf32>
    tpu.vector_store %arg13[%106, %c0_44], %105 {strides = array<i32>} : memref<64x32xf32, #tpu.memory_space<vmem>>, vector<8x32xf32>,
    %c3_i32 = arith.constant 3 : i32
    %c8_i32_45 = arith.constant 8 : i32
    %108 = arith.muli %c3_i32, %c8_i32_45 : i32
    %109 = tpu.assume_multiple %108, 8 : i32
    %110 = arith.index_cast %109 : i32 to index
    %c0_46 = arith.constant 0 : index
    %111 = vector.load %arg14[%110, %c0_46] : memref<64x128xf32, #tpu.memory_space<vmem>>, vector<8x128xf32>
    %112 = arith.truncf %105 : vector<8x32xf32> to vector<8x32xbf16>
    %cst_47 = arith.constant dense<0.000000e+00> : vector<8x128xf32>
    %113 = tpu.matmul %112, %41, %cst_47 {dimension_numbers = #tpu.dot_dimension_numbers<[1], [0], [0], [1], [0, 0, 1, 1], [], []>} : vector<8x32xbf16>, vector<32x128xbf16>, vector<8x128xf32> -> vector<8x128xf32>
    %114 = arith.addf %111, %113 : vector<8x128xf32>
    %115 = arith.mulf %25, %114 : vector<8x128xf32>
    %116 = math.tanh %115 : vector<8x128xf32>
    %117 = arith.mulf %25, %116 : vector<8x128xf32>
    %118 = arith.addf %117, %28 : vector<8x128xf32>
    %119 = vector.extract_strided_slice %118 {offsets = [0, 0], sizes = [8, 32], strides = [1, 1]} : vector<8x128xf32> to vector<8x32xf32>
    %120 = vector.extract_strided_slice %118 {offsets = [0, 32], sizes = [8, 32], strides = [1, 1]} : vector<8x128xf32> to vector<8x32xf32>
    %121 = vector.extract_strided_slice %118 {offsets = [0, 64], sizes = [8, 32], strides = [1, 1]} : vector<8x128xf32> to vector<8x32xf32>
    %122 = vector.extract_strided_slice %118 {offsets = [0, 96], sizes = [8, 32], strides = [1, 1]} : vector<8x128xf32> to vector<8x32xf32>
    %123 = arith.mulf %120, %103 : vector<8x32xf32>
    %124 = arith.mulf %119, %121 : vector<8x32xf32>
    %125 = arith.addf %123, %124 : vector<8x32xf32>
    %126 = math.tanh %125 : vector<8x32xf32>
    %127 = arith.mulf %122, %126 : vector<8x32xf32>
    %128 = arith.index_cast %109 : i32 to index
    %c0_48 = arith.constant 0 : index
    %129 = vector.load %arg13[%128, %c0_48] : memref<64x32xf32, #tpu.memory_space<vmem>>, vector<8x32xf32>
    tpu.vector_store %arg13[%128, %c0_48], %127 {strides = array<i32>} : memref<64x32xf32, #tpu.memory_space<vmem>>, vector<8x32xf32>,
    %c4_i32 = arith.constant 4 : i32
    %c8_i32_49 = arith.constant 8 : i32
    %130 = arith.muli %c4_i32, %c8_i32_49 : i32
    %131 = tpu.assume_multiple %130, 8 : i32
    %132 = arith.index_cast %131 : i32 to index
    %c0_50 = arith.constant 0 : index
    %133 = vector.load %arg14[%132, %c0_50] : memref<64x128xf32, #tpu.memory_space<vmem>>, vector<8x128xf32>
    %134 = arith.truncf %127 : vector<8x32xf32> to vector<8x32xbf16>
    %cst_51 = arith.constant dense<0.000000e+00> : vector<8x128xf32>
    %135 = tpu.matmul %134, %41, %cst_51 {dimension_numbers = #tpu.dot_dimension_numbers<[1], [0], [0], [1], [0, 0, 1, 1], [], []>} : vector<8x32xbf16>, vector<32x128xbf16>, vector<8x128xf32> -> vector<8x128xf32>
    %136 = arith.addf %133, %135 : vector<8x128xf32>
    %137 = arith.mulf %25, %136 : vector<8x128xf32>
    %138 = math.tanh %137 : vector<8x128xf32>
    %139 = arith.mulf %25, %138 : vector<8x128xf32>
    %140 = arith.addf %139, %28 : vector<8x128xf32>
    %141 = vector.extract_strided_slice %140 {offsets = [0, 0], sizes = [8, 32], strides = [1, 1]} : vector<8x128xf32> to vector<8x32xf32>
    %142 = vector.extract_strided_slice %140 {offsets = [0, 32], sizes = [8, 32], strides = [1, 1]} : vector<8x128xf32> to vector<8x32xf32>
    %143 = vector.extract_strided_slice %140 {offsets = [0, 64], sizes = [8, 32], strides = [1, 1]} : vector<8x128xf32> to vector<8x32xf32>
    %144 = vector.extract_strided_slice %140 {offsets = [0, 96], sizes = [8, 32], strides = [1, 1]} : vector<8x128xf32> to vector<8x32xf32>
    %145 = arith.mulf %142, %125 : vector<8x32xf32>
    %146 = arith.mulf %141, %143 : vector<8x32xf32>
    %147 = arith.addf %145, %146 : vector<8x32xf32>
    %148 = math.tanh %147 : vector<8x32xf32>
    %149 = arith.mulf %144, %148 : vector<8x32xf32>
    %150 = arith.index_cast %131 : i32 to index
    %c0_52 = arith.constant 0 : index
    %151 = vector.load %arg13[%150, %c0_52] : memref<64x32xf32, #tpu.memory_space<vmem>>, vector<8x32xf32>
    tpu.vector_store %arg13[%150, %c0_52], %149 {strides = array<i32>} : memref<64x32xf32, #tpu.memory_space<vmem>>, vector<8x32xf32>,
    %c5_i32 = arith.constant 5 : i32
    %c8_i32_53 = arith.constant 8 : i32
    %152 = arith.muli %c5_i32, %c8_i32_53 : i32
    %153 = tpu.assume_multiple %152, 8 : i32
    %154 = arith.index_cast %153 : i32 to index
    %c0_54 = arith.constant 0 : index
    %155 = vector.load %arg14[%154, %c0_54] : memref<64x128xf32, #tpu.memory_space<vmem>>, vector<8x128xf32>
    %156 = arith.truncf %149 : vector<8x32xf32> to vector<8x32xbf16>
    %cst_55 = arith.constant dense<0.000000e+00> : vector<8x128xf32>
    %157 = tpu.matmul %156, %41, %cst_55 {dimension_numbers = #tpu.dot_dimension_numbers<[1], [0], [0], [1], [0, 0, 1, 1], [], []>} : vector<8x32xbf16>, vector<32x128xbf16>, vector<8x128xf32> -> vector<8x128xf32>
    %158 = arith.addf %155, %157 : vector<8x128xf32>
    %159 = arith.mulf %25, %158 : vector<8x128xf32>
    %160 = math.tanh %159 : vector<8x128xf32>
    %161 = arith.mulf %25, %160 : vector<8x128xf32>
    %162 = arith.addf %161, %28 : vector<8x128xf32>
    %163 = vector.extract_strided_slice %162 {offsets = [0, 0], sizes = [8, 32], strides = [1, 1]} : vector<8x128xf32> to vector<8x32xf32>
    %164 = vector.extract_strided_slice %162 {offsets = [0, 32], sizes = [8, 32], strides = [1, 1]} : vector<8x128xf32> to vector<8x32xf32>
    %165 = vector.extract_strided_slice %162 {offsets = [0, 64], sizes = [8, 32], strides = [1, 1]} : vector<8x128xf32> to vector<8x32xf32>
    %166 = vector.extract_strided_slice %162 {offsets = [0, 96], sizes = [8, 32], strides = [1, 1]} : vector<8x128xf32> to vector<8x32xf32>
    %167 = arith.mulf %164, %147 : vector<8x32xf32>
    %168 = arith.mulf %163, %165 : vector<8x32xf32>
    %169 = arith.addf %167, %168 : vector<8x32xf32>
    %170 = math.tanh %169 : vector<8x32xf32>
    %171 = arith.mulf %166, %170 : vector<8x32xf32>
    %172 = arith.index_cast %153 : i32 to index
    %c0_56 = arith.constant 0 : index
    %173 = vector.load %arg13[%172, %c0_56] : memref<64x32xf32, #tpu.memory_space<vmem>>, vector<8x32xf32>
    tpu.vector_store %arg13[%172, %c0_56], %171 {strides = array<i32>} : memref<64x32xf32, #tpu.memory_space<vmem>>, vector<8x32xf32>,
    %c6_i32 = arith.constant 6 : i32
    %c8_i32_57 = arith.constant 8 : i32
    %174 = arith.muli %c6_i32, %c8_i32_57 : i32
    %175 = tpu.assume_multiple %174, 8 : i32
    %176 = arith.index_cast %175 : i32 to index
    %c0_58 = arith.constant 0 : index
    %177 = vector.load %arg14[%176, %c0_58] : memref<64x128xf32, #tpu.memory_space<vmem>>, vector<8x128xf32>
    %178 = arith.truncf %171 : vector<8x32xf32> to vector<8x32xbf16>
    %cst_59 = arith.constant dense<0.000000e+00> : vector<8x128xf32>
    %179 = tpu.matmul %178, %41, %cst_59 {dimension_numbers = #tpu.dot_dimension_numbers<[1], [0], [0], [1], [0, 0, 1, 1], [], []>} : vector<8x32xbf16>, vector<32x128xbf16>, vector<8x128xf32> -> vector<8x128xf32>
    %180 = arith.addf %177, %179 : vector<8x128xf32>
    %181 = arith.mulf %25, %180 : vector<8x128xf32>
    %182 = math.tanh %181 : vector<8x128xf32>
    %183 = arith.mulf %25, %182 : vector<8x128xf32>
    %184 = arith.addf %183, %28 : vector<8x128xf32>
    %185 = vector.extract_strided_slice %184 {offsets = [0, 0], sizes = [8, 32], strides = [1, 1]} : vector<8x128xf32> to vector<8x32xf32>
    %186 = vector.extract_strided_slice %184 {offsets = [0, 32], sizes = [8, 32], strides = [1, 1]} : vector<8x128xf32> to vector<8x32xf32>
    %187 = vector.extract_strided_slice %184 {offsets = [0, 64], sizes = [8, 32], strides = [1, 1]} : vector<8x128xf32> to vector<8x32xf32>
    %188 = vector.extract_strided_slice %184 {offsets = [0, 96], sizes = [8, 32], strides = [1, 1]} : vector<8x128xf32> to vector<8x32xf32>
    %189 = arith.mulf %186, %169 : vector<8x32xf32>
    %190 = arith.mulf %185, %187 : vector<8x32xf32>
    %191 = arith.addf %189, %190 : vector<8x32xf32>
    %192 = math.tanh %191 : vector<8x32xf32>
    %193 = arith.mulf %188, %192 : vector<8x32xf32>
    %194 = arith.index_cast %175 : i32 to index
    %c0_60 = arith.constant 0 : index
    %195 = vector.load %arg13[%194, %c0_60] : memref<64x32xf32, #tpu.memory_space<vmem>>, vector<8x32xf32>
    tpu.vector_store %arg13[%194, %c0_60], %193 {strides = array<i32>} : memref<64x32xf32, #tpu.memory_space<vmem>>, vector<8x32xf32>,
    %c7_i32 = arith.constant 7 : i32
    %c8_i32_61 = arith.constant 8 : i32
    %196 = arith.muli %c7_i32, %c8_i32_61 : i32
    %197 = tpu.assume_multiple %196, 8 : i32
    %198 = arith.index_cast %197 : i32 to index
    %c0_62 = arith.constant 0 : index
    %199 = vector.load %arg14[%198, %c0_62] : memref<64x128xf32, #tpu.memory_space<vmem>>, vector<8x128xf32>
    %200 = arith.truncf %193 : vector<8x32xf32> to vector<8x32xbf16>
    %cst_63 = arith.constant dense<0.000000e+00> : vector<8x128xf32>
    %201 = tpu.matmul %200, %41, %cst_63 {dimension_numbers = #tpu.dot_dimension_numbers<[1], [0], [0], [1], [0, 0, 1, 1], [], []>} : vector<8x32xbf16>, vector<32x128xbf16>, vector<8x128xf32> -> vector<8x128xf32>
    %202 = arith.addf %199, %201 : vector<8x128xf32>
    %203 = arith.mulf %25, %202 : vector<8x128xf32>
    %204 = math.tanh %203 : vector<8x128xf32>
    %205 = arith.mulf %25, %204 : vector<8x128xf32>
    %206 = arith.addf %205, %28 : vector<8x128xf32>
    %207 = vector.extract_strided_slice %206 {offsets = [0, 0], sizes = [8, 32], strides = [1, 1]} : vector<8x128xf32> to vector<8x32xf32>
    %208 = vector.extract_strided_slice %206 {offsets = [0, 32], sizes = [8, 32], strides = [1, 1]} : vector<8x128xf32> to vector<8x32xf32>
    %209 = vector.extract_strided_slice %206 {offsets = [0, 64], sizes = [8, 32], strides = [1, 1]} : vector<8x128xf32> to vector<8x32xf32>
    %210 = vector.extract_strided_slice %206 {offsets = [0, 96], sizes = [8, 32], strides = [1, 1]} : vector<8x128xf32> to vector<8x32xf32>
    %211 = arith.mulf %208, %191 : vector<8x32xf32>
    %212 = arith.mulf %207, %209 : vector<8x32xf32>
    %213 = arith.addf %211, %212 : vector<8x32xf32>
    %214 = math.tanh %213 : vector<8x32xf32>
    %215 = arith.mulf %210, %214 : vector<8x32xf32>
    %216 = arith.index_cast %197 : i32 to index
    %c0_64 = arith.constant 0 : index
    %217 = vector.load %arg13[%216, %c0_64] : memref<64x32xf32, #tpu.memory_space<vmem>>, vector<8x32xf32>
    tpu.vector_store %arg13[%216, %c0_64], %215 {strides = array<i32>} : memref<64x32xf32, #tpu.memory_space<vmem>>, vector<8x32xf32>,
    %c8_i32_65 = arith.constant 8 : i32
    %c0_66 = arith.constant 0 : index
    %c0_67 = arith.constant 0 : index
    %218 = vector.load %arg13[%c0_66, %c0_67] : memref<64x32xf32, #tpu.memory_space<vmem>>, vector<64x32xf32>
    %219 = arith.truncf %218 : vector<64x32xf32> to vector<64x32xbf16>
    %c1 = arith.constant 1 : index
    %c0_68 = arith.constant 0 : index
    %c0_69 = arith.constant 0 : index
    %220 = vector.load %arg6[%c1, %c0_68, %c0_69] : memref<3x32x128xbf16, #tpu.memory_space<vmem>>, vector<1x32x128xbf16>
    %221 = vector.shape_cast %220 : vector<1x32x128xbf16> to vector<32x128xbf16>
    %cst_70 = arith.constant dense<0.000000e+00> : vector<64x128xf32>
    %222 = tpu.matmul %219, %221, %cst_70 {dimension_numbers = #tpu.dot_dimension_numbers<[1], [0], [0], [1], [0, 0, 1, 1], [], []>} : vector<64x32xbf16>, vector<32x128xbf16>, vector<64x128xf32> -> vector<64x128xf32>
    %c1_71 = arith.constant 1 : index
    %c0_72 = arith.constant 0 : index
    %c0_73 = arith.constant 0 : index
    %223 = vector.load %arg8[%c1_71, %c0_72, %c0_73] : memref<3x1x128xf32, #tpu.memory_space<vmem>>, vector<1x1x128xf32>
    %224 = vector.shape_cast %223 : vector<1x1x128xf32> to vector<1x128xf32>
    %225 = vector.broadcast %224 : vector<1x128xf32> to vector<64x128xf32>
    %226 = arith.addf %222, %225 : vector<64x128xf32>
    %c0_74 = arith.constant 0 : index
    %c0_75 = arith.constant 0 : index
    %227 = vector.load %arg14[%c0_74, %c0_75] : memref<64x128xf32, #tpu.memory_space<vmem>>, vector<64x128xf32>
    tpu.vector_store %arg14[%c0_74, %c0_75], %226 {strides = array<i32>} : memref<64x128xf32, #tpu.memory_space<vmem>>, vector<64x128xf32>,
    %c1_76 = arith.constant 1 : index
    %c0_77 = arith.constant 0 : index
    %c0_78 = arith.constant 0 : index
    %228 = vector.load %arg7[%c1_76, %c0_77, %c0_78] : memref<3x32x128xbf16, #tpu.memory_space<vmem>>, vector<1x32x128xbf16>
    %229 = vector.shape_cast %228 : vector<1x32x128xbf16> to vector<32x128xbf16>
    %c0_i32_79 = arith.constant 0 : i32
    %c8_i32_80 = arith.constant 8 : i32
    %230 = arith.muli %c0_i32_79, %c8_i32_80 : i32
    %231 = tpu.assume_multiple %230, 8 : i32
    %232 = arith.index_cast %231 : i32 to index
    %c0_81 = arith.constant 0 : index
    %233 = vector.load %arg14[%232, %c0_81] : memref<64x128xf32, #tpu.memory_space<vmem>>, vector<8x128xf32>
    %234 = arith.truncf %29 : vector<8x32xf32> to vector<8x32xbf16>
    %cst_82 = arith.constant dense<0.000000e+00> : vector<8x128xf32>
    %235 = tpu.matmul %234, %229, %cst_82 {dimension_numbers = #tpu.dot_dimension_numbers<[1], [0], [0], [1], [0, 0, 1, 1], [], []>} : vector<8x32xbf16>, vector<32x128xbf16>, vector<8x128xf32> -> vector<8x128xf32>
    %236 = arith.addf %233, %235 : vector<8x128xf32>
    %237 = arith.mulf %25, %236 : vector<8x128xf32>
    %238 = math.tanh %237 : vector<8x128xf32>
    %239 = arith.mulf %25, %238 : vector<8x128xf32>
    %240 = arith.addf %239, %28 : vector<8x128xf32>
    %241 = vector.extract_strided_slice %240 {offsets = [0, 0], sizes = [8, 32], strides = [1, 1]} : vector<8x128xf32> to vector<8x32xf32>
    %242 = vector.extract_strided_slice %240 {offsets = [0, 32], sizes = [8, 32], strides = [1, 1]} : vector<8x128xf32> to vector<8x32xf32>
    %243 = vector.extract_strided_slice %240 {offsets = [0, 64], sizes = [8, 32], strides = [1, 1]} : vector<8x128xf32> to vector<8x32xf32>
    %244 = vector.extract_strided_slice %240 {offsets = [0, 96], sizes = [8, 32], strides = [1, 1]} : vector<8x128xf32> to vector<8x32xf32>
    %245 = arith.mulf %242, %29 : vector<8x32xf32>
    %246 = arith.mulf %241, %243 : vector<8x32xf32>
    %247 = arith.addf %245, %246 : vector<8x32xf32>
    %248 = math.tanh %247 : vector<8x32xf32>
    %249 = arith.mulf %244, %248 : vector<8x32xf32>
    %250 = arith.index_cast %231 : i32 to index
    %c0_83 = arith.constant 0 : index
    %251 = vector.load %arg13[%250, %c0_83] : memref<64x32xf32, #tpu.memory_space<vmem>>, vector<8x32xf32>
    tpu.vector_store %arg13[%250, %c0_83], %249 {strides = array<i32>} : memref<64x32xf32, #tpu.memory_space<vmem>>, vector<8x32xf32>,
    %c1_i32_84 = arith.constant 1 : i32
    %c8_i32_85 = arith.constant 8 : i32
    %252 = arith.muli %c1_i32_84, %c8_i32_85 : i32
    %253 = tpu.assume_multiple %252, 8 : i32
    %254 = arith.index_cast %253 : i32 to index
    %c0_86 = arith.constant 0 : index
    %255 = vector.load %arg14[%254, %c0_86] : memref<64x128xf32, #tpu.memory_space<vmem>>, vector<8x128xf32>
    %256 = arith.truncf %249 : vector<8x32xf32> to vector<8x32xbf16>
    %cst_87 = arith.constant dense<0.000000e+00> : vector<8x128xf32>
    %257 = tpu.matmul %256, %229, %cst_87 {dimension_numbers = #tpu.dot_dimension_numbers<[1], [0], [0], [1], [0, 0, 1, 1], [], []>} : vector<8x32xbf16>, vector<32x128xbf16>, vector<8x128xf32> -> vector<8x128xf32>
    %258 = arith.addf %255, %257 : vector<8x128xf32>
    %259 = arith.mulf %25, %258 : vector<8x128xf32>
    %260 = math.tanh %259 : vector<8x128xf32>
    %261 = arith.mulf %25, %260 : vector<8x128xf32>
    %262 = arith.addf %261, %28 : vector<8x128xf32>
    %263 = vector.extract_strided_slice %262 {offsets = [0, 0], sizes = [8, 32], strides = [1, 1]} : vector<8x128xf32> to vector<8x32xf32>
    %264 = vector.extract_strided_slice %262 {offsets = [0, 32], sizes = [8, 32], strides = [1, 1]} : vector<8x128xf32> to vector<8x32xf32>
    %265 = vector.extract_strided_slice %262 {offsets = [0, 64], sizes = [8, 32], strides = [1, 1]} : vector<8x128xf32> to vector<8x32xf32>
    %266 = vector.extract_strided_slice %262 {offsets = [0, 96], sizes = [8, 32], strides = [1, 1]} : vector<8x128xf32> to vector<8x32xf32>
    %267 = arith.mulf %264, %247 : vector<8x32xf32>
    %268 = arith.mulf %263, %265 : vector<8x32xf32>
    %269 = arith.addf %267, %268 : vector<8x32xf32>
    %270 = math.tanh %269 : vector<8x32xf32>
    %271 = arith.mulf %266, %270 : vector<8x32xf32>
    %272 = arith.index_cast %253 : i32 to index
    %c0_88 = arith.constant 0 : index
    %273 = vector.load %arg13[%272, %c0_88] : memref<64x32xf32, #tpu.memory_space<vmem>>, vector<8x32xf32>
    tpu.vector_store %arg13[%272, %c0_88], %271 {strides = array<i32>} : memref<64x32xf32, #tpu.memory_space<vmem>>, vector<8x32xf32>,
    %c2_i32_89 = arith.constant 2 : i32
    %c8_i32_90 = arith.constant 8 : i32
    %274 = arith.muli %c2_i32_89, %c8_i32_90 : i32
    %275 = tpu.assume_multiple %274, 8 : i32
    %276 = arith.index_cast %275 : i32 to index
    %c0_91 = arith.constant 0 : index
    %277 = vector.load %arg14[%276, %c0_91] : memref<64x128xf32, #tpu.memory_space<vmem>>, vector<8x128xf32>
    %278 = arith.truncf %271 : vector<8x32xf32> to vector<8x32xbf16>
    %cst_92 = arith.constant dense<0.000000e+00> : vector<8x128xf32>
    %279 = tpu.matmul %278, %229, %cst_92 {dimension_numbers = #tpu.dot_dimension_numbers<[1], [0], [0], [1], [0, 0, 1, 1], [], []>} : vector<8x32xbf16>, vector<32x128xbf16>, vector<8x128xf32> -> vector<8x128xf32>
    %280 = arith.addf %277, %279 : vector<8x128xf32>
    %281 = arith.mulf %25, %280 : vector<8x128xf32>
    %282 = math.tanh %281 : vector<8x128xf32>
    %283 = arith.mulf %25, %282 : vector<8x128xf32>
    %284 = arith.addf %283, %28 : vector<8x128xf32>
    %285 = vector.extract_strided_slice %284 {offsets = [0, 0], sizes = [8, 32], strides = [1, 1]} : vector<8x128xf32> to vector<8x32xf32>
    %286 = vector.extract_strided_slice %284 {offsets = [0, 32], sizes = [8, 32], strides = [1, 1]} : vector<8x128xf32> to vector<8x32xf32>
    %287 = vector.extract_strided_slice %284 {offsets = [0, 64], sizes = [8, 32], strides = [1, 1]} : vector<8x128xf32> to vector<8x32xf32>
    %288 = vector.extract_strided_slice %284 {offsets = [0, 96], sizes = [8, 32], strides = [1, 1]} : vector<8x128xf32> to vector<8x32xf32>
    %289 = arith.mulf %286, %269 : vector<8x32xf32>
    %290 = arith.mulf %285, %287 : vector<8x32xf32>
    %291 = arith.addf %289, %290 : vector<8x32xf32>
    %292 = math.tanh %291 : vector<8x32xf32>
    %293 = arith.mulf %288, %292 : vector<8x32xf32>
    %294 = arith.index_cast %275 : i32 to index
    %c0_93 = arith.constant 0 : index
    %295 = vector.load %arg13[%294, %c0_93] : memref<64x32xf32, #tpu.memory_space<vmem>>, vector<8x32xf32>
    tpu.vector_store %arg13[%294, %c0_93], %293 {strides = array<i32>} : memref<64x32xf32, #tpu.memory_space<vmem>>, vector<8x32xf32>,
    %c3_i32_94 = arith.constant 3 : i32
    %c8_i32_95 = arith.constant 8 : i32
    %296 = arith.muli %c3_i32_94, %c8_i32_95 : i32
    %297 = tpu.assume_multiple %296, 8 : i32
    %298 = arith.index_cast %297 : i32 to index
    %c0_96 = arith.constant 0 : index
    %299 = vector.load %arg14[%298, %c0_96] : memref<64x128xf32, #tpu.memory_space<vmem>>, vector<8x128xf32>
    %300 = arith.truncf %293 : vector<8x32xf32> to vector<8x32xbf16>
    %cst_97 = arith.constant dense<0.000000e+00> : vector<8x128xf32>
    %301 = tpu.matmul %300, %229, %cst_97 {dimension_numbers = #tpu.dot_dimension_numbers<[1], [0], [0], [1], [0, 0, 1, 1], [], []>} : vector<8x32xbf16>, vector<32x128xbf16>, vector<8x128xf32> -> vector<8x128xf32>
    %302 = arith.addf %299, %301 : vector<8x128xf32>
    %303 = arith.mulf %25, %302 : vector<8x128xf32>
    %304 = math.tanh %303 : vector<8x128xf32>
    %305 = arith.mulf %25, %304 : vector<8x128xf32>
    %306 = arith.addf %305, %28 : vector<8x128xf32>
    %307 = vector.extract_strided_slice %306 {offsets = [0, 0], sizes = [8, 32], strides = [1, 1]} : vector<8x128xf32> to vector<8x32xf32>
    %308 = vector.extract_strided_slice %306 {offsets = [0, 32], sizes = [8, 32], strides = [1, 1]} : vector<8x128xf32> to vector<8x32xf32>
    %309 = vector.extract_strided_slice %306 {offsets = [0, 64], sizes = [8, 32], strides = [1, 1]} : vector<8x128xf32> to vector<8x32xf32>
    %310 = vector.extract_strided_slice %306 {offsets = [0, 96], sizes = [8, 32], strides = [1, 1]} : vector<8x128xf32> to vector<8x32xf32>
    %311 = arith.mulf %308, %291 : vector<8x32xf32>
    %312 = arith.mulf %307, %309 : vector<8x32xf32>
    %313 = arith.addf %311, %312 : vector<8x32xf32>
    %314 = math.tanh %313 : vector<8x32xf32>
    %315 = arith.mulf %310, %314 : vector<8x32xf32>
    %316 = arith.index_cast %297 : i32 to index
    %c0_98 = arith.constant 0 : index
    %317 = vector.load %arg13[%316, %c0_98] : memref<64x32xf32, #tpu.memory_space<vmem>>, vector<8x32xf32>
    tpu.vector_store %arg13[%316, %c0_98], %315 {strides = array<i32>} : memref<64x32xf32, #tpu.memory_space<vmem>>, vector<8x32xf32>,
    %c4_i32_99 = arith.constant 4 : i32
    %c8_i32_100 = arith.constant 8 : i32
    %318 = arith.muli %c4_i32_99, %c8_i32_100 : i32
    %319 = tpu.assume_multiple %318, 8 : i32
    %320 = arith.index_cast %319 : i32 to index
    %c0_101 = arith.constant 0 : index
    %321 = vector.load %arg14[%320, %c0_101] : memref<64x128xf32, #tpu.memory_space<vmem>>, vector<8x128xf32>
    %322 = arith.truncf %315 : vector<8x32xf32> to vector<8x32xbf16>
    %cst_102 = arith.constant dense<0.000000e+00> : vector<8x128xf32>
    %323 = tpu.matmul %322, %229, %cst_102 {dimension_numbers = #tpu.dot_dimension_numbers<[1], [0], [0], [1], [0, 0, 1, 1], [], []>} : vector<8x32xbf16>, vector<32x128xbf16>, vector<8x128xf32> -> vector<8x128xf32>
    %324 = arith.addf %321, %323 : vector<8x128xf32>
    %325 = arith.mulf %25, %324 : vector<8x128xf32>
    %326 = math.tanh %325 : vector<8x128xf32>
    %327 = arith.mulf %25, %326 : vector<8x128xf32>
    %328 = arith.addf %327, %28 : vector<8x128xf32>
    %329 = vector.extract_strided_slice %328 {offsets = [0, 0], sizes = [8, 32], strides = [1, 1]} : vector<8x128xf32> to vector<8x32xf32>
    %330 = vector.extract_strided_slice %328 {offsets = [0, 32], sizes = [8, 32], strides = [1, 1]} : vector<8x128xf32> to vector<8x32xf32>
    %331 = vector.extract_strided_slice %328 {offsets = [0, 64], sizes = [8, 32], strides = [1, 1]} : vector<8x128xf32> to vector<8x32xf32>
    %332 = vector.extract_strided_slice %328 {offsets = [0, 96], sizes = [8, 32], strides = [1, 1]} : vector<8x128xf32> to vector<8x32xf32>
    %333 = arith.mulf %330, %313 : vector<8x32xf32>
    %334 = arith.mulf %329, %331 : vector<8x32xf32>
    %335 = arith.addf %333, %334 : vector<8x32xf32>
    %336 = math.tanh %335 : vector<8x32xf32>
    %337 = arith.mulf %332, %336 : vector<8x32xf32>
    %338 = arith.index_cast %319 : i32 to index
    %c0_103 = arith.constant 0 : index
    %339 = vector.load %arg13[%338, %c0_103] : memref<64x32xf32, #tpu.memory_space<vmem>>, vector<8x32xf32>
    tpu.vector_store %arg13[%338, %c0_103], %337 {strides = array<i32>} : memref<64x32xf32, #tpu.memory_space<vmem>>, vector<8x32xf32>,
    %c5_i32_104 = arith.constant 5 : i32
    %c8_i32_105 = arith.constant 8 : i32
    %340 = arith.muli %c5_i32_104, %c8_i32_105 : i32
    %341 = tpu.assume_multiple %340, 8 : i32
    %342 = arith.index_cast %341 : i32 to index
    %c0_106 = arith.constant 0 : index
    %343 = vector.load %arg14[%342, %c0_106] : memref<64x128xf32, #tpu.memory_space<vmem>>, vector<8x128xf32>
    %344 = arith.truncf %337 : vector<8x32xf32> to vector<8x32xbf16>
    %cst_107 = arith.constant dense<0.000000e+00> : vector<8x128xf32>
    %345 = tpu.matmul %344, %229, %cst_107 {dimension_numbers = #tpu.dot_dimension_numbers<[1], [0], [0], [1], [0, 0, 1, 1], [], []>} : vector<8x32xbf16>, vector<32x128xbf16>, vector<8x128xf32> -> vector<8x128xf32>
    %346 = arith.addf %343, %345 : vector<8x128xf32>
    %347 = arith.mulf %25, %346 : vector<8x128xf32>
    %348 = math.tanh %347 : vector<8x128xf32>
    %349 = arith.mulf %25, %348 : vector<8x128xf32>
    %350 = arith.addf %349, %28 : vector<8x128xf32>
    %351 = vector.extract_strided_slice %350 {offsets = [0, 0], sizes = [8, 32], strides = [1, 1]} : vector<8x128xf32> to vector<8x32xf32>
    %352 = vector.extract_strided_slice %350 {offsets = [0, 32], sizes = [8, 32], strides = [1, 1]} : vector<8x128xf32> to vector<8x32xf32>
    %353 = vector.extract_strided_slice %350 {offsets = [0, 64], sizes = [8, 32], strides = [1, 1]} : vector<8x128xf32> to vector<8x32xf32>
    %354 = vector.extract_strided_slice %350 {offsets = [0, 96], sizes = [8, 32], strides = [1, 1]} : vector<8x128xf32> to vector<8x32xf32>
    %355 = arith.mulf %352, %335 : vector<8x32xf32>
    %356 = arith.mulf %351, %353 : vector<8x32xf32>
    %357 = arith.addf %355, %356 : vector<8x32xf32>
    %358 = math.tanh %357 : vector<8x32xf32>
    %359 = arith.mulf %354, %358 : vector<8x32xf32>
    %360 = arith.index_cast %341 : i32 to index
    %c0_108 = arith.constant 0 : index
    %361 = vector.load %arg13[%360, %c0_108] : memref<64x32xf32, #tpu.memory_space<vmem>>, vector<8x32xf32>
    tpu.vector_store %arg13[%360, %c0_108], %359 {strides = array<i32>} : memref<64x32xf32, #tpu.memory_space<vmem>>, vector<8x32xf32>,
    %c6_i32_109 = arith.constant 6 : i32
    %c8_i32_110 = arith.constant 8 : i32
    %362 = arith.muli %c6_i32_109, %c8_i32_110 : i32
    %363 = tpu.assume_multiple %362, 8 : i32
    %364 = arith.index_cast %363 : i32 to index
    %c0_111 = arith.constant 0 : index
    %365 = vector.load %arg14[%364, %c0_111] : memref<64x128xf32, #tpu.memory_space<vmem>>, vector<8x128xf32>
    %366 = arith.truncf %359 : vector<8x32xf32> to vector<8x32xbf16>
    %cst_112 = arith.constant dense<0.000000e+00> : vector<8x128xf32>
    %367 = tpu.matmul %366, %229, %cst_112 {dimension_numbers = #tpu.dot_dimension_numbers<[1], [0], [0], [1], [0, 0, 1, 1], [], []>} : vector<8x32xbf16>, vector<32x128xbf16>, vector<8x128xf32> -> vector<8x128xf32>
    %368 = arith.addf %365, %367 : vector<8x128xf32>
    %369 = arith.mulf %25, %368 : vector<8x128xf32>
    %370 = math.tanh %369 : vector<8x128xf32>
    %371 = arith.mulf %25, %370 : vector<8x128xf32>
    %372 = arith.addf %371, %28 : vector<8x128xf32>
    %373 = vector.extract_strided_slice %372 {offsets = [0, 0], sizes = [8, 32], strides = [1, 1]} : vector<8x128xf32> to vector<8x32xf32>
    %374 = vector.extract_strided_slice %372 {offsets = [0, 32], sizes = [8, 32], strides = [1, 1]} : vector<8x128xf32> to vector<8x32xf32>
    %375 = vector.extract_strided_slice %372 {offsets = [0, 64], sizes = [8, 32], strides = [1, 1]} : vector<8x128xf32> to vector<8x32xf32>
    %376 = vector.extract_strided_slice %372 {offsets = [0, 96], sizes = [8, 32], strides = [1, 1]} : vector<8x128xf32> to vector<8x32xf32>
    %377 = arith.mulf %374, %357 : vector<8x32xf32>
    %378 = arith.mulf %373, %375 : vector<8x32xf32>
    %379 = arith.addf %377, %378 : vector<8x32xf32>
    %380 = math.tanh %379 : vector<8x32xf32>
    %381 = arith.mulf %376, %380 : vector<8x32xf32>
    %382 = arith.index_cast %363 : i32 to index
    %c0_113 = arith.constant 0 : index
    %383 = vector.load %arg13[%382, %c0_113] : memref<64x32xf32, #tpu.memory_space<vmem>>, vector<8x32xf32>
    tpu.vector_store %arg13[%382, %c0_113], %381 {strides = array<i32>} : memref<64x32xf32, #tpu.memory_space<vmem>>, vector<8x32xf32>,
    %c7_i32_114 = arith.constant 7 : i32
    %c8_i32_115 = arith.constant 8 : i32
    %384 = arith.muli %c7_i32_114, %c8_i32_115 : i32
    %385 = tpu.assume_multiple %384, 8 : i32
    %386 = arith.index_cast %385 : i32 to index
    %c0_116 = arith.constant 0 : index
    %387 = vector.load %arg14[%386, %c0_116] : memref<64x128xf32, #tpu.memory_space<vmem>>, vector<8x128xf32>
    %388 = arith.truncf %381 : vector<8x32xf32> to vector<8x32xbf16>
    %cst_117 = arith.constant dense<0.000000e+00> : vector<8x128xf32>
    %389 = tpu.matmul %388, %229, %cst_117 {dimension_numbers = #tpu.dot_dimension_numbers<[1], [0], [0], [1], [0, 0, 1, 1], [], []>} : vector<8x32xbf16>, vector<32x128xbf16>, vector<8x128xf32> -> vector<8x128xf32>
    %390 = arith.addf %387, %389 : vector<8x128xf32>
    %391 = arith.mulf %25, %390 : vector<8x128xf32>
    %392 = math.tanh %391 : vector<8x128xf32>
    %393 = arith.mulf %25, %392 : vector<8x128xf32>
    %394 = arith.addf %393, %28 : vector<8x128xf32>
    %395 = vector.extract_strided_slice %394 {offsets = [0, 0], sizes = [8, 32], strides = [1, 1]} : vector<8x128xf32> to vector<8x32xf32>
    %396 = vector.extract_strided_slice %394 {offsets = [0, 32], sizes = [8, 32], strides = [1, 1]} : vector<8x128xf32> to vector<8x32xf32>
    %397 = vector.extract_strided_slice %394 {offsets = [0, 64], sizes = [8, 32], strides = [1, 1]} : vector<8x128xf32> to vector<8x32xf32>
    %398 = vector.extract_strided_slice %394 {offsets = [0, 96], sizes = [8, 32], strides = [1, 1]} : vector<8x128xf32> to vector<8x32xf32>
    %399 = arith.mulf %396, %379 : vector<8x32xf32>
    %400 = arith.mulf %395, %397 : vector<8x32xf32>
    %401 = arith.addf %399, %400 : vector<8x32xf32>
    %402 = math.tanh %401 : vector<8x32xf32>
    %403 = arith.mulf %398, %402 : vector<8x32xf32>
    %404 = arith.index_cast %385 : i32 to index
    %c0_118 = arith.constant 0 : index
    %405 = vector.load %arg13[%404, %c0_118] : memref<64x32xf32, #tpu.memory_space<vmem>>, vector<8x32xf32>
    tpu.vector_store %arg13[%404, %c0_118], %403 {strides = array<i32>} : memref<64x32xf32, #tpu.memory_space<vmem>>, vector<8x32xf32>,
    %c8_i32_119 = arith.constant 8 : i32
    %c0_120 = arith.constant 0 : index
    %c0_121 = arith.constant 0 : index
    %406 = vector.load %arg13[%c0_120, %c0_121] : memref<64x32xf32, #tpu.memory_space<vmem>>, vector<64x32xf32>
    %407 = arith.truncf %406 : vector<64x32xf32> to vector<64x32xbf16>
    %c2 = arith.constant 2 : index
    %c0_122 = arith.constant 0 : index
    %c0_123 = arith.constant 0 : index
    %408 = vector.load %arg6[%c2, %c0_122, %c0_123] : memref<3x32x128xbf16, #tpu.memory_space<vmem>>, vector<1x32x128xbf16>
    %409 = vector.shape_cast %408 : vector<1x32x128xbf16> to vector<32x128xbf16>
    %cst_124 = arith.constant dense<0.000000e+00> : vector<64x128xf32>
    %410 = tpu.matmul %407, %409, %cst_124 {dimension_numbers = #tpu.dot_dimension_numbers<[1], [0], [0], [1], [0, 0, 1, 1], [], []>} : vector<64x32xbf16>, vector<32x128xbf16>, vector<64x128xf32> -> vector<64x128xf32>
    %c2_125 = arith.constant 2 : index
    %c0_126 = arith.constant 0 : index
    %c0_127 = arith.constant 0 : index
    %411 = vector.load %arg8[%c2_125, %c0_126, %c0_127] : memref<3x1x128xf32, #tpu.memory_space<vmem>>, vector<1x1x128xf32>
    %412 = vector.shape_cast %411 : vector<1x1x128xf32> to vector<1x128xf32>
    %413 = vector.broadcast %412 : vector<1x128xf32> to vector<64x128xf32>
    %414 = arith.addf %410, %413 : vector<64x128xf32>
    %c0_128 = arith.constant 0 : index
    %c0_129 = arith.constant 0 : index
    %415 = vector.load %arg14[%c0_128, %c0_129] : memref<64x128xf32, #tpu.memory_space<vmem>>, vector<64x128xf32>
    tpu.vector_store %arg14[%c0_128, %c0_129], %414 {strides = array<i32>} : memref<64x128xf32, #tpu.memory_space<vmem>>, vector<64x128xf32>,
    %c2_130 = arith.constant 2 : index
    %c0_131 = arith.constant 0 : index
    %c0_132 = arith.constant 0 : index
    %416 = vector.load %arg7[%c2_130, %c0_131, %c0_132] : memref<3x32x128xbf16, #tpu.memory_space<vmem>>, vector<1x32x128xbf16>
    %417 = vector.shape_cast %416 : vector<1x32x128xbf16> to vector<32x128xbf16>
    %c0_i32_133 = arith.constant 0 : i32
    %c8_i32_134 = arith.constant 8 : i32
    %418 = arith.muli %c0_i32_133, %c8_i32_134 : i32
    %419 = tpu.assume_multiple %418, 8 : i32
    %420 = arith.index_cast %419 : i32 to index
    %c0_135 = arith.constant 0 : index
    %421 = vector.load %arg14[%420, %c0_135] : memref<64x128xf32, #tpu.memory_space<vmem>>, vector<8x128xf32>
    %422 = arith.truncf %29 : vector<8x32xf32> to vector<8x32xbf16>
    %cst_136 = arith.constant dense<0.000000e+00> : vector<8x128xf32>
    %423 = tpu.matmul %422, %417, %cst_136 {dimension_numbers = #tpu.dot_dimension_numbers<[1], [0], [0], [1], [0, 0, 1, 1], [], []>} : vector<8x32xbf16>, vector<32x128xbf16>, vector<8x128xf32> -> vector<8x128xf32>
    %424 = arith.addf %421, %423 : vector<8x128xf32>
    %425 = arith.mulf %25, %424 : vector<8x128xf32>
    %426 = math.tanh %425 : vector<8x128xf32>
    %427 = arith.mulf %25, %426 : vector<8x128xf32>
    %428 = arith.addf %427, %28 : vector<8x128xf32>
    %429 = vector.extract_strided_slice %428 {offsets = [0, 0], sizes = [8, 32], strides = [1, 1]} : vector<8x128xf32> to vector<8x32xf32>
    %430 = vector.extract_strided_slice %428 {offsets = [0, 32], sizes = [8, 32], strides = [1, 1]} : vector<8x128xf32> to vector<8x32xf32>
    %431 = vector.extract_strided_slice %428 {offsets = [0, 64], sizes = [8, 32], strides = [1, 1]} : vector<8x128xf32> to vector<8x32xf32>
    %432 = vector.extract_strided_slice %428 {offsets = [0, 96], sizes = [8, 32], strides = [1, 1]} : vector<8x128xf32> to vector<8x32xf32>
    %433 = arith.mulf %430, %29 : vector<8x32xf32>
    %434 = arith.mulf %429, %431 : vector<8x32xf32>
    %435 = arith.addf %433, %434 : vector<8x32xf32>
    %436 = math.tanh %435 : vector<8x32xf32>
    %437 = arith.mulf %432, %436 : vector<8x32xf32>
    %c1_i32_137 = arith.constant 1 : i32
    %c8_i32_138 = arith.constant 8 : i32
    %438 = arith.muli %c1_i32_137, %c8_i32_138 : i32
    %439 = tpu.assume_multiple %438, 8 : i32
    %440 = arith.index_cast %439 : i32 to index
    %c0_139 = arith.constant 0 : index
    %441 = vector.load %arg14[%440, %c0_139] : memref<64x128xf32, #tpu.memory_space<vmem>>, vector<8x128xf32>
    %442 = arith.truncf %437 : vector<8x32xf32> to vector<8x32xbf16>
    %cst_140 = arith.constant dense<0.000000e+00> : vector<8x128xf32>
    %443 = tpu.matmul %442, %417, %cst_140 {dimension_numbers = #tpu.dot_dimension_numbers<[1], [0], [0], [1], [0, 0, 1, 1], [], []>} : vector<8x32xbf16>, vector<32x128xbf16>, vector<8x128xf32> -> vector<8x128xf32>
    %444 = arith.addf %441, %443 : vector<8x128xf32>
    %445 = arith.mulf %25, %444 : vector<8x128xf32>
    %446 = math.tanh %445 : vector<8x128xf32>
    %447 = arith.mulf %25, %446 : vector<8x128xf32>
    %448 = arith.addf %447, %28 : vector<8x128xf32>
    %449 = vector.extract_strided_slice %448 {offsets = [0, 0], sizes = [8, 32], strides = [1, 1]} : vector<8x128xf32> to vector<8x32xf32>
    %450 = vector.extract_strided_slice %448 {offsets = [0, 32], sizes = [8, 32], strides = [1, 1]} : vector<8x128xf32> to vector<8x32xf32>
    %451 = vector.extract_strided_slice %448 {offsets = [0, 64], sizes = [8, 32], strides = [1, 1]} : vector<8x128xf32> to vector<8x32xf32>
    %452 = vector.extract_strided_slice %448 {offsets = [0, 96], sizes = [8, 32], strides = [1, 1]} : vector<8x128xf32> to vector<8x32xf32>
    %453 = arith.mulf %450, %435 : vector<8x32xf32>
    %454 = arith.mulf %449, %451 : vector<8x32xf32>
    %455 = arith.addf %453, %454 : vector<8x32xf32>
    %456 = math.tanh %455 : vector<8x32xf32>
    %457 = arith.mulf %452, %456 : vector<8x32xf32>
    %c2_i32_141 = arith.constant 2 : i32
    %c8_i32_142 = arith.constant 8 : i32
    %458 = arith.muli %c2_i32_141, %c8_i32_142 : i32
    %459 = tpu.assume_multiple %458, 8 : i32
    %460 = arith.index_cast %459 : i32 to index
    %c0_143 = arith.constant 0 : index
    %461 = vector.load %arg14[%460, %c0_143] : memref<64x128xf32, #tpu.memory_space<vmem>>, vector<8x128xf32>
    %462 = arith.truncf %457 : vector<8x32xf32> to vector<8x32xbf16>
    %cst_144 = arith.constant dense<0.000000e+00> : vector<8x128xf32>
    %463 = tpu.matmul %462, %417, %cst_144 {dimension_numbers = #tpu.dot_dimension_numbers<[1], [0], [0], [1], [0, 0, 1, 1], [], []>} : vector<8x32xbf16>, vector<32x128xbf16>, vector<8x128xf32> -> vector<8x128xf32>
    %464 = arith.addf %461, %463 : vector<8x128xf32>
    %465 = arith.mulf %25, %464 : vector<8x128xf32>
    %466 = math.tanh %465 : vector<8x128xf32>
    %467 = arith.mulf %25, %466 : vector<8x128xf32>
    %468 = arith.addf %467, %28 : vector<8x128xf32>
    %469 = vector.extract_strided_slice %468 {offsets = [0, 0], sizes = [8, 32], strides = [1, 1]} : vector<8x128xf32> to vector<8x32xf32>
    %470 = vector.extract_strided_slice %468 {offsets = [0, 32], sizes = [8, 32], strides = [1, 1]} : vector<8x128xf32> to vector<8x32xf32>
    %471 = vector.extract_strided_slice %468 {offsets = [0, 64], sizes = [8, 32], strides = [1, 1]} : vector<8x128xf32> to vector<8x32xf32>
    %472 = vector.extract_strided_slice %468 {offsets = [0, 96], sizes = [8, 32], strides = [1, 1]} : vector<8x128xf32> to vector<8x32xf32>
    %473 = arith.mulf %470, %455 : vector<8x32xf32>
    %474 = arith.mulf %469, %471 : vector<8x32xf32>
    %475 = arith.addf %473, %474 : vector<8x32xf32>
    %476 = math.tanh %475 : vector<8x32xf32>
    %477 = arith.mulf %472, %476 : vector<8x32xf32>
    %c3_i32_145 = arith.constant 3 : i32
    %c8_i32_146 = arith.constant 8 : i32
    %478 = arith.muli %c3_i32_145, %c8_i32_146 : i32
    %479 = tpu.assume_multiple %478, 8 : i32
    %480 = arith.index_cast %479 : i32 to index
    %c0_147 = arith.constant 0 : index
    %481 = vector.load %arg14[%480, %c0_147] : memref<64x128xf32, #tpu.memory_space<vmem>>, vector<8x128xf32>
    %482 = arith.truncf %477 : vector<8x32xf32> to vector<8x32xbf16>
    %cst_148 = arith.constant dense<0.000000e+00> : vector<8x128xf32>
    %483 = tpu.matmul %482, %417, %cst_148 {dimension_numbers = #tpu.dot_dimension_numbers<[1], [0], [0], [1], [0, 0, 1, 1], [], []>} : vector<8x32xbf16>, vector<32x128xbf16>, vector<8x128xf32> -> vector<8x128xf32>
    %484 = arith.addf %481, %483 : vector<8x128xf32>
    %485 = arith.mulf %25, %484 : vector<8x128xf32>
    %486 = math.tanh %485 : vector<8x128xf32>
    %487 = arith.mulf %25, %486 : vector<8x128xf32>
    %488 = arith.addf %487, %28 : vector<8x128xf32>
    %489 = vector.extract_strided_slice %488 {offsets = [0, 0], sizes = [8, 32], strides = [1, 1]} : vector<8x128xf32> to vector<8x32xf32>
    %490 = vector.extract_strided_slice %488 {offsets = [0, 32], sizes = [8, 32], strides = [1, 1]} : vector<8x128xf32> to vector<8x32xf32>
    %491 = vector.extract_strided_slice %488 {offsets = [0, 64], sizes = [8, 32], strides = [1, 1]} : vector<8x128xf32> to vector<8x32xf32>
    %492 = vector.extract_strided_slice %488 {offsets = [0, 96], sizes = [8, 32], strides = [1, 1]} : vector<8x128xf32> to vector<8x32xf32>
    %493 = arith.mulf %490, %475 : vector<8x32xf32>
    %494 = arith.mulf %489, %491 : vector<8x32xf32>
    %495 = arith.addf %493, %494 : vector<8x32xf32>
    %496 = math.tanh %495 : vector<8x32xf32>
    %497 = arith.mulf %492, %496 : vector<8x32xf32>
    %c4_i32_149 = arith.constant 4 : i32
    %c8_i32_150 = arith.constant 8 : i32
    %498 = arith.muli %c4_i32_149, %c8_i32_150 : i32
    %499 = tpu.assume_multiple %498, 8 : i32
    %500 = arith.index_cast %499 : i32 to index
    %c0_151 = arith.constant 0 : index
    %501 = vector.load %arg14[%500, %c0_151] : memref<64x128xf32, #tpu.memory_space<vmem>>, vector<8x128xf32>
    %502 = arith.truncf %497 : vector<8x32xf32> to vector<8x32xbf16>
    %cst_152 = arith.constant dense<0.000000e+00> : vector<8x128xf32>
    %503 = tpu.matmul %502, %417, %cst_152 {dimension_numbers = #tpu.dot_dimension_numbers<[1], [0], [0], [1], [0, 0, 1, 1], [], []>} : vector<8x32xbf16>, vector<32x128xbf16>, vector<8x128xf32> -> vector<8x128xf32>
    %504 = arith.addf %501, %503 : vector<8x128xf32>
    %505 = arith.mulf %25, %504 : vector<8x128xf32>
    %506 = math.tanh %505 : vector<8x128xf32>
    %507 = arith.mulf %25, %506 : vector<8x128xf32>
    %508 = arith.addf %507, %28 : vector<8x128xf32>
    %509 = vector.extract_strided_slice %508 {offsets = [0, 0], sizes = [8, 32], strides = [1, 1]} : vector<8x128xf32> to vector<8x32xf32>
    %510 = vector.extract_strided_slice %508 {offsets = [0, 32], sizes = [8, 32], strides = [1, 1]} : vector<8x128xf32> to vector<8x32xf32>
    %511 = vector.extract_strided_slice %508 {offsets = [0, 64], sizes = [8, 32], strides = [1, 1]} : vector<8x128xf32> to vector<8x32xf32>
    %512 = vector.extract_strided_slice %508 {offsets = [0, 96], sizes = [8, 32], strides = [1, 1]} : vector<8x128xf32> to vector<8x32xf32>
    %513 = arith.mulf %510, %495 : vector<8x32xf32>
    %514 = arith.mulf %509, %511 : vector<8x32xf32>
    %515 = arith.addf %513, %514 : vector<8x32xf32>
    %516 = math.tanh %515 : vector<8x32xf32>
    %517 = arith.mulf %512, %516 : vector<8x32xf32>
    %c5_i32_153 = arith.constant 5 : i32
    %c8_i32_154 = arith.constant 8 : i32
    %518 = arith.muli %c5_i32_153, %c8_i32_154 : i32
    %519 = tpu.assume_multiple %518, 8 : i32
    %520 = arith.index_cast %519 : i32 to index
    %c0_155 = arith.constant 0 : index
    %521 = vector.load %arg14[%520, %c0_155] : memref<64x128xf32, #tpu.memory_space<vmem>>, vector<8x128xf32>
    %522 = arith.truncf %517 : vector<8x32xf32> to vector<8x32xbf16>
    %cst_156 = arith.constant dense<0.000000e+00> : vector<8x128xf32>
    %523 = tpu.matmul %522, %417, %cst_156 {dimension_numbers = #tpu.dot_dimension_numbers<[1], [0], [0], [1], [0, 0, 1, 1], [], []>} : vector<8x32xbf16>, vector<32x128xbf16>, vector<8x128xf32> -> vector<8x128xf32>
    %524 = arith.addf %521, %523 : vector<8x128xf32>
    %525 = arith.mulf %25, %524 : vector<8x128xf32>
    %526 = math.tanh %525 : vector<8x128xf32>
    %527 = arith.mulf %25, %526 : vector<8x128xf32>
    %528 = arith.addf %527, %28 : vector<8x128xf32>
    %529 = vector.extract_strided_slice %528 {offsets = [0, 0], sizes = [8, 32], strides = [1, 1]} : vector<8x128xf32> to vector<8x32xf32>
    %530 = vector.extract_strided_slice %528 {offsets = [0, 32], sizes = [8, 32], strides = [1, 1]} : vector<8x128xf32> to vector<8x32xf32>
    %531 = vector.extract_strided_slice %528 {offsets = [0, 64], sizes = [8, 32], strides = [1, 1]} : vector<8x128xf32> to vector<8x32xf32>
    %532 = vector.extract_strided_slice %528 {offsets = [0, 96], sizes = [8, 32], strides = [1, 1]} : vector<8x128xf32> to vector<8x32xf32>
    %533 = arith.mulf %530, %515 : vector<8x32xf32>
    %534 = arith.mulf %529, %531 : vector<8x32xf32>
    %535 = arith.addf %533, %534 : vector<8x32xf32>
    %536 = math.tanh %535 : vector<8x32xf32>
    %537 = arith.mulf %532, %536 : vector<8x32xf32>
    %c6_i32_157 = arith.constant 6 : i32
    %c8_i32_158 = arith.constant 8 : i32
    %538 = arith.muli %c6_i32_157, %c8_i32_158 : i32
    %539 = tpu.assume_multiple %538, 8 : i32
    %540 = arith.index_cast %539 : i32 to index
    %c0_159 = arith.constant 0 : index
    %541 = vector.load %arg14[%540, %c0_159] : memref<64x128xf32, #tpu.memory_space<vmem>>, vector<8x128xf32>
    %542 = arith.truncf %537 : vector<8x32xf32> to vector<8x32xbf16>
    %cst_160 = arith.constant dense<0.000000e+00> : vector<8x128xf32>
    %543 = tpu.matmul %542, %417, %cst_160 {dimension_numbers = #tpu.dot_dimension_numbers<[1], [0], [0], [1], [0, 0, 1, 1], [], []>} : vector<8x32xbf16>, vector<32x128xbf16>, vector<8x128xf32> -> vector<8x128xf32>
    %544 = arith.addf %541, %543 : vector<8x128xf32>
    %545 = arith.mulf %25, %544 : vector<8x128xf32>
    %546 = math.tanh %545 : vector<8x128xf32>
    %547 = arith.mulf %25, %546 : vector<8x128xf32>
    %548 = arith.addf %547, %28 : vector<8x128xf32>
    %549 = vector.extract_strided_slice %548 {offsets = [0, 0], sizes = [8, 32], strides = [1, 1]} : vector<8x128xf32> to vector<8x32xf32>
    %550 = vector.extract_strided_slice %548 {offsets = [0, 32], sizes = [8, 32], strides = [1, 1]} : vector<8x128xf32> to vector<8x32xf32>
    %551 = vector.extract_strided_slice %548 {offsets = [0, 64], sizes = [8, 32], strides = [1, 1]} : vector<8x128xf32> to vector<8x32xf32>
    %552 = vector.extract_strided_slice %548 {offsets = [0, 96], sizes = [8, 32], strides = [1, 1]} : vector<8x128xf32> to vector<8x32xf32>
    %553 = arith.mulf %550, %535 : vector<8x32xf32>
    %554 = arith.mulf %549, %551 : vector<8x32xf32>
    %555 = arith.addf %553, %554 : vector<8x32xf32>
    %556 = math.tanh %555 : vector<8x32xf32>
    %557 = arith.mulf %552, %556 : vector<8x32xf32>
    %c7_i32_161 = arith.constant 7 : i32
    %c8_i32_162 = arith.constant 8 : i32
    %558 = arith.muli %c7_i32_161, %c8_i32_162 : i32
    %559 = tpu.assume_multiple %558, 8 : i32
    %560 = arith.index_cast %559 : i32 to index
    %c0_163 = arith.constant 0 : index
    %561 = vector.load %arg14[%560, %c0_163] : memref<64x128xf32, #tpu.memory_space<vmem>>, vector<8x128xf32>
    %562 = arith.truncf %557 : vector<8x32xf32> to vector<8x32xbf16>
    %cst_164 = arith.constant dense<0.000000e+00> : vector<8x128xf32>
    %563 = tpu.matmul %562, %417, %cst_164 {dimension_numbers = #tpu.dot_dimension_numbers<[1], [0], [0], [1], [0, 0, 1, 1], [], []>} : vector<8x32xbf16>, vector<32x128xbf16>, vector<8x128xf32> -> vector<8x128xf32>
    %564 = arith.addf %561, %563 : vector<8x128xf32>
    %565 = arith.mulf %25, %564 : vector<8x128xf32>
    %566 = math.tanh %565 : vector<8x128xf32>
    %567 = arith.mulf %25, %566 : vector<8x128xf32>
    %568 = arith.addf %567, %28 : vector<8x128xf32>
    %569 = vector.extract_strided_slice %568 {offsets = [0, 0], sizes = [8, 32], strides = [1, 1]} : vector<8x128xf32> to vector<8x32xf32>
    %570 = vector.extract_strided_slice %568 {offsets = [0, 32], sizes = [8, 32], strides = [1, 1]} : vector<8x128xf32> to vector<8x32xf32>
    %571 = vector.extract_strided_slice %568 {offsets = [0, 64], sizes = [8, 32], strides = [1, 1]} : vector<8x128xf32> to vector<8x32xf32>
    %572 = vector.extract_strided_slice %568 {offsets = [0, 96], sizes = [8, 32], strides = [1, 1]} : vector<8x128xf32> to vector<8x32xf32>
    %573 = arith.mulf %570, %555 : vector<8x32xf32>
    %574 = arith.mulf %569, %571 : vector<8x32xf32>
    %575 = arith.addf %573, %574 : vector<8x32xf32>
    %576 = math.tanh %575 : vector<8x32xf32>
    %577 = arith.mulf %572, %576 : vector<8x32xf32>
    %c8_i32_165 = arith.constant 8 : i32
    %c0_166 = arith.constant 0 : index
    %c0_167 = arith.constant 0 : index
    %578 = vector.load %arg11[%c0_166, %c0_167] : memref<8x32xf32, #tpu.memory_space<vmem>>, vector<8x32xf32>
    tpu.vector_store %arg11[%c0_166, %c0_167], %577 {strides = array<i32>} : memref<8x32xf32, #tpu.memory_space<vmem>>, vector<8x32xf32>,
    %c0_168 = arith.constant 0 : index
    %c0_169 = arith.constant 0 : index
    %579 = vector.load %arg9[%c0_168, %c0_169] : memref<32x128xf32, #tpu.memory_space<vmem>>, vector<32x128xf32>
    %cst_170 = arith.constant dense<0.000000e+00> : vector<8x128xf32>
    %580 = tpu.matmul %577, %579, %cst_170 {dimension_numbers = #tpu.dot_dimension_numbers<[1], [0], [0], [1], [0, 0, 1, 1], [], []>} : vector<8x32xf32>, vector<32x128xf32>, vector<8x128xf32> -> vector<8x128xf32>
    %c0_171 = arith.constant 0 : index
    %c0_172 = arith.constant 0 : index
    %581 = vector.load %arg10[%c0_171, %c0_172] : memref<1x128xf32, #tpu.memory_space<vmem>>, vector<1x128xf32>
    %582 = vector.broadcast %581 : vector<1x128xf32> to vector<8x128xf32>
    %583 = arith.addf %580, %582 : vector<8x128xf32>
    %c0_173 = arith.constant 0 : index
    %c0_174 = arith.constant 0 : index
    %584 = vector.load %arg12[%c0_173, %c0_174] : memref<8x128xf32, #tpu.memory_space<vmem>>, vector<8x128xf32>
    tpu.vector_store %arg12[%c0_173, %c0_174], %583 {strides = array<i32>} : memref<8x128xf32, #tpu.memory_space<vmem>>, vector<8x128xf32>,
    return
  }
}

</mosaic_0001>

<llo_original>
// kernel: _lambda_.1
$region0: #{_lambda_.1}
  #allocation0 [shape = 'u32[]', space=smem, size = 0x4, offset = 0x4, fixed_abs, tag = 'smem constant byte address 0x4 - core index']
  #allocation1 [shape = 'u32[144,128]{1,0:T(1,128)}', space=vmem, size = 0x12000, scoped, tag = 'internal scratch']
  #allocation2 [shape = 'f32[64,32]{1,0:T(8,128)}', space=vmem, size = 0x8000, scoped, tag = 'scratch operand']
  #allocation3 [shape = 'f32[64,128]{1,0:T(8,128)}', space=vmem, size = 0x8000, scoped, tag = 'scratch operand']
  %s0 = inlined_call_operand.vmem [shape: f32[64,50], index: 0, kind: input, shape index: {}]
  %s1 = inlined_call_operand.vmem [shape: f32[64,1], index: 1, kind: input, shape index: {}]
  %s2 = inlined_call_operand.vmem [shape: f32[50,128], index: 2, kind: input, shape index: {}]
  %s3 = inlined_call_operand.vmem [shape: f32[1,128], index: 3, kind: input, shape index: {}]
  %s4 = inlined_call_operand.vmem [shape: f32[128,32], index: 4, kind: input, shape index: {}]
  %s5 = inlined_call_operand.vmem [shape: f32[1,32], index: 5, kind: input, shape index: {}]
  %s6 = inlined_call_operand.vmem [shape: bf16[3,32,128], index: 6, kind: input, shape index: {}]
  %s7 = inlined_call_operand.vmem [shape: bf16[3,32,128], index: 7, kind: input, shape index: {}]
  %s8 = inlined_call_operand.vmem [shape: f32[3,1,128], index: 8, kind: input, shape index: {}]
  %s9 = inlined_call_operand.vmem [shape: f32[32,128], index: 9, kind: input, shape index: {}]
  %s10 = inlined_call_operand.vmem [shape: f32[1,128], index: 10, kind: input, shape index: {}]
  %s11 = inlined_call_operand.vmem [shape: f32[8,32], index: 11, kind: output, shape index: {0}]
  %s12 = inlined_call_operand.vmem [shape: f32[8,128], index: 12, kind: output, shape index: {1}]
  %13 = xla_tuple %s11, %s12
  %s14 = sld [smem:[#allocation0]]
  $region62: #{_lambda_.1} parent=0
    _
  %s16 = ssub.s32 1, %s14
  %s17 = scalar_select 0, %s16, %s14
  // Predicated region
  $region2: #{_lambda_.1} parent=0 // pred_check
    _
  $region3: #{_lambda_.1} parent=0 // pred_check_branch
    %19 = sbr.rel (0) target = $region5
  $region4: #{_lambda_.1} parent=0 // pred_region
    _
  $region5: #{_lambda_.1} parent=0 // pred_fallthru
    _
  // Predicated region
  $region6: #{_lambda_.1} parent=0 // pred_check
    _
  $region7: #{_lambda_.1} parent=0 // pred_check_branch
    %21 = sbr.rel (0) target = $region9
  $region8: #{_lambda_.1} parent=0 // pred_region
    _
  $region9: #{_lambda_.1} parent=0 // pred_fallthru
    _
  // Predicated region
  $region10: #{_lambda_.1} parent=0 // pred_check
    _
  $region11: #{_lambda_.1} parent=0 // pred_check_branch
    %23 = sbr.rel (0) target = $region13
  $region12: #{_lambda_.1} parent=0 // pred_region
    _
  $region13: #{_lambda_.1} parent=0 // pred_fallthru
    _
  // Predicated region
  $region14: #{_lambda_.1} parent=0 // pred_check
    _
  $region15: #{_lambda_.1} parent=0 // pred_check_branch
    %25 = sbr.rel (0) target = $region17
  $region16: #{_lambda_.1} parent=0 // pred_region
    _
  $region17: #{_lambda_.1} parent=0 // pred_fallthru
    _
  // Predicated region
  $region18: #{_lambda_.1} parent=0 // pred_check
    _
  $region19: #{_lambda_.1} parent=0 // pred_check_branch
    %27 = sbr.rel (0) target = $region21
  $region20: #{_lambda_.1} parent=0 // pred_region
    _
  $region21: #{_lambda_.1} parent=0 // pred_fallthru
    _
  // Predicated region
  $region22: #{_lambda_.1} parent=0 // pred_check
    _
  $region23: #{_lambda_.1} parent=0 // pred_check_branch
    %29 = sbr.rel (0) target = $region25
  $region24: #{_lambda_.1} parent=0 // pred_region
    _
  $region25: #{_lambda_.1} parent=0 // pred_fallthru
    _
  // Predicated region
  $region26: #{_lambda_.1} parent=0 // pred_check
    _
  $region27: #{_lambda_.1} parent=0 // pred_check_branch
    %31 = sbr.rel (0) target = $region29
  $region28: #{_lambda_.1} parent=0 // pred_region
    _
  $region29: #{_lambda_.1} parent=0 // pred_fallthru
    _
  // Predicated region
  $region30: #{_lambda_.1} parent=0 // pred_check
    _
  $region31: #{_lambda_.1} parent=0 // pred_check_branch
    %33 = sbr.rel (0) target = $region33
  $region32: #{_lambda_.1} parent=0 // pred_region
    _
  $region33: #{_lambda_.1} parent=0 // pred_fallthru
    _
  // Predicated region
  $region34: #{_lambda_.1} parent=0 // pred_check
    _
  $region35: #{_lambda_.1} parent=0 // pred_check_branch
    %35 = sbr.rel (0) target = $region37
  $region36: #{_lambda_.1} parent=0 // pred_region
    _
  $region37: #{_lambda_.1} parent=0 // pred_fallthru
    _
  // Predicated region
  $region38: #{_lambda_.1} parent=0 // pred_check
    _
  $region39: #{_lambda_.1} parent=0 // pred_check_branch
    %37 = sbr.rel (0) target = $region41
  $region40: #{_lambda_.1} parent=0 // pred_region
    _
  $region41: #{_lambda_.1} parent=0 // pred_fallthru
    _
  // Predicated region
  $region42: #{_lambda_.1} parent=0 // pred_check
    _
  $region43: #{_lambda_.1} parent=0 // pred_check_branch
    %39 = sbr.rel (0) target = $region45
  $region44: #{_lambda_.1} parent=0 // pred_region
    _
  $region45: #{_lambda_.1} parent=0 // pred_fallthru
    _
  %v41 = vld [vmem:[%s0] sm:$0xff]
  %v42 = vld [vmem:[%s0 + $0x8] sm:$0xff]
  %v43 = vld [vmem:[%s0 + $0x10] sm:$0xff]
  %v44 = vld [vmem:[%s0 + $0x18] sm:$0xff]
  %v45 = vld [vmem:[%s0 + $0x20] sm:$0xff]
  %v46 = vld [vmem:[%s0 + $0x28] sm:$0xff]
  %v47 = vld [vmem:[%s0 + $0x30] sm:$0xff]
  %v48 = vld [vmem:[%s0 + $0x38] sm:$0xff]
  %v49 = vld [vmem:[%s2] sm:$0xff]
  %v50 = vld [vmem:[%s2 + $0x8] sm:$0xff]
  %v51 = vld [vmem:[%s2 + $0x10] sm:$0xff]
  %v52 = vld [vmem:[%s2 + $0x18] sm:$0xff]
  %v53 = vld [vmem:[%s2 + $0x20] sm:$0xff]
  %v54 = vld [vmem:[%s2 + $0x28] sm:$0xff]
  %v55 = vld [vmem:[%s2 + $0x30] sm:$0x3]
  %v56 = vld [vmem:[%s3] sm:$0x1]
  %v58 = vlaneseq
  %v59 = vshrl.u32 %v58, 7
  %v60 = vsub.s32 0, %v59
  %v61 = vrot.slane %v56, %v60
  %vm63 = vcmask 408576
  %v65 = vsel %vm63, %v41, 0
  %v68 = vsel %vm63, %v42, 0
  %v71 = vsel %vm63, %v43, 0
  %v74 = vsel %vm63, %v44, 0
  %v77 = vsel %vm63, %v45, 0
  %v80 = vsel %vm63, %v46, 0
  %v83 = vsel %vm63, %v47, 0
  %v86 = vsel %vm63, %v48, 0
  %vm88 = vcmask 1041408
  %v90 = vsel %vm88, %v55, 0
  %92 = vmatprep.subr.mxu0 0.0
  %93 = vmatpush1.msra.mxu0 %v49
  %94 = vmatprep.subr.mxu0 0.0
  %95 = vmatpush1.msra.mxu0 %v50
  %96 = vmatprep.subr.mxu0 0.0
  %97 = vmatpush1.msra.mxu0 %v51
  %98 = vmatprep.subr.mxu0 0.0
  %99 = vmatpush1.msra.mxu0 %v52
  %100 = vmatprep.subr.mxu0 0.0
  %101 = vmatpush1.msra.mxu0 %v53
  %102 = vmatprep.subr.mxu0 0.0
  %103 = vmatpush1.msra.mxu0 %v54
  %104 = vmatprep.subr.mxu0 0.0
  %105 = vmatpush1.msra.mxu0 %v90
  %106 = vmatprep.subr.mxu0 0.0
  %107 = vmatpush1.msra.mxu0 0.0
  %108 = vmatprep.subr.mxu0 0.0
  %109 = vmatpush1.msra.mxu0 0.0
  %110 = vmatprep.subr.mxu0 0.0
  %111 = vmatpush1.msra.mxu0 0.0
  %112 = vmatprep.subr.mxu0 0.0
  %113 = vmatpush1.msra.mxu0 0.0
  %114 = vmatprep.subr.mxu0 0.0
  %115 = vmatpush1.msra.mxu0 0.0
  %116 = vmatprep.subr.mxu0 0.0
  %117 = vmatpush1.msra.mxu0 0.0
  %118 = vmatprep.subr.mxu0 0.0
  %119 = vmatpush1.msra.mxu0 0.0
  %120 = vmatprep.subr.mxu0 0.0
  %121 = vmatpush1.msra.mxu0 0.0
  %122 = vmatprep.subr.mxu0 0.0
  %123 = vmatpush1.msra.mxu0 0.0
  %124 = vmatprep.subr.mxu0 0.0
  %125 = vmatpush1.msra.mxu0 0.0
  %126 = vmatprep.subr.mxu0 0.0
  %127 = vmatpush1.msra.mxu0 0.0
  %128 = vmatprep.subr.mxu0 0.0
  %129 = vmatpush1.msra.mxu0 0.0
  %130 = vmatprep.subr.mxu0 0.0
  %131 = vmatpush1.msra.mxu0 0.0
  %132 = vmatprep.subr.mxu0 0.0
  %133 = vmatpush1.msra.mxu0 0.0
  %134 = vmatprep.subr.mxu0 0.0
  %135 = vmatpush1.msra.mxu0 0.0
  %136 = vmatprep.subr.mxu0 0.0
  %137 = vmatpush1.msra.mxu0 0.0
  %138 = vmatprep.subr.mxu0 0.0
  %139 = vmatpush1.msra.mxu0 0.0
  %140 = vmatprep.subr.mxu0 0.0
  %141 = vmatpush1.msra.mxu0 0.0
  %142 = vmatprep.subr.mxu0 0.0
  %143 = vmatpush1.msra.mxu0 0.0
  %144 = vmatprep.subr.mxu0 0.0
  %145 = vmatpush1.msra.mxu0 0.0
  %146 = vmatprep.subr.mxu0 0.0
  %147 = vmatpush1.msra.mxu0 0.0
  %148 = vmatprep.subr.mxu0 0.0
  %149 = vmatpush1.msra.mxu0 0.0
  %150 = vmatprep.subr.mxu0 0.0
  %151 = vmatpush1.msra.mxu0 0.0
  %152 = vmatprep.subr.mxu0 0.0
  %153 = vmatpush1.msra.mxu0 0.0
  %154 = vmatprep.subr.mxu0 0.0
  %155 = vmatpush1.msra.mxu0 0.0
  %156 = vmatprep.mubr.f32.mxu0 0.0
  %157 = vmatmul.mubr.f32.gmra.mrb[0].mxu0 %v65
  %v158 = vpop.f32.mrb[0].mxu0
  %v159 = vadd.f32 %v61, %v158
  %v160 = vpop.f32.mrb[0].mxu0
  %161 = vmatprep.mubr.f32.mxu0 0.0
  %162 = vmatmul.mubr.f32.gmra.mrb[0].mxu0 %v68
  %v163 = vpop.f32.mrb[0].mxu0
  %v164 = vadd.f32 %v61, %v163
  %v165 = vpop.f32.mrb[0].mxu0
  %166 = vmatprep.mubr.f32.mxu0 0.0
  %167 = vmatmul.mubr.f32.gmra.mrb[0].mxu0 %v71
  %v168 = vpop.f32.mrb[0].mxu0
  %v169 = vadd.f32 %v61, %v168
  %v170 = vpop.f32.mrb[0].mxu0
  %171 = vmatprep.mubr.f32.mxu0 0.0
  %172 = vmatmul.mubr.f32.gmra.mrb[0].mxu0 %v74
  %v173 = vpop.f32.mrb[0].mxu0
  %v174 = vadd.f32 %v61, %v173
  %v175 = vpop.f32.mrb[0].mxu0
  %176 = vmatprep.mubr.f32.mxu0 0.0
  %177 = vmatmul.mubr.f32.gmra.mrb[0].mxu0 %v77
  %v178 = vpop.f32.mrb[0].mxu0
  %v179 = vadd.f32 %v61, %v178
  %v180 = vpop.f32.mrb[0].mxu0
  %181 = vmatprep.mubr.f32.mxu0 0.0
  %182 = vmatmul.mubr.f32.gmra.mrb[0].mxu0 %v80
  %v183 = vpop.f32.mrb[0].mxu0
  %v184 = vadd.f32 %v61, %v183
  %v185 = vpop.f32.mrb[0].mxu0
  %186 = vmatprep.mubr.f32.mxu0 0.0
  %187 = vmatmul.mubr.f32.gmra.mrb[0].mxu0 %v83
  %v188 = vpop.f32.mrb[0].mxu0
  %v189 = vadd.f32 %v61, %v188
  %v190 = vpop.f32.mrb[0].mxu0
  %191 = vmatprep.mubr.f32.mxu0 0.0
  %192 = vmatmul.mubr.f32.gmra.mrb[0].mxu0 %v86
  %v193 = vpop.f32.mrb[0].mxu0
  %v194 = vadd.f32 %v61, %v193
  %v195 = vpop.f32.mrb[0].mxu0
  %196 = vdwg.mxu0
  %v197 = vmax.f32 %v159, 0.0
  %v198 = vmax.f32 %v164, 0.0
  %v199 = vmax.f32 %v169, 0.0
  %v200 = vmax.f32 %v174, 0.0
  %v201 = vmax.f32 %v179, 0.0
  %v202 = vmax.f32 %v184, 0.0
  %v203 = vmax.f32 %v189, 0.0
  %v204 = vmax.f32 %v194, 0.0
  %v205 = vld [vmem:[%s4] sm:$0xff]
  %v206 = vld [vmem:[%s4 + $0x8] sm:$0xff]
  %v207 = vld [vmem:[%s4 + $0x10] sm:$0xff]
  %v208 = vld [vmem:[%s4 + $0x18] sm:$0xff]
  %v209 = vld [vmem:[%s4 + $0x20] sm:$0xff]
  %v210 = vld [vmem:[%s4 + $0x28] sm:$0xff]
  %v211 = vld [vmem:[%s4 + $0x30] sm:$0xff]
  %v212 = vld [vmem:[%s4 + $0x38] sm:$0xff]
  %v213 = vld [vmem:[%s4 + $0x40] sm:$0xff]
  %v214 = vld [vmem:[%s4 + $0x48] sm:$0xff]
  %v215 = vld [vmem:[%s4 + $0x50] sm:$0xff]
  %v216 = vld [vmem:[%s4 + $0x58] sm:$0xff]
  %v217 = vld [vmem:[%s4 + $0x60] sm:$0xff]
  %v218 = vld [vmem:[%s4 + $0x68] sm:$0xff]
  %v219 = vld [vmem:[%s4 + $0x70] sm:$0xff]
  %v220 = vld [vmem:[%s4 + $0x78] sm:$0xff]
  %v221 = vld [vmem:[%s5] sm:$0x1]
  %v223 = vlaneseq
  %v224 = vshrl.u32 %v223, 7
  %v225 = vsub.s32 0, %v224
  %v226 = vrot.slane %v221, %v225
  %228 = vmatprep.subr.mxu0 0.0
  %229 = vmatpush1.msra.mxu0 %v205
  %230 = vmatprep.subr.mxu0 0.0
  %231 = vmatpush1.msra.mxu0 %v206
  %232 = vmatprep.subr.mxu0 0.0
  %233 = vmatpush1.msra.mxu0 %v207
  %234 = vmatprep.subr.mxu0 0.0
  %235 = vmatpush1.msra.mxu0 %v208
  %236 = vmatprep.subr.mxu0 0.0
  %237 = vmatpush1.msra.mxu0 %v209
  %238 = vmatprep.subr.mxu0 0.0
  %239 = vmatpush1.msra.mxu0 %v210
  %240 = vmatprep.subr.mxu0 0.0
  %241 = vmatpush1.msra.mxu0 %v211
  %242 = vmatprep.subr.mxu0 0.0
  %243 = vmatpush1.msra.mxu0 %v212
  %244 = vmatprep.subr.mxu0 0.0
  %245 = vmatpush1.msra.mxu0 %v213
  %246 = vmatprep.subr.mxu0 0.0
  %247 = vmatpush1.msra.mxu0 %v214
  %248 = vmatprep.subr.mxu0 0.0
  %249 = vmatpush1.msra.mxu0 %v215
  %250 = vmatprep.subr.mxu0 0.0
  %251 = vmatpush1.msra.mxu0 %v216
  %252 = vmatprep.subr.mxu0 0.0
  %253 = vmatpush1.msra.mxu0 %v217
  %254 = vmatprep.subr.mxu0 0.0
  %255 = vmatpush1.msra.mxu0 %v218
  %256 = vmatprep.subr.mxu0 0.0
  %257 = vmatpush1.msra.mxu0 %v219
  %258 = vmatprep.subr.mxu0 0.0
  %259 = vmatpush1.msra.mxu0 %v220
  %260 = vmatprep.subr.mxu0 0.0
  %261 = vmatpush1.msra.mxu0 0.0
  %262 = vmatprep.subr.mxu0 0.0
  %263 = vmatpush1.msra.mxu0 0.0
  %264 = vmatprep.subr.mxu0 0.0
  %265 = vmatpush1.msra.mxu0 0.0
  %266 = vmatprep.subr.mxu0 0.0
  %267 = vmatpush1.msra.mxu0 0.0
  %268 = vmatprep.subr.mxu0 0.0
  %269 = vmatpush1.msra.mxu0 0.0
  %270 = vmatprep.subr.mxu0 0.0
  %271 = vmatpush1.msra.mxu0 0.0
  %272 = vmatprep.subr.mxu0 0.0
  %273 = vmatpush1.msra.mxu0 0.0
  %274 = vmatprep.subr.mxu0 0.0
  %275 = vmatpush1.msra.mxu0 0.0
  %276 = vmatprep.subr.mxu0 0.0
  %277 = vmatpush1.msra.mxu0 0.0
  %278 = vmatprep.subr.mxu0 0.0
  %279 = vmatpush1.msra.mxu0 0.0
  %280 = vmatprep.subr.mxu0 0.0
  %281 = vmatpush1.msra.mxu0 0.0
  %282 = vmatprep.subr.mxu0 0.0
  %283 = vmatpush1.msra.mxu0 0.0
  %284 = vmatprep.subr.mxu0 0.0
  %285 = vmatpush1.msra.mxu0 0.0
  %286 = vmatprep.subr.mxu0 0.0
  %287 = vmatpush1.msra.mxu0 0.0
  %288 = vmatprep.subr.mxu0 0.0
  %289 = vmatpush1.msra.mxu0 0.0
  %290 = vmatprep.subr.mxu0 0.0
  %291 = vmatpush1.msra.mxu0 0.0
  %292 = vmatprep.mubr.f32.mxu0 0.0
  %293 = vmatmul.mubr.f32.gmra.mrb[0].mxu0 %v197
  %v294 = vpop.f32.mrb[0].mxu0
  %v295 = vadd.f32 %v226, %v294
  %v296 = vpop.f32.mrb[0].mxu0
  %297 = vmatprep.mubr.f32.mxu0 0.0
  %298 = vmatmul.mubr.f32.gmra.mrb[0].mxu0 %v198
  %v299 = vpop.f32.mrb[0].mxu0
  %v300 = vadd.f32 %v226, %v299
  %v301 = vpop.f32.mrb[0].mxu0
  %302 = vmatprep.mubr.f32.mxu0 0.0
  %303 = vmatmul.mubr.f32.gmra.mrb[0].mxu0 %v199
  %v304 = vpop.f32.mrb[0].mxu0
  %v305 = vadd.f32 %v226, %v304
  %v306 = vpop.f32.mrb[0].mxu0
  %307 = vmatprep.mubr.f32.mxu0 0.0
  %308 = vmatmul.mubr.f32.gmra.mrb[0].mxu0 %v200
  %v309 = vpop.f32.mrb[0].mxu0
  %v310 = vadd.f32 %v226, %v309
  %v311 = vpop.f32.mrb[0].mxu0
  %312 = vmatprep.mubr.f32.mxu0 0.0
  %313 = vmatmul.mubr.f32.gmra.mrb[0].mxu0 %v201
  %v314 = vpop.f32.mrb[0].mxu0
  %v315 = vadd.f32 %v226, %v314
  %v316 = vpop.f32.mrb[0].mxu0
  %317 = vmatprep.mubr.f32.mxu0 0.0
  %318 = vmatmul.mubr.f32.gmra.mrb[0].mxu0 %v202
  %v319 = vpop.f32.mrb[0].mxu0
  %v320 = vadd.f32 %v226, %v319
  %v321 = vpop.f32.mrb[0].mxu0
  %322 = vmatprep.mubr.f32.mxu0 0.0
  %323 = vmatmul.mubr.f32.gmra.mrb[0].mxu0 %v203
  %v324 = vpop.f32.mrb[0].mxu0
  %v325 = vadd.f32 %v226, %v324
  %v326 = vpop.f32.mrb[0].mxu0
  %327 = vmatprep.mubr.f32.mxu0 0.0
  %328 = vmatmul.mubr.f32.gmra.mrb[0].mxu0 %v204
  %v329 = vpop.f32.mrb[0].mxu0
  %v330 = vadd.f32 %v226, %v329
  %v331 = vpop.f32.mrb[0].mxu0
  %332 = vdwg.mxu0
  %v333 = vld [vmem:[%s1] sm:$0xff]
  %v334 = vld [vmem:[%s1 + $0x8] sm:$0xff]
  %v335 = vld [vmem:[%s1 + $0x10] sm:$0xff]
  %v336 = vld [vmem:[%s1 + $0x18] sm:$0xff]
  %v337 = vld [vmem:[%s1 + $0x20] sm:$0xff]
  %v338 = vld [vmem:[%s1 + $0x28] sm:$0xff]
  %v339 = vld [vmem:[%s1 + $0x30] sm:$0xff]
  %v340 = vld [vmem:[%s1 + $0x38] sm:$0xff]
  %342 = vset.pattern.permute.xlu0 0
  %343 = vperm.xlu0 %342, %v333
  %v344 = vpop.permute.xlu0 %343
  %347 = vset.pattern.permute.xlu0 0
  %348 = vperm.xlu0 %347, %v334
  %v349 = vpop.permute.xlu0 %348
  %352 = vset.pattern.permute.xlu0 0
  %353 = vperm.xlu0 %352, %v335
  %v354 = vpop.permute.xlu0 %353
  %357 = vset.pattern.permute.xlu0 0
  %358 = vperm.xlu0 %357, %v336
  %v359 = vpop.permute.xlu0 %358
  %362 = vset.pattern.permute.xlu0 0
  %363 = vperm.xlu0 %362, %v337
  %v364 = vpop.permute.xlu0 %363
  %367 = vset.pattern.permute.xlu0 0
  %368 = vperm.xlu0 %367, %v338
  %v369 = vpop.permute.xlu0 %368
  %372 = vset.pattern.permute.xlu0 0
  %373 = vperm.xlu0 %372, %v339
  %v374 = vpop.permute.xlu0 %373
  %377 = vset.pattern.permute.xlu0 0
  %378 = vperm.xlu0 %377, %v340
  %v379 = vpop.permute.xlu0 %378
  %v381 = vmul.f32 %v295, %v344
  %v382 = vmul.f32 %v300, %v349
  %v383 = vmul.f32 %v305, %v354
  %v384 = vmul.f32 %v310, %v359
  %v385 = vmul.f32 %v315, %v364
  %v386 = vmul.f32 %v320, %v369
  %v387 = vmul.f32 %v325, %v374
  %v388 = vmul.f32 %v330, %v379
  %vm389 = vcmask 261120
  %390 = vst.msk [vmem:[#allocation2] sm:$0xff] %vm389, %v381
  %391 = vst.msk [vmem:[#allocation2 + $0x8] sm:$0xff] %vm389, %v382
  %392 = vst.msk [vmem:[#allocation2 + $0x10] sm:$0xff] %vm389, %v383
  %393 = vst.msk [vmem:[#allocation2 + $0x18] sm:$0xff] %vm389, %v384
  %394 = vst.msk [vmem:[#allocation2 + $0x20] sm:$0xff] %vm389, %v385
  %395 = vst.msk [vmem:[#allocation2 + $0x28] sm:$0xff] %vm389, %v386
  %396 = vst.msk [vmem:[#allocation2 + $0x30] sm:$0xff] %vm389, %v387
  %397 = vst.msk [vmem:[#allocation2 + $0x38] sm:$0xff] %vm389, %v388
  %v398 = vlaneseq
  %v399 = vand.u32 %v398, 127
  %vm400 = vcmp.ge.s32.totalorder %v399, 64
  %vm401 = vcmp.lt.s32.totalorder %v399, 96
  %vm402 = vmand %vm400, %vm401
  %v403 = vsel %vm402, 1.0, 0.5
  %v404 = vsel %vm402, 0.0, 0.5
  %v405 = vld [vmem:[#allocation2] sm:$0xff]
  %v406 = vld [vmem:[#allocation2 + $0x8] sm:$0xff]
  %v407 = vld [vmem:[#allocation2 + $0x10] sm:$0xff]
  %v408 = vld [vmem:[#allocation2 + $0x18] sm:$0xff]
  %v409 = vld [vmem:[#allocation2 + $0x20] sm:$0xff]
  %v410 = vld [vmem:[#allocation2 + $0x28] sm:$0xff]
  %v411 = vld [vmem:[#allocation2 + $0x30] sm:$0xff]
  %v412 = vld [vmem:[#allocation2 + $0x38] sm:$0xff]
  %v413 = vpack.c.bf16 %v406, %v405
  %v414 = vpack.c.bf16 %v408, %v407
  %v415 = vpack.c.bf16 %v410, %v409
  %v416 = vpack.c.bf16 %v412, %v411
  %v417 = vld [vmem:[%s6] sm:$0xf]
  %v418 = vld [vmem:[%s6 + $0x4] sm:$0xf]
  %v419 = vld [vmem:[%s6 + $0x8] sm:$0xf]
  %v420 = vld [vmem:[%s6 + $0xc] sm:$0xf]
  %v421 = vld [vmem:[%s8] sm:$0x1]
  %v423 = vlaneseq
  %v424 = vshrl.u32 %v423, 7
  %v425 = vsub.s32 0, %v424
  %v426 = vrot.slane %v421, %v425
  %v432 = vunpack.c.l.b16 %v417
  %v433 = vunpack.c.l.b16 %v418
  %v434 = vunpack.c.l.b16 %v419
  %v435 = vunpack.c.l.b16 %v420
  %v436 = vpack.c.b16 %v433, %v432
  %v437 = vpack.c.b16 %v435, %v434
  %v441 = vsel %vm389, %v413, 0
  %v444 = vsel %vm389, %v414, 0
  %v447 = vsel %vm389, %v415, 0
  %v450 = vsel %vm389, %v416, 0
  %452 = vmatprep.subr.bf16.mxu0 0
  %453 = vmatpush1.bf16.msra.mxu0 %v436
  %454 = vmatprep.subr.bf16.mxu0 0
  %455 = vmatpush1.bf16.msra.mxu0 %v437
  %456 = vmatprep.subr.bf16.mxu0 0
  %457 = vmatpush1.bf16.msra.mxu0 0
  %458 = vmatprep.subr.bf16.mxu0 0
  %459 = vmatpush1.bf16.msra.mxu0 0
  %460 = vmatprep.subr.bf16.mxu0 0
  %461 = vmatpush1.bf16.msra.mxu0 0
  %462 = vmatprep.subr.bf16.mxu0 0
  %463 = vmatpush1.bf16.msra.mxu0 0
  %464 = vmatprep.subr.bf16.mxu0 0
  %465 = vmatpush1.bf16.msra.mxu0 0
  %466 = vmatprep.subr.bf16.mxu0 0
  %467 = vmatpush1.bf16.msra.mxu0 0
  %468 = vmatprep.subr.bf16.mxu0 0
  %469 = vmatpush1.bf16.msra.mxu0 0
  %470 = vmatprep.subr.bf16.mxu0 0
  %471 = vmatpush1.bf16.msra.mxu0 0
  %472 = vmatprep.subr.bf16.mxu0 0
  %473 = vmatpush1.bf16.msra.mxu0 0
  %474 = vmatprep.subr.bf16.mxu0 0
  %475 = vmatpush1.bf16.msra.mxu0 0
  %476 = vmatprep.subr.bf16.mxu0 0
  %477 = vmatpush1.bf16.msra.mxu0 0
  %478 = vmatprep.subr.bf16.mxu0 0
  %479 = vmatpush1.bf16.msra.mxu0 0
  %480 = vmatprep.subr.bf16.mxu0 0
  %481 = vmatpush1.bf16.msra.mxu0 0
  %482 = vmatprep.subr.bf16.mxu0 0
  %483 = vmatpush1.bf16.msra.mxu0 0
  %484 = vmatprep.mubr.bf16.mxu0 0
  %485 = vmatmul.mubr.bf16.gmra.mrb[0].mxu0 %v441
  %v486 = vpop.f32.mrb[0].mxu0
  %v487 = vadd.f32 %v426, %v486
  %v488 = vpop.f32.mrb[0].mxu0
  %v489 = vpop.f32.mrb[0].mxu0
  %v490 = vadd.f32 %v426, %v489
  %v491 = vpop.f32.mrb[0].mxu0
  %492 = vmatprep.mubr.bf16.mxu0 0
  %493 = vmatmul.mubr.bf16.gmra.mrb[0].mxu0 %v444
  %v494 = vpop.f32.mrb[0].mxu0
  %v495 = vadd.f32 %v426, %v494
  %v496 = vpop.f32.mrb[0].mxu0
  %v497 = vpop.f32.mrb[0].mxu0
  %v498 = vadd.f32 %v426, %v497
  %v499 = vpop.f32.mrb[0].mxu0
  %500 = vmatprep.mubr.bf16.mxu0 0
  %501 = vmatmul.mubr.bf16.gmra.mrb[0].mxu0 %v447
  %v502 = vpop.f32.mrb[0].mxu0
  %v503 = vadd.f32 %v426, %v502
  %v504 = vpop.f32.mrb[0].mxu0
  %v505 = vpop.f32.mrb[0].mxu0
  %v506 = vadd.f32 %v426, %v505
  %v507 = vpop.f32.mrb[0].mxu0
  %508 = vmatprep.mubr.bf16.mxu0 0
  %509 = vmatmul.mubr.bf16.gmra.mrb[0].mxu0 %v450
  %v510 = vpop.f32.mrb[0].mxu0
  %v511 = vadd.f32 %v426, %v510
  %v512 = vpop.f32.mrb[0].mxu0
  %v513 = vpop.f32.mrb[0].mxu0
  %v514 = vadd.f32 %v426, %v513
  %v515 = vpop.f32.mrb[0].mxu0
  %516 = vdwg.mxu0
  %517 = vst [vmem:[#allocation3] sm:$0xff] %v487
  %518 = vst [vmem:[#allocation3 + $0x8] sm:$0xff] %v490
  %519 = vst [vmem:[#allocation3 + $0x10] sm:$0xff] %v495
  %520 = vst [vmem:[#allocation3 + $0x18] sm:$0xff] %v498
  %521 = vst [vmem:[#allocation3 + $0x20] sm:$0xff] %v503
  %522 = vst [vmem:[#allocation3 + $0x28] sm:$0xff] %v506
  %523 = vst [vmem:[#allocation3 + $0x30] sm:$0xff] %v511
  %524 = vst [vmem:[#allocation3 + $0x38] sm:$0xff] %v514
  %v525 = vld [vmem:[%s7] sm:$0xf]
  %v526 = vld [vmem:[%s7 + $0x4] sm:$0xf]
  %v527 = vld [vmem:[%s7 + $0x8] sm:$0xf]
  %v528 = vld [vmem:[%s7 + $0xc] sm:$0xf]
  %v529 = vld [vmem:[#allocation3] sm:$0xff]
  %v534 = vunpack.c.l.b16 %v525
  %v535 = vunpack.c.l.b16 %v526
  %v536 = vunpack.c.l.b16 %v527
  %v537 = vunpack.c.l.b16 %v528
  %v538 = vpack.c.b16 %v535, %v534
  %v539 = vpack.c.b16 %v537, %v536
  %v543 = vsel %vm389, 0, 0
  %545 = vmatprep.subr.bf16.mxu0 0
  %546 = vmatpush1.bf16.msra.mxu0 %v538
  %547 = vmatprep.subr.bf16.mxu0 0
  %548 = vmatpush1.bf16.msra.mxu0 %v539
  %549 = vmatprep.subr.bf16.mxu0 0
  %550 = vmatpush1.bf16.msra.mxu0 0
  %551 = vmatprep.subr.bf16.mxu0 0
  %552 = vmatpush1.bf16.msra.mxu0 0
  %553 = vmatprep.subr.bf16.mxu0 0
  %554 = vmatpush1.bf16.msra.mxu0 0
  %555 = vmatprep.subr.bf16.mxu0 0
  %556 = vmatpush1.bf16.msra.mxu0 0
  %557 = vmatprep.subr.bf16.mxu0 0
  %558 = vmatpush1.bf16.msra.mxu0 0
  %559 = vmatprep.subr.bf16.mxu0 0
  %560 = vmatpush1.bf16.msra.mxu0 0
  %561 = vmatprep.subr.bf16.mxu0 0
  %562 = vmatpush1.bf16.msra.mxu0 0
  %563 = vmatprep.subr.bf16.mxu0 0
  %564 = vmatpush1.bf16.msra.mxu0 0
  %565 = vmatprep.subr.bf16.mxu0 0
  %566 = vmatpush1.bf16.msra.mxu0 0
  %567 = vmatprep.subr.bf16.mxu0 0
  %568 = vmatpush1.bf16.msra.mxu0 0
  %569 = vmatprep.subr.bf16.mxu0 0
  %570 = vmatpush1.bf16.msra.mxu0 0
  %571 = vmatprep.subr.bf16.mxu0 0
  %572 = vmatpush1.bf16.msra.mxu0 0
  %573 = vmatprep.subr.bf16.mxu0 0
  %574 = vmatpush1.bf16.msra.mxu0 0
  %575 = vmatprep.subr.bf16.mxu0 0
  %576 = vmatpush1.bf16.msra.mxu0 0
  %577 = vmatprep.mubr.bf16.mxu0 0
  %578 = vmatmul.mubr.bf16.gmra.mrb[0].mxu0 %v543
  %v579 = vpop.f32.mrb[0].mxu0
  %v580 = vadd.f32 0.0, %v579
  %v581 = vpop.f32.mrb[0].mxu0
  %v582 = vpop.f32.mrb[0].mxu0
  %v583 = vpop.f32.mrb[0].mxu0
  %584 = vdwg.mxu0
  %v585 = vadd.f32 %v529, %v580
  %v586 = vmul.f32 %v403, %v585
  %v587 = vtanh.pop %v586
  %v588 = vmul.f32 %v403, %v587
  %v589 = vadd.f32 %v588, %v404
  %v590 = vmul.f32 %v589, 0.0
  %592 = vrot.lane.b32.xlu0 %v589, 64
  %v593 = vpop.permute.xlu0 %592
  %v595 = vmul.f32 %v589, %v593
  %597 = vrot.lane.b32.xlu0 %v595, 32
  %v598 = vpop.permute.xlu0 %597
  %v600 = vadd.f32 %v590, %v598
  %v601 = vtanh.pop %v600
  %603 = vrot.lane.b32.xlu0 %v601, 64
  %v604 = vpop.permute.xlu0 %603
  %v606 = vmul.f32 %v589, %v604
  %608 = vrot.lane.b32.xlu0 %v606, 32
  %v609 = vpop.permute.xlu0 %608
  %611 = vst.msk [vmem:[#allocation2] sm:$0xff] %vm389, %v609
  %s612 = scalar_lea.vmem [#allocation3], 8
  %v613 = vld [vmem:[%s612] sm:$0xff]
  %v614 = vpack.c.bf16 %v606, %v606
  %616 = vrot.lane.b32.xlu0 %v614, 32
  %v617 = vpop.permute.xlu0 %616
  %v619 = vsel %vm389, %v617, 0
  %621 = vmatprep.subr.bf16.mxu0 0
  %622 = vmatpush1.bf16.msra.mxu0 %v538
  %623 = vmatprep.subr.bf16.mxu0 0
  %624 = vmatpush1.bf16.msra.mxu0 %v539
  %625 = vmatprep.subr.bf16.mxu0 0
  %626 = vmatpush1.bf16.msra.mxu0 0
  %627 = vmatprep.subr.bf16.mxu0 0
  %628 = vmatpush1.bf16.msra.mxu0 0
  %629 = vmatprep.subr.bf16.mxu0 0
  %630 = vmatpush1.bf16.msra.mxu0 0
  %631 = vmatprep.subr.bf16.mxu0 0
  %632 = vmatpush1.bf16.msra.mxu0 0
  %633 = vmatprep.subr.bf16.mxu0 0
  %634 = vmatpush1.bf16.msra.mxu0 0
  %635 = vmatprep.subr.bf16.mxu0 0
  %636 = vmatpush1.bf16.msra.mxu0 0
  %637 = vmatprep.subr.bf16.mxu0 0
  %638 = vmatpush1.bf16.msra.mxu0 0
  %639 = vmatprep.subr.bf16.mxu0 0
  %640 = vmatpush1.bf16.msra.mxu0 0
  %641 = vmatprep.subr.bf16.mxu0 0
  %642 = vmatpush1.bf16.msra.mxu0 0
  %643 = vmatprep.subr.bf16.mxu0 0
  %644 = vmatpush1.bf16.msra.mxu0 0
  %645 = vmatprep.subr.bf16.mxu0 0
  %646 = vmatpush1.bf16.msra.mxu0 0
  %647 = vmatprep.subr.bf16.mxu0 0
  %648 = vmatpush1.bf16.msra.mxu0 0
  %649 = vmatprep.subr.bf16.mxu0 0
  %650 = vmatpush1.bf16.msra.mxu0 0
  %651 = vmatprep.subr.bf16.mxu0 0
  %652 = vmatpush1.bf16.msra.mxu0 0
  %653 = vmatprep.mubr.bf16.mxu0 0
  %654 = vmatmul.mubr.bf16.gmra.mrb[0].mxu0 %v619
  %v655 = vpop.f32.mrb[0].mxu0
  %v656 = vadd.f32 0.0, %v655
  %v657 = vpop.f32.mrb[0].mxu0
  %v658 = vpop.f32.mrb[0].mxu0
  %v659 = vpop.f32.mrb[0].mxu0
  %660 = vdwg.mxu0
  %v661 = vadd.f32 %v613, %v656
  %v662 = vmul.f32 %v403, %v661
  %v663 = vtanh.pop %v662
  %v664 = vmul.f32 %v403, %v663
  %v665 = vadd.f32 %v664, %v404
  %v666 = vmul.f32 %v665, %v600
  %668 = vrot.lane.b32.xlu0 %v665, 64
  %v669 = vpop.permute.xlu0 %668
  %v671 = vmul.f32 %v665, %v669
  %673 = vrot.lane.b32.xlu0 %v671, 32
  %v674 = vpop.permute.xlu0 %673
  %v676 = vadd.f32 %v666, %v674
  %v677 = vtanh.pop %v676
  %679 = vrot.lane.b32.xlu0 %v677, 64
  %v680 = vpop.permute.xlu0 %679
  %v682 = vmul.f32 %v665, %v680
  %684 = vrot.lane.b32.xlu0 %v682, 32
  %v685 = vpop.permute.xlu0 %684
  %s687 = scalar_lea.vmem [#allocation2], 8
  %688 = vst.msk [vmem:[%s687] sm:$0xff] %vm389, %v685
  %s689 = scalar_lea.vmem [#allocation3], 16
  %v690 = vld [vmem:[%s689] sm:$0xff]
  %v691 = vpack.c.bf16 %v682, %v682
  %693 = vrot.lane.b32.xlu0 %v691, 32
  %v694 = vpop.permute.xlu0 %693
  %v696 = vsel %vm389, %v694, 0
  %698 = vmatprep.subr.bf16.mxu0 0
  %699 = vmatpush1.bf16.msra.mxu0 %v538
  %700 = vmatprep.subr.bf16.mxu0 0
  %701 = vmatpush1.bf16.msra.mxu0 %v539
  %702 = vmatprep.subr.bf16.mxu0 0
  %703 = vmatpush1.bf16.msra.mxu0 0
  %704 = vmatprep.subr.bf16.mxu0 0
  %705 = vmatpush1.bf16.msra.mxu0 0
  %706 = vmatprep.subr.bf16.mxu0 0
  %707 = vmatpush1.bf16.msra.mxu0 0
  %708 = vmatprep.subr.bf16.mxu0 0
  %709 = vmatpush1.bf16.msra.mxu0 0
  %710 = vmatprep.subr.bf16.mxu0 0
  %711 = vmatpush1.bf16.msra.mxu0 0
  %712 = vmatprep.subr.bf16.mxu0 0
  %713 = vmatpush1.bf16.msra.mxu0 0
  %714 = vmatprep.subr.bf16.mxu0 0
  %715 = vmatpush1.bf16.msra.mxu0 0
  %716 = vmatprep.subr.bf16.mxu0 0
  %717 = vmatpush1.bf16.msra.mxu0 0
  %718 = vmatprep.subr.bf16.mxu0 0
  %719 = vmatpush1.bf16.msra.mxu0 0
  %720 = vmatprep.subr.bf16.mxu0 0
  %721 = vmatpush1.bf16.msra.mxu0 0
  %722 = vmatprep.subr.bf16.mxu0 0
  %723 = vmatpush1.bf16.msra.mxu0 0
  %724 = vmatprep.subr.bf16.mxu0 0
  %725 = vmatpush1.bf16.msra.mxu0 0
  %726 = vmatprep.subr.bf16.mxu0 0
  %727 = vmatpush1.bf16.msra.mxu0 0
  %728 = vmatprep.subr.bf16.mxu0 0
  %729 = vmatpush1.bf16.msra.mxu0 0
  %730 = vmatprep.mubr.bf16.mxu0 0
  %731 = vmatmul.mubr.bf16.gmra.mrb[0].mxu0 %v696
  %v732 = vpop.f32.mrb[0].mxu0
  %v733 = vadd.f32 0.0, %v732
  %v734 = vpop.f32.mrb[0].mxu0
  %v735 = vpop.f32.mrb[0].mxu0
  %v736 = vpop.f32.mrb[0].mxu0
  %737 = vdwg.mxu0
  %v738 = vadd.f32 %v690, %v733
  %v739 = vmul.f32 %v403, %v738
  %v740 = vtanh.pop %v739
  %v741 = vmul.f32 %v403, %v740
  %v742 = vadd.f32 %v741, %v404
  %v743 = vmul.f32 %v742, %v676
  %745 = vrot.lane.b32.xlu0 %v742, 64
  %v746 = vpop.permute.xlu0 %745
  %v748 = vmul.f32 %v742, %v746
  %750 = vrot.lane.b32.xlu0 %v748, 32
  %v751 = vpop.permute.xlu0 %750
  %v753 = vadd.f32 %v743, %v751
  %v754 = vtanh.pop %v753
  %756 = vrot.lane.b32.xlu0 %v754, 64
  %v757 = vpop.permute.xlu0 %756
  %v759 = vmul.f32 %v742, %v757
  %761 = vrot.lane.b32.xlu0 %v759, 32
  %v762 = vpop.permute.xlu0 %761
  %s764 = scalar_lea.vmem [#allocation2], 16
  %765 = vst.msk [vmem:[%s764] sm:$0xff] %vm389, %v762
  %s766 = scalar_lea.vmem [#allocation3], 24
  %v767 = vld [vmem:[%s766] sm:$0xff]
  %v768 = vpack.c.bf16 %v759, %v759
  %770 = vrot.lane.b32.xlu0 %v768, 32
  %v771 = vpop.permute.xlu0 %770
  %v773 = vsel %vm389, %v771, 0
  %775 = vmatprep.subr.bf16.mxu0 0
  %776 = vmatpush1.bf16.msra.mxu0 %v538
  %777 = vmatprep.subr.bf16.mxu0 0
  %778 = vmatpush1.bf16.msra.mxu0 %v539
  %779 = vmatprep.subr.bf16.mxu0 0
  %780 = vmatpush1.bf16.msra.mxu0 0
  %781 = vmatprep.subr.bf16.mxu0 0
  %782 = vmatpush1.bf16.msra.mxu0 0
  %783 = vmatprep.subr.bf16.mxu0 0
  %784 = vmatpush1.bf16.msra.mxu0 0
  %785 = vmatprep.subr.bf16.mxu0 0
  %786 = vmatpush1.bf16.msra.mxu0 0
  %787 = vmatprep.subr.bf16.mxu0 0
  %788 = vmatpush1.bf16.msra.mxu0 0
  %789 = vmatprep.subr.bf16.mxu0 0
  %790 = vmatpush1.bf16.msra.mxu0 0
  %791 = vmatprep.subr.bf16.mxu0 0
  %792 = vmatpush1.bf16.msra.mxu0 0
  %793 = vmatprep.subr.bf16.mxu0 0
  %794 = vmatpush1.bf16.msra.mxu0 0
  %795 = vmatprep.subr.bf16.mxu0 0
  %796 = vmatpush1.bf16.msra.mxu0 0
  %797 = vmatprep.subr.bf16.mxu0 0
  %798 = vmatpush1.bf16.msra.mxu0 0
  %799 = vmatprep.subr.bf16.mxu0 0
  %800 = vmatpush1.bf16.msra.mxu0 0
  %801 = vmatprep.subr.bf16.mxu0 0
  %802 = vmatpush1.bf16.msra.mxu0 0
  %803 = vmatprep.subr.bf16.mxu0 0
  %804 = vmatpush1.bf16.msra.mxu0 0
  %805 = vmatprep.subr.bf16.mxu0 0
  %806 = vmatpush1.bf16.msra.mxu0 0
  %807 = vmatprep.mubr.bf16.mxu0 0
  %808 = vmatmul.mubr.bf16.gmra.mrb[0].mxu0 %v773
  %v809 = vpop.f32.mrb[0].mxu0
  %v810 = vadd.f32 0.0, %v809
  %v811 = vpop.f32.mrb[0].mxu0
  %v812 = vpop.f32.mrb[0].mxu0
  %v813 = vpop.f32.mrb[0].mxu0
  %814 = vdwg.mxu0
  %v815 = vadd.f32 %v767, %v810
  %v816 = vmul.f32 %v403, %v815
  %v817 = vtanh.pop %v816
  %v818 = vmul.f32 %v403, %v817
  %v819 = vadd.f32 %v818, %v404
  %v820 = vmul.f32 %v819, %v753
  %822 = vrot.lane.b32.xlu0 %v819, 64
  %v823 = vpop.permute.xlu0 %822
  %v825 = vmul.f32 %v819, %v823
  %827 = vrot.lane.b32.xlu0 %v825, 32
  %v828 = vpop.permute.xlu0 %827
  %v830 = vadd.f32 %v820, %v828
  %v831 = vtanh.pop %v830
  %833 = vrot.lane.b32.xlu0 %v831, 64
  %v834 = vpop.permute.xlu0 %833
  %v836 = vmul.f32 %v819, %v834
  %838 = vrot.lane.b32.xlu0 %v836, 32
  %v839 = vpop.permute.xlu0 %838
  %s841 = scalar_lea.vmem [#allocation2], 24
  %842 = vst.msk [vmem:[%s841] sm:$0xff] %vm389, %v839
  %s843 = scalar_lea.vmem [#allocation3], 32
  %v844 = vld [vmem:[%s843] sm:$0xff]
  %v845 = vpack.c.bf16 %v836, %v836
  %847 = vrot.lane.b32.xlu0 %v845, 32
  %v848 = vpop.permute.xlu0 %847
  %v850 = vsel %vm389, %v848, 0
  %852 = vmatprep.subr.bf16.mxu0 0
  %853 = vmatpush1.bf16.msra.mxu0 %v538
  %854 = vmatprep.subr.bf16.mxu0 0
  %855 = vmatpush1.bf16.msra.mxu0 %v539
  %856 = vmatprep.subr.bf16.mxu0 0
  %857 = vmatpush1.bf16.msra.mxu0 0
  %858 = vmatprep.subr.bf16.mxu0 0
  %859 = vmatpush1.bf16.msra.mxu0 0
  %860 = vmatprep.subr.bf16.mxu0 0
  %861 = vmatpush1.bf16.msra.mxu0 0
  %862 = vmatprep.subr.bf16.mxu0 0
  %863 = vmatpush1.bf16.msra.mxu0 0
  %864 = vmatprep.subr.bf16.mxu0 0
  %865 = vmatpush1.bf16.msra.mxu0 0
  %866 = vmatprep.subr.bf16.mxu0 0
  %867 = vmatpush1.bf16.msra.mxu0 0
  %868 = vmatprep.subr.bf16.mxu0 0
  %869 = vmatpush1.bf16.msra.mxu0 0
  %870 = vmatprep.subr.bf16.mxu0 0
  %871 = vmatpush1.bf16.msra.mxu0 0
  %872 = vmatprep.subr.bf16.mxu0 0
  %873 = vmatpush1.bf16.msra.mxu0 0
  %874 = vmatprep.subr.bf16.mxu0 0
  %875 = vmatpush1.bf16.msra.mxu0 0
  %876 = vmatprep.subr.bf16.mxu0 0
  %877 = vmatpush1.bf16.msra.mxu0 0
  %878 = vmatprep.subr.bf16.mxu0 0
  %879 = vmatpush1.bf16.msra.mxu0 0
  %880 = vmatprep.subr.bf16.mxu0 0
  %881 = vmatpush1.bf16.msra.mxu0 0
  %882 = vmatprep.subr.bf16.mxu0 0
  %883 = vmatpush1.bf16.msra.mxu0 0
  %884 = vmatprep.mubr.bf16.mxu0 0
  %885 = vmatmul.mubr.bf16.gmra.mrb[0].mxu0 %v850
  %v886 = vpop.f32.mrb[0].mxu0
  %v887 = vadd.f32 0.0, %v886
  %v888 = vpop.f32.mrb[0].mxu0
  %v889 = vpop.f32.mrb[0].mxu0
  %v890 = vpop.f32.mrb[0].mxu0
  %891 = vdwg.mxu0
  %v892 = vadd.f32 %v844, %v887
  %v893 = vmul.f32 %v403, %v892
  %v894 = vtanh.pop %v893
  %v895 = vmul.f32 %v403, %v894
  %v896 = vadd.f32 %v895, %v404
  %v897 = vmul.f32 %v896, %v830
  %899 = vrot.lane.b32.xlu0 %v896, 64
  %v900 = vpop.permute.xlu0 %899
  %v902 = vmul.f32 %v896, %v900
  %904 = vrot.lane.b32.xlu0 %v902, 32
  %v905 = vpop.permute.xlu0 %904
  %v907 = vadd.f32 %v897, %v905
  %v908 = vtanh.pop %v907
  %910 = vrot.lane.b32.xlu0 %v908, 64
  %v911 = vpop.permute.xlu0 %910
  %v913 = vmul.f32 %v896, %v911
  %915 = vrot.lane.b32.xlu0 %v913, 32
  %v916 = vpop.permute.xlu0 %915
  %s918 = scalar_lea.vmem [#allocation2], 32
  %919 = vst.msk [vmem:[%s918] sm:$0xff] %vm389, %v916
  %s920 = scalar_lea.vmem [#allocation3], 40
  %v921 = vld [vmem:[%s920] sm:$0xff]
  %v922 = vpack.c.bf16 %v913, %v913
  %924 = vrot.lane.b32.xlu0 %v922, 32
  %v925 = vpop.permute.xlu0 %924
  %v927 = vsel %vm389, %v925, 0
  %929 = vmatprep.subr.bf16.mxu0 0
  %930 = vmatpush1.bf16.msra.mxu0 %v538
  %931 = vmatprep.subr.bf16.mxu0 0
  %932 = vmatpush1.bf16.msra.mxu0 %v539
  %933 = vmatprep.subr.bf16.mxu0 0
  %934 = vmatpush1.bf16.msra.mxu0 0
  %935 = vmatprep.subr.bf16.mxu0 0
  %936 = vmatpush1.bf16.msra.mxu0 0
  %937 = vmatprep.subr.bf16.mxu0 0
  %938 = vmatpush1.bf16.msra.mxu0 0
  %939 = vmatprep.subr.bf16.mxu0 0
  %940 = vmatpush1.bf16.msra.mxu0 0
  %941 = vmatprep.subr.bf16.mxu0 0
  %942 = vmatpush1.bf16.msra.mxu0 0
  %943 = vmatprep.subr.bf16.mxu0 0
  %944 = vmatpush1.bf16.msra.mxu0 0
  %945 = vmatprep.subr.bf16.mxu0 0
  %946 = vmatpush1.bf16.msra.mxu0 0
  %947 = vmatprep.subr.bf16.mxu0 0
  %948 = vmatpush1.bf16.msra.mxu0 0
  %949 = vmatprep.subr.bf16.mxu0 0
  %950 = vmatpush1.bf16.msra.mxu0 0
  %951 = vmatprep.subr.bf16.mxu0 0
  %952 = vmatpush1.bf16.msra.mxu0 0
  %953 = vmatprep.subr.bf16.mxu0 0
  %954 = vmatpush1.bf16.msra.mxu0 0
  %955 = vmatprep.subr.bf16.mxu0 0
  %956 = vmatpush1.bf16.msra.mxu0 0
  %957 = vmatprep.subr.bf16.mxu0 0
  %958 = vmatpush1.bf16.msra.mxu0 0
  %959 = vmatprep.subr.bf16.mxu0 0
  %960 = vmatpush1.bf16.msra.mxu0 0
  %961 = vmatprep.mubr.bf16.mxu0 0
  %962 = vmatmul.mubr.bf16.gmra.mrb[0].mxu0 %v927
  %v963 = vpop.f32.mrb[0].mxu0
  %v964 = vadd.f32 0.0, %v963
  %v965 = vpop.f32.mrb[0].mxu0
  %v966 = vpop.f32.mrb[0].mxu0
  %v967 = vpop.f32.mrb[0].mxu0
  %968 = vdwg.mxu0
  %v969 = vadd.f32 %v921, %v964
  %v970 = vmul.f32 %v403, %v969
  %v971 = vtanh.pop %v970
  %v972 = vmul.f32 %v403, %v971
  %v973 = vadd.f32 %v972, %v404
  %v974 = vmul.f32 %v973, %v907
  %976 = vrot.lane.b32.xlu0 %v973, 64
  %v977 = vpop.permute.xlu0 %976
  %v979 = vmul.f32 %v973, %v977
  %981 = vrot.lane.b32.xlu0 %v979, 32
  %v982 = vpop.permute.xlu0 %981
  %v984 = vadd.f32 %v974, %v982
  %v985 = vtanh.pop %v984
  %987 = vrot.lane.b32.xlu0 %v985, 64
  %v988 = vpop.permute.xlu0 %987
  %v990 = vmul.f32 %v973, %v988
  %992 = vrot.lane.b32.xlu0 %v990, 32
  %v993 = vpop.permute.xlu0 %992
  %s995 = scalar_lea.vmem [#allocation2], 40
  %996 = vst.msk [vmem:[%s995] sm:$0xff] %vm389, %v993
  %s997 = scalar_lea.vmem [#allocation3], 48
  %v998 = vld [vmem:[%s997] sm:$0xff]
  %v999 = vpack.c.bf16 %v990, %v990
  %1001 = vrot.lane.b32.xlu0 %v999, 32
  %v1002 = vpop.permute.xlu0 %1001
  %v1004 = vsel %vm389, %v1002, 0
  %1006 = vmatprep.subr.bf16.mxu0 0
  %1007 = vmatpush1.bf16.msra.mxu0 %v538
  %1008 = vmatprep.subr.bf16.mxu0 0
  %1009 = vmatpush1.bf16.msra.mxu0 %v539
  %1010 = vmatprep.subr.bf16.mxu0 0
  %1011 = vmatpush1.bf16.msra.mxu0 0
  %1012 = vmatprep.subr.bf16.mxu0 0
  %1013 = vmatpush1.bf16.msra.mxu0 0
  %1014 = vmatprep.subr.bf16.mxu0 0
  %1015 = vmatpush1.bf16.msra.mxu0 0
  %1016 = vmatprep.subr.bf16.mxu0 0
  %1017 = vmatpush1.bf16.msra.mxu0 0
  %1018 = vmatprep.subr.bf16.mxu0 0
  %1019 = vmatpush1.bf16.msra.mxu0 0
  %1020 = vmatprep.subr.bf16.mxu0 0
  %1021 = vmatpush1.bf16.msra.mxu0 0
  %1022 = vmatprep.subr.bf16.mxu0 0
  %1023 = vmatpush1.bf16.msra.mxu0 0
  %1024 = vmatprep.subr.bf16.mxu0 0
  %1025 = vmatpush1.bf16.msra.mxu0 0
  %1026 = vmatprep.subr.bf16.mxu0 0
  %1027 = vmatpush1.bf16.msra.mxu0 0
  %1028 = vmatprep.subr.bf16.mxu0 0
  %1029 = vmatpush1.bf16.msra.mxu0 0
  %1030 = vmatprep.subr.bf16.mxu0 0
  %1031 = vmatpush1.bf16.msra.mxu0 0
  %1032 = vmatprep.subr.bf16.mxu0 0
  %1033 = vmatpush1.bf16.msra.mxu0 0
  %1034 = vmatprep.subr.bf16.mxu0 0
  %1035 = vmatpush1.bf16.msra.mxu0 0
  %1036 = vmatprep.subr.bf16.mxu0 0
  %1037 = vmatpush1.bf16.msra.mxu0 0
  %1038 = vmatprep.mubr.bf16.mxu0 0
  %1039 = vmatmul.mubr.bf16.gmra.mrb[0].mxu0 %v1004
  %v1040 = vpop.f32.mrb[0].mxu0
  %v1041 = vadd.f32 0.0, %v1040
  %v1042 = vpop.f32.mrb[0].mxu0
  %v1043 = vpop.f32.mrb[0].mxu0
  %v1044 = vpop.f32.mrb[0].mxu0
  %1045 = vdwg.mxu0
  %v1046 = vadd.f32 %v998, %v1041
  %v1047 = vmul.f32 %v403, %v1046
  %v1048 = vtanh.pop %v1047
  %v1049 = vmul.f32 %v403, %v1048
  %v1050 = vadd.f32 %v1049, %v404
  %v1051 = vmul.f32 %v1050, %v984
  %1053 = vrot.lane.b32.xlu0 %v1050, 64
  %v1054 = vpop.permute.xlu0 %1053
  %v1056 = vmul.f32 %v1050, %v1054
  %1058 = vrot.lane.b32.xlu0 %v1056, 32
  %v1059 = vpop.permute.xlu0 %1058
  %v1061 = vadd.f32 %v1051, %v1059
  %v1062 = vtanh.pop %v1061
  %1064 = vrot.lane.b32.xlu0 %v1062, 64
  %v1065 = vpop.permute.xlu0 %1064
  %v1067 = vmul.f32 %v1050, %v1065
  %1069 = vrot.lane.b32.xlu0 %v1067, 32
  %v1070 = vpop.permute.xlu0 %1069
  %s1072 = scalar_lea.vmem [#allocation2], 48
  %1073 = vst.msk [vmem:[%s1072] sm:$0xff] %vm389, %v1070
  %s1074 = scalar_lea.vmem [#allocation3], 56
  %v1075 = vld [vmem:[%s1074] sm:$0xff]
  %v1076 = vpack.c.bf16 %v1067, %v1067
  %1078 = vrot.lane.b32.xlu0 %v1076, 32
  %v1079 = vpop.permute.xlu0 %1078
  %v1081 = vsel %vm389, %v1079, 0
  %1083 = vmatprep.subr.bf16.mxu0 0
  %1084 = vmatpush1.bf16.msra.mxu0 %v538
  %1085 = vmatprep.subr.bf16.mxu0 0
  %1086 = vmatpush1.bf16.msra.mxu0 %v539
  %1087 = vmatprep.subr.bf16.mxu0 0
  %1088 = vmatpush1.bf16.msra.mxu0 0
  %1089 = vmatprep.subr.bf16.mxu0 0
  %1090 = vmatpush1.bf16.msra.mxu0 0
  %1091 = vmatprep.subr.bf16.mxu0 0
  %1092 = vmatpush1.bf16.msra.mxu0 0
  %1093 = vmatprep.subr.bf16.mxu0 0
  %1094 = vmatpush1.bf16.msra.mxu0 0
  %1095 = vmatprep.subr.bf16.mxu0 0
  %1096 = vmatpush1.bf16.msra.mxu0 0
  %1097 = vmatprep.subr.bf16.mxu0 0
  %1098 = vmatpush1.bf16.msra.mxu0 0
  %1099 = vmatprep.subr.bf16.mxu0 0
  %1100 = vmatpush1.bf16.msra.mxu0 0
  %1101 = vmatprep.subr.bf16.mxu0 0
  %1102 = vmatpush1.bf16.msra.mxu0 0
  %1103 = vmatprep.subr.bf16.mxu0 0
  %1104 = vmatpush1.bf16.msra.mxu0 0
  %1105 = vmatprep.subr.bf16.mxu0 0
  %1106 = vmatpush1.bf16.msra.mxu0 0
  %1107 = vmatprep.subr.bf16.mxu0 0
  %1108 = vmatpush1.bf16.msra.mxu0 0
  %1109 = vmatprep.subr.bf16.mxu0 0
  %1110 = vmatpush1.bf16.msra.mxu0 0
  %1111 = vmatprep.subr.bf16.mxu0 0
  %1112 = vmatpush1.bf16.msra.mxu0 0
  %1113 = vmatprep.subr.bf16.mxu0 0
  %1114 = vmatpush1.bf16.msra.mxu0 0
  %1115 = vmatprep.mubr.bf16.mxu0 0
  %1116 = vmatmul.mubr.bf16.gmra.mrb[0].mxu0 %v1081
  %v1117 = vpop.f32.mrb[0].mxu0
  %v1118 = vadd.f32 0.0, %v1117
  %v1119 = vpop.f32.mrb[0].mxu0
  %v1120 = vpop.f32.mrb[0].mxu0
  %v1121 = vpop.f32.mrb[0].mxu0
  %1122 = vdwg.mxu0
  %v1123 = vadd.f32 %v1075, %v1118
  %v1124 = vmul.f32 %v403, %v1123
  %v1125 = vtanh.pop %v1124
  %v1126 = vmul.f32 %v403, %v1125
  %v1127 = vadd.f32 %v1126, %v404
  %v1128 = vmul.f32 %v1127, %v1061
  %1130 = vrot.lane.b32.xlu0 %v1127, 64
  %v1131 = vpop.permute.xlu0 %1130
  %v1133 = vmul.f32 %v1127, %v1131
  %1135 = vrot.lane.b32.xlu0 %v1133, 32
  %v1136 = vpop.permute.xlu0 %1135
  %v1138 = vadd.f32 %v1128, %v1136
  %v1139 = vtanh.pop %v1138
  %1141 = vrot.lane.b32.xlu0 %v1139, 64
  %v1142 = vpop.permute.xlu0 %1141
  %v1144 = vmul.f32 %v1127, %v1142
  %1146 = vrot.lane.b32.xlu0 %v1144, 32
  %v1147 = vpop.permute.xlu0 %1146
  %s1149 = scalar_lea.vmem [#allocation2], 56
  %1150 = vst.msk [vmem:[%s1149] sm:$0xff] %vm389, %v1147
  %v1151 = vld [vmem:[#allocation2] sm:$0xff]
  %v1152 = vld [vmem:[#allocation2 + $0x8] sm:$0xff]
  %v1153 = vld [vmem:[#allocation2 + $0x10] sm:$0xff]
  %v1154 = vld [vmem:[#allocation2 + $0x18] sm:$0xff]
  %v1155 = vld [vmem:[#allocation2 + $0x20] sm:$0xff]
  %v1156 = vld [vmem:[#allocation2 + $0x28] sm:$0xff]
  %v1157 = vld [vmem:[#allocation2 + $0x30] sm:$0xff]
  %v1158 = vld [vmem:[#allocation2 + $0x38] sm:$0xff]
  %v1159 = vpack.c.bf16 %v1152, %v1151
  %v1160 = vpack.c.bf16 %v1154, %v1153
  %v1161 = vpack.c.bf16 %v1156, %v1155
  %v1162 = vpack.c.bf16 %v1158, %v1157
  %s1163 = scalar_lea.vmem %s6, 16
  %v1164 = vld [vmem:[%s1163] sm:$0xf]
  %v1165 = vld [vmem:[%s1163 + $0x4] sm:$0xf]
  %v1166 = vld [vmem:[%s1163 + $0x8] sm:$0xf]
  %v1167 = vld [vmem:[%s1163 + $0xc] sm:$0xf]
  %s1168 = scalar_lea.vmem %s8, 1
  %v1169 = vld [vmem:[%s1168] sm:$0x1]
  %v1171 = vlaneseq
  %v1172 = vshrl.u32 %v1171, 7
  %v1173 = vsub.s32 0, %v1172
  %v1174 = vrot.slane %v1169, %v1173
  %v1180 = vunpack.c.l.b16 %v1164
  %v1181 = vunpack.c.l.b16 %v1165
  %v1182 = vunpack.c.l.b16 %v1166
  %v1183 = vunpack.c.l.b16 %v1167
  %v1184 = vpack.c.b16 %v1181, %v1180
  %v1185 = vpack.c.b16 %v1183, %v1182
  %v1189 = vsel %vm389, %v1159, 0
  %v1192 = vsel %vm389, %v1160, 0
  %v1195 = vsel %vm389, %v1161, 0
  %v1198 = vsel %vm389, %v1162, 0
  %1200 = vmatprep.subr.bf16.mxu0 0
  %1201 = vmatpush1.bf16.msra.mxu0 %v1184
  %1202 = vmatprep.subr.bf16.mxu0 0
  %1203 = vmatpush1.bf16.msra.mxu0 %v1185
  %1204 = vmatprep.subr.bf16.mxu0 0
  %1205 = vmatpush1.bf16.msra.mxu0 0
  %1206 = vmatprep.subr.bf16.mxu0 0
  %1207 = vmatpush1.bf16.msra.mxu0 0
  %1208 = vmatprep.subr.bf16.mxu0 0
  %1209 = vmatpush1.bf16.msra.mxu0 0
  %1210 = vmatprep.subr.bf16.mxu0 0
  %1211 = vmatpush1.bf16.msra.mxu0 0
  %1212 = vmatprep.subr.bf16.mxu0 0
  %1213 = vmatpush1.bf16.msra.mxu0 0
  %1214 = vmatprep.subr.bf16.mxu0 0
  %1215 = vmatpush1.bf16.msra.mxu0 0
  %1216 = vmatprep.subr.bf16.mxu0 0
  %1217 = vmatpush1.bf16.msra.mxu0 0
  %1218 = vmatprep.subr.bf16.mxu0 0
  %1219 = vmatpush1.bf16.msra.mxu0 0
  %1220 = vmatprep.subr.bf16.mxu0 0
  %1221 = vmatpush1.bf16.msra.mxu0 0
  %1222 = vmatprep.subr.bf16.mxu0 0
  %1223 = vmatpush1.bf16.msra.mxu0 0
  %1224 = vmatprep.subr.bf16.mxu0 0
  %1225 = vmatpush1.bf16.msra.mxu0 0
  %1226 = vmatprep.subr.bf16.mxu0 0
  %1227 = vmatpush1.bf16.msra.mxu0 0
  %1228 = vmatprep.subr.bf16.mxu0 0
  %1229 = vmatpush1.bf16.msra.mxu0 0
  %1230 = vmatprep.subr.bf16.mxu0 0
  %1231 = vmatpush1.bf16.msra.mxu0 0
  %1232 = vmatprep.mubr.bf16.mxu0 0
  %1233 = vmatmul.mubr.bf16.gmra.mrb[0].mxu0 %v1189
  %v1234 = vpop.f32.mrb[0].mxu0
  %v1235 = vadd.f32 %v1174, %v1234
  %v1236 = vpop.f32.mrb[0].mxu0
  %v1237 = vpop.f32.mrb[0].mxu0
  %v1238 = vadd.f32 %v1174, %v1237
  %v1239 = vpop.f32.mrb[0].mxu0
  %1240 = vmatprep.mubr.bf16.mxu0 0
  %1241 = vmatmul.mubr.bf16.gmra.mrb[0].mxu0 %v1192
  %v1242 = vpop.f32.mrb[0].mxu0
  %v1243 = vadd.f32 %v1174, %v1242
  %v1244 = vpop.f32.mrb[0].mxu0
  %v1245 = vpop.f32.mrb[0].mxu0
  %v1246 = vadd.f32 %v1174, %v1245
  %v1247 = vpop.f32.mrb[0].mxu0
  %1248 = vmatprep.mubr.bf16.mxu0 0
  %1249 = vmatmul.mubr.bf16.gmra.mrb[0].mxu0 %v1195
  %v1250 = vpop.f32.mrb[0].mxu0
  %v1251 = vadd.f32 %v1174, %v1250
  %v1252 = vpop.f32.mrb[0].mxu0
  %v1253 = vpop.f32.mrb[0].mxu0
  %v1254 = vadd.f32 %v1174, %v1253
  %v1255 = vpop.f32.mrb[0].mxu0
  %1256 = vmatprep.mubr.bf16.mxu0 0
  %1257 = vmatmul.mubr.bf16.gmra.mrb[0].mxu0 %v1198
  %v1258 = vpop.f32.mrb[0].mxu0
  %v1259 = vadd.f32 %v1174, %v1258
  %v1260 = vpop.f32.mrb[0].mxu0
  %v1261 = vpop.f32.mrb[0].mxu0
  %v1262 = vadd.f32 %v1174, %v1261
  %v1263 = vpop.f32.mrb[0].mxu0
  %1264 = vdwg.mxu0
  %1265 = vst [vmem:[#allocation3] sm:$0xff] %v1235
  %1266 = vst [vmem:[#allocation3 + $0x8] sm:$0xff] %v1238
  %1267 = vst [vmem:[#allocation3 + $0x10] sm:$0xff] %v1243
  %1268 = vst [vmem:[#allocation3 + $0x18] sm:$0xff] %v1246
  %1269 = vst [vmem:[#allocation3 + $0x20] sm:$0xff] %v1251
  %1270 = vst [vmem:[#allocation3 + $0x28] sm:$0xff] %v1254
  %1271 = vst [vmem:[#allocation3 + $0x30] sm:$0xff] %v1259
  %1272 = vst [vmem:[#allocation3 + $0x38] sm:$0xff] %v1262
  %s1273 = scalar_lea.vmem %s7, 16
  %v1274 = vld [vmem:[%s1273] sm:$0xf]
  %v1275 = vld [vmem:[%s1273 + $0x4] sm:$0xf]
  %v1276 = vld [vmem:[%s1273 + $0x8] sm:$0xf]
  %v1277 = vld [vmem:[%s1273 + $0xc] sm:$0xf]
  %v1278 = vld [vmem:[#allocation3] sm:$0xff]
  %v1283 = vunpack.c.l.b16 %v1274
  %v1284 = vunpack.c.l.b16 %v1275
  %v1285 = vunpack.c.l.b16 %v1276
  %v1286 = vunpack.c.l.b16 %v1277
  %v1287 = vpack.c.b16 %v1284, %v1283
  %v1288 = vpack.c.b16 %v1286, %v1285
  %1291 = vmatprep.subr.bf16.mxu0 0
  %1292 = vmatpush1.bf16.msra.mxu0 %v1287
  %1293 = vmatprep.subr.bf16.mxu0 0
  %1294 = vmatpush1.bf16.msra.mxu0 %v1288
  %1295 = vmatprep.subr.bf16.mxu0 0
  %1296 = vmatpush1.bf16.msra.mxu0 0
  %1297 = vmatprep.subr.bf16.mxu0 0
  %1298 = vmatpush1.bf16.msra.mxu0 0
  %1299 = vmatprep.subr.bf16.mxu0 0
  %1300 = vmatpush1.bf16.msra.mxu0 0
  %1301 = vmatprep.subr.bf16.mxu0 0
  %1302 = vmatpush1.bf16.msra.mxu0 0
  %1303 = vmatprep.subr.bf16.mxu0 0
  %1304 = vmatpush1.bf16.msra.mxu0 0
  %1305 = vmatprep.subr.bf16.mxu0 0
  %1306 = vmatpush1.bf16.msra.mxu0 0
  %1307 = vmatprep.subr.bf16.mxu0 0
  %1308 = vmatpush1.bf16.msra.mxu0 0
  %1309 = vmatprep.subr.bf16.mxu0 0
  %1310 = vmatpush1.bf16.msra.mxu0 0
  %1311 = vmatprep.subr.bf16.mxu0 0
  %1312 = vmatpush1.bf16.msra.mxu0 0
  %1313 = vmatprep.subr.bf16.mxu0 0
  %1314 = vmatpush1.bf16.msra.mxu0 0
  %1315 = vmatprep.subr.bf16.mxu0 0
  %1316 = vmatpush1.bf16.msra.mxu0 0
  %1317 = vmatprep.subr.bf16.mxu0 0
  %1318 = vmatpush1.bf16.msra.mxu0 0
  %1319 = vmatprep.subr.bf16.mxu0 0
  %1320 = vmatpush1.bf16.msra.mxu0 0
  %1321 = vmatprep.subr.bf16.mxu0 0
  %1322 = vmatpush1.bf16.msra.mxu0 0
  %1323 = vmatprep.mubr.bf16.mxu0 0
  %1324 = vmatmul.mubr.bf16.gmra.mrb[0].mxu0 %v543
  %v1325 = vpop.f32.mrb[0].mxu0
  %v1326 = vadd.f32 0.0, %v1325
  %v1327 = vpop.f32.mrb[0].mxu0
  %v1328 = vpop.f32.mrb[0].mxu0
  %v1329 = vpop.f32.mrb[0].mxu0
  %1330 = vdwg.mxu0
  %v1331 = vadd.f32 %v1278, %v1326
  %v1332 = vmul.f32 %v403, %v1331
  %v1333 = vtanh.pop %v1332
  %v1334 = vmul.f32 %v403, %v1333
  %v1335 = vadd.f32 %v1334, %v404
  %v1336 = vmul.f32 %v1335, 0.0
  %1338 = vrot.lane.b32.xlu0 %v1335, 64
  %v1339 = vpop.permute.xlu0 %1338
  %v1341 = vmul.f32 %v1335, %v1339
  %1343 = vrot.lane.b32.xlu0 %v1341, 32
  %v1344 = vpop.permute.xlu0 %1343
  %v1346 = vadd.f32 %v1336, %v1344
  %v1347 = vtanh.pop %v1346
  %1349 = vrot.lane.b32.xlu0 %v1347, 64
  %v1350 = vpop.permute.xlu0 %1349
  %v1352 = vmul.f32 %v1335, %v1350
  %1354 = vrot.lane.b32.xlu0 %v1352, 32
  %v1355 = vpop.permute.xlu0 %1354
  %1357 = vst.msk [vmem:[#allocation2] sm:$0xff] %vm389, %v1355
  %v1358 = vld [vmem:[%s612] sm:$0xff]
  %v1359 = vpack.c.bf16 %v1352, %v1352
  %1361 = vrot.lane.b32.xlu0 %v1359, 32
  %v1362 = vpop.permute.xlu0 %1361
  %v1364 = vsel %vm389, %v1362, 0
  %1366 = vmatprep.subr.bf16.mxu0 0
  %1367 = vmatpush1.bf16.msra.mxu0 %v1287
  %1368 = vmatprep.subr.bf16.mxu0 0
  %1369 = vmatpush1.bf16.msra.mxu0 %v1288
  %1370 = vmatprep.subr.bf16.mxu0 0
  %1371 = vmatpush1.bf16.msra.mxu0 0
  %1372 = vmatprep.subr.bf16.mxu0 0
  %1373 = vmatpush1.bf16.msra.mxu0 0
  %1374 = vmatprep.subr.bf16.mxu0 0
  %1375 = vmatpush1.bf16.msra.mxu0 0
  %1376 = vmatprep.subr.bf16.mxu0 0
  %1377 = vmatpush1.bf16.msra.mxu0 0
  %1378 = vmatprep.subr.bf16.mxu0 0
  %1379 = vmatpush1.bf16.msra.mxu0 0
  %1380 = vmatprep.subr.bf16.mxu0 0
  %1381 = vmatpush1.bf16.msra.mxu0 0
  %1382 = vmatprep.subr.bf16.mxu0 0
  %1383 = vmatpush1.bf16.msra.mxu0 0
  %1384 = vmatprep.subr.bf16.mxu0 0
  %1385 = vmatpush1.bf16.msra.mxu0 0
  %1386 = vmatprep.subr.bf16.mxu0 0
  %1387 = vmatpush1.bf16.msra.mxu0 0
  %1388 = vmatprep.subr.bf16.mxu0 0
  %1389 = vmatpush1.bf16.msra.mxu0 0
  %1390 = vmatprep.subr.bf16.mxu0 0
  %1391 = vmatpush1.bf16.msra.mxu0 0
  %1392 = vmatprep.subr.bf16.mxu0 0
  %1393 = vmatpush1.bf16.msra.mxu0 0
  %1394 = vmatprep.subr.bf16.mxu0 0
  %1395 = vmatpush1.bf16.msra.mxu0 0
  %1396 = vmatprep.subr.bf16.mxu0 0
  %1397 = vmatpush1.bf16.msra.mxu0 0
  %1398 = vmatprep.mubr.bf16.mxu0 0
  %1399 = vmatmul.mubr.bf16.gmra.mrb[0].mxu0 %v1364
  %v1400 = vpop.f32.mrb[0].mxu0
  %v1401 = vadd.f32 0.0, %v1400
  %v1402 = vpop.f32.mrb[0].mxu0
  %v1403 = vpop.f32.mrb[0].mxu0
  %v1404 = vpop.f32.mrb[0].mxu0
  %1405 = vdwg.mxu0
  %v1406 = vadd.f32 %v1358, %v1401
  %v1407 = vmul.f32 %v403, %v1406
  %v1408 = vtanh.pop %v1407
  %v1409 = vmul.f32 %v403, %v1408
  %v1410 = vadd.f32 %v1409, %v404
  %v1411 = vmul.f32 %v1410, %v1346
  %1413 = vrot.lane.b32.xlu0 %v1410, 64
  %v1414 = vpop.permute.xlu0 %1413
  %v1416 = vmul.f32 %v1410, %v1414
  %1418 = vrot.lane.b32.xlu0 %v1416, 32
  %v1419 = vpop.permute.xlu0 %1418
  %v1421 = vadd.f32 %v1411, %v1419
  %v1422 = vtanh.pop %v1421
  %1424 = vrot.lane.b32.xlu0 %v1422, 64
  %v1425 = vpop.permute.xlu0 %1424
  %v1427 = vmul.f32 %v1410, %v1425
  %1429 = vrot.lane.b32.xlu0 %v1427, 32
  %v1430 = vpop.permute.xlu0 %1429
  %1432 = vst.msk [vmem:[%s687] sm:$0xff] %vm389, %v1430
  %v1433 = vld [vmem:[%s689] sm:$0xff]
  %v1434 = vpack.c.bf16 %v1427, %v1427
  %1436 = vrot.lane.b32.xlu0 %v1434, 32
  %v1437 = vpop.permute.xlu0 %1436
  %v1439 = vsel %vm389, %v1437, 0
  %1441 = vmatprep.subr.bf16.mxu0 0
  %1442 = vmatpush1.bf16.msra.mxu0 %v1287
  %1443 = vmatprep.subr.bf16.mxu0 0
  %1444 = vmatpush1.bf16.msra.mxu0 %v1288
  %1445 = vmatprep.subr.bf16.mxu0 0
  %1446 = vmatpush1.bf16.msra.mxu0 0
  %1447 = vmatprep.subr.bf16.mxu0 0
  %1448 = vmatpush1.bf16.msra.mxu0 0
  %1449 = vmatprep.subr.bf16.mxu0 0
  %1450 = vmatpush1.bf16.msra.mxu0 0
  %1451 = vmatprep.subr.bf16.mxu0 0
  %1452 = vmatpush1.bf16.msra.mxu0 0
  %1453 = vmatprep.subr.bf16.mxu0 0
  %1454 = vmatpush1.bf16.msra.mxu0 0
  %1455 = vmatprep.subr.bf16.mxu0 0
  %1456 = vmatpush1.bf16.msra.mxu0 0
  %1457 = vmatprep.subr.bf16.mxu0 0
  %1458 = vmatpush1.bf16.msra.mxu0 0
  %1459 = vmatprep.subr.bf16.mxu0 0
  %1460 = vmatpush1.bf16.msra.mxu0 0
  %1461 = vmatprep.subr.bf16.mxu0 0
  %1462 = vmatpush1.bf16.msra.mxu0 0
  %1463 = vmatprep.subr.bf16.mxu0 0
  %1464 = vmatpush1.bf16.msra.mxu0 0
  %1465 = vmatprep.subr.bf16.mxu0 0
  %1466 = vmatpush1.bf16.msra.mxu0 0
  %1467 = vmatprep.subr.bf16.mxu0 0
  %1468 = vmatpush1.bf16.msra.mxu0 0
  %1469 = vmatprep.subr.bf16.mxu0 0
  %1470 = vmatpush1.bf16.msra.mxu0 0
  %1471 = vmatprep.subr.bf16.mxu0 0
  %1472 = vmatpush1.bf16.msra.mxu0 0
  %1473 = vmatprep.mubr.bf16.mxu0 0
  %1474 = vmatmul.mubr.bf16.gmra.mrb[0].mxu0 %v1439
  %v1475 = vpop.f32.mrb[0].mxu0
  %v1476 = vadd.f32 0.0, %v1475
  %v1477 = vpop.f32.mrb[0].mxu0
  %v1478 = vpop.f32.mrb[0].mxu0
  %v1479 = vpop.f32.mrb[0].mxu0
  %1480 = vdwg.mxu0
  %v1481 = vadd.f32 %v1433, %v1476
  %v1482 = vmul.f32 %v403, %v1481
  %v1483 = vtanh.pop %v1482
  %v1484 = vmul.f32 %v403, %v1483
  %v1485 = vadd.f32 %v1484, %v404
  %v1486 = vmul.f32 %v1485, %v1421
  %1488 = vrot.lane.b32.xlu0 %v1485, 64
  %v1489 = vpop.permute.xlu0 %1488
  %v1491 = vmul.f32 %v1485, %v1489
  %1493 = vrot.lane.b32.xlu0 %v1491, 32
  %v1494 = vpop.permute.xlu0 %1493
  %v1496 = vadd.f32 %v1486, %v1494
  %v1497 = vtanh.pop %v1496
  %1499 = vrot.lane.b32.xlu0 %v1497, 64
  %v1500 = vpop.permute.xlu0 %1499
  %v1502 = vmul.f32 %v1485, %v1500
  %1504 = vrot.lane.b32.xlu0 %v1502, 32
  %v1505 = vpop.permute.xlu0 %1504
  %1507 = vst.msk [vmem:[%s764] sm:$0xff] %vm389, %v1505
  %v1508 = vld [vmem:[%s766] sm:$0xff]
  %v1509 = vpack.c.bf16 %v1502, %v1502
  %1511 = vrot.lane.b32.xlu0 %v1509, 32
  %v1512 = vpop.permute.xlu0 %1511
  %v1514 = vsel %vm389, %v1512, 0
  %1516 = vmatprep.subr.bf16.mxu0 0
  %1517 = vmatpush1.bf16.msra.mxu0 %v1287
  %1518 = vmatprep.subr.bf16.mxu0 0
  %1519 = vmatpush1.bf16.msra.mxu0 %v1288
  %1520 = vmatprep.subr.bf16.mxu0 0
  %1521 = vmatpush1.bf16.msra.mxu0 0
  %1522 = vmatprep.subr.bf16.mxu0 0
  %1523 = vmatpush1.bf16.msra.mxu0 0
  %1524 = vmatprep.subr.bf16.mxu0 0
  %1525 = vmatpush1.bf16.msra.mxu0 0
  %1526 = vmatprep.subr.bf16.mxu0 0
  %1527 = vmatpush1.bf16.msra.mxu0 0
  %1528 = vmatprep.subr.bf16.mxu0 0
  %1529 = vmatpush1.bf16.msra.mxu0 0
  %1530 = vmatprep.subr.bf16.mxu0 0
  %1531 = vmatpush1.bf16.msra.mxu0 0
  %1532 = vmatprep.subr.bf16.mxu0 0
  %1533 = vmatpush1.bf16.msra.mxu0 0
  %1534 = vmatprep.subr.bf16.mxu0 0
  %1535 = vmatpush1.bf16.msra.mxu0 0
  %1536 = vmatprep.subr.bf16.mxu0 0
  %1537 = vmatpush1.bf16.msra.mxu0 0
  %1538 = vmatprep.subr.bf16.mxu0 0
  %1539 = vmatpush1.bf16.msra.mxu0 0
  %1540 = vmatprep.subr.bf16.mxu0 0
  %1541 = vmatpush1.bf16.msra.mxu0 0
  %1542 = vmatprep.subr.bf16.mxu0 0
  %1543 = vmatpush1.bf16.msra.mxu0 0
  %1544 = vmatprep.subr.bf16.mxu0 0
  %1545 = vmatpush1.bf16.msra.mxu0 0
  %1546 = vmatprep.subr.bf16.mxu0 0
  %1547 = vmatpush1.bf16.msra.mxu0 0
  %1548 = vmatprep.mubr.bf16.mxu0 0
  %1549 = vmatmul.mubr.bf16.gmra.mrb[0].mxu0 %v1514
  %v1550 = vpop.f32.mrb[0].mxu0
  %v1551 = vadd.f32 0.0, %v1550
  %v1552 = vpop.f32.mrb[0].mxu0
  %v1553 = vpop.f32.mrb[0].mxu0
  %v1554 = vpop.f32.mrb[0].mxu0
  %1555 = vdwg.mxu0
  %v1556 = vadd.f32 %v1508, %v1551
  %v1557 = vmul.f32 %v403, %v1556
  %v1558 = vtanh.pop %v1557
  %v1559 = vmul.f32 %v403, %v1558
  %v1560 = vadd.f32 %v1559, %v404
  %v1561 = vmul.f32 %v1560, %v1496
  %1563 = vrot.lane.b32.xlu0 %v1560, 64
  %v1564 = vpop.permute.xlu0 %1563
  %v1566 = vmul.f32 %v1560, %v1564
  %1568 = vrot.lane.b32.xlu0 %v1566, 32
  %v1569 = vpop.permute.xlu0 %1568
  %v1571 = vadd.f32 %v1561, %v1569
  %v1572 = vtanh.pop %v1571
  %1574 = vrot.lane.b32.xlu0 %v1572, 64
  %v1575 = vpop.permute.xlu0 %1574
  %v1577 = vmul.f32 %v1560, %v1575
  %1579 = vrot.lane.b32.xlu0 %v1577, 32
  %v1580 = vpop.permute.xlu0 %1579
  %1582 = vst.msk [vmem:[%s841] sm:$0xff] %vm389, %v1580
  %v1583 = vld [vmem:[%s843] sm:$0xff]
  %v1584 = vpack.c.bf16 %v1577, %v1577
  %1586 = vrot.lane.b32.xlu0 %v1584, 32
  %v1587 = vpop.permute.xlu0 %1586
  %v1589 = vsel %vm389, %v1587, 0
  %1591 = vmatprep.subr.bf16.mxu0 0
  %1592 = vmatpush1.bf16.msra.mxu0 %v1287
  %1593 = vmatprep.subr.bf16.mxu0 0
  %1594 = vmatpush1.bf16.msra.mxu0 %v1288
  %1595 = vmatprep.subr.bf16.mxu0 0
  %1596 = vmatpush1.bf16.msra.mxu0 0
  %1597 = vmatprep.subr.bf16.mxu0 0
  %1598 = vmatpush1.bf16.msra.mxu0 0
  %1599 = vmatprep.subr.bf16.mxu0 0
  %1600 = vmatpush1.bf16.msra.mxu0 0
  %1601 = vmatprep.subr.bf16.mxu0 0
  %1602 = vmatpush1.bf16.msra.mxu0 0
  %1603 = vmatprep.subr.bf16.mxu0 0
  %1604 = vmatpush1.bf16.msra.mxu0 0
  %1605 = vmatprep.subr.bf16.mxu0 0
  %1606 = vmatpush1.bf16.msra.mxu0 0
  %1607 = vmatprep.subr.bf16.mxu0 0
  %1608 = vmatpush1.bf16.msra.mxu0 0
  %1609 = vmatprep.subr.bf16.mxu0 0
  %1610 = vmatpush1.bf16.msra.mxu0 0
  %1611 = vmatprep.subr.bf16.mxu0 0
  %1612 = vmatpush1.bf16.msra.mxu0 0
  %1613 = vmatprep.subr.bf16.mxu0 0
  %1614 = vmatpush1.bf16.msra.mxu0 0
  %1615 = vmatprep.subr.bf16.mxu0 0
  %1616 = vmatpush1.bf16.msra.mxu0 0
  %1617 = vmatprep.subr.bf16.mxu0 0
  %1618 = vmatpush1.bf16.msra.mxu0 0
  %1619 = vmatprep.subr.bf16.mxu0 0
  %1620 = vmatpush1.bf16.msra.mxu0 0
  %1621 = vmatprep.subr.bf16.mxu0 0
  %1622 = vmatpush1.bf16.msra.mxu0 0
  %1623 = vmatprep.mubr.bf16.mxu0 0
  %1624 = vmatmul.mubr.bf16.gmra.mrb[0].mxu0 %v1589
  %v1625 = vpop.f32.mrb[0].mxu0
  %v1626 = vadd.f32 0.0, %v1625
  %v1627 = vpop.f32.mrb[0].mxu0
  %v1628 = vpop.f32.mrb[0].mxu0
  %v1629 = vpop.f32.mrb[0].mxu0
  %1630 = vdwg.mxu0
  %v1631 = vadd.f32 %v1583, %v1626
  %v1632 = vmul.f32 %v403, %v1631
  %v1633 = vtanh.pop %v1632
  %v1634 = vmul.f32 %v403, %v1633
  %v1635 = vadd.f32 %v1634, %v404
  %v1636 = vmul.f32 %v1635, %v1571
  %1638 = vrot.lane.b32.xlu0 %v1635, 64
  %v1639 = vpop.permute.xlu0 %1638
  %v1641 = vmul.f32 %v1635, %v1639
  %1643 = vrot.lane.b32.xlu0 %v1641, 32
  %v1644 = vpop.permute.xlu0 %1643
  %v1646 = vadd.f32 %v1636, %v1644
  %v1647 = vtanh.pop %v1646
  %1649 = vrot.lane.b32.xlu0 %v1647, 64
  %v1650 = vpop.permute.xlu0 %1649
  %v1652 = vmul.f32 %v1635, %v1650
  %1654 = vrot.lane.b32.xlu0 %v1652, 32
  %v1655 = vpop.permute.xlu0 %1654
  %1657 = vst.msk [vmem:[%s918] sm:$0xff] %vm389, %v1655
  %v1658 = vld [vmem:[%s920] sm:$0xff]
  %v1659 = vpack.c.bf16 %v1652, %v1652
  %1661 = vrot.lane.b32.xlu0 %v1659, 32
  %v1662 = vpop.permute.xlu0 %1661
  %v1664 = vsel %vm389, %v1662, 0
  %1666 = vmatprep.subr.bf16.mxu0 0
  %1667 = vmatpush1.bf16.msra.mxu0 %v1287
  %1668 = vmatprep.subr.bf16.mxu0 0
  %1669 = vmatpush1.bf16.msra.mxu0 %v1288
  %1670 = vmatprep.subr.bf16.mxu0 0
  %1671 = vmatpush1.bf16.msra.mxu0 0
  %1672 = vmatprep.subr.bf16.mxu0 0
  %1673 = vmatpush1.bf16.msra.mxu0 0
  %1674 = vmatprep.subr.bf16.mxu0 0
  %1675 = vmatpush1.bf16.msra.mxu0 0
  %1676 = vmatprep.subr.bf16.mxu0 0
  %1677 = vmatpush1.bf16.msra.mxu0 0
  %1678 = vmatprep.subr.bf16.mxu0 0
  %1679 = vmatpush1.bf16.msra.mxu0 0
  %1680 = vmatprep.subr.bf16.mxu0 0
  %1681 = vmatpush1.bf16.msra.mxu0 0
  %1682 = vmatprep.subr.bf16.mxu0 0
  %1683 = vmatpush1.bf16.msra.mxu0 0
  %1684 = vmatprep.subr.bf16.mxu0 0
  %1685 = vmatpush1.bf16.msra.mxu0 0
  %1686 = vmatprep.subr.bf16.mxu0 0
  %1687 = vmatpush1.bf16.msra.mxu0 0
  %1688 = vmatprep.subr.bf16.mxu0 0
  %1689 = vmatpush1.bf16.msra.mxu0 0
  %1690 = vmatprep.subr.bf16.mxu0 0
  %1691 = vmatpush1.bf16.msra.mxu0 0
  %1692 = vmatprep.subr.bf16.mxu0 0
  %1693 = vmatpush1.bf16.msra.mxu0 0
  %1694 = vmatprep.subr.bf16.mxu0 0
  %1695 = vmatpush1.bf16.msra.mxu0 0
  %1696 = vmatprep.subr.bf16.mxu0 0
  %1697 = vmatpush1.bf16.msra.mxu0 0
  %1698 = vmatprep.mubr.bf16.mxu0 0
  %1699 = vmatmul.mubr.bf16.gmra.mrb[0].mxu0 %v1664
  %v1700 = vpop.f32.mrb[0].mxu0
  %v1701 = vadd.f32 0.0, %v1700
  %v1702 = vpop.f32.mrb[0].mxu0
  %v1703 = vpop.f32.mrb[0].mxu0
  %v1704 = vpop.f32.mrb[0].mxu0
  %1705 = vdwg.mxu0
  %v1706 = vadd.f32 %v1658, %v1701
  %v1707 = vmul.f32 %v403, %v1706
  %v1708 = vtanh.pop %v1707
  %v1709 = vmul.f32 %v403, %v1708
  %v1710 = vadd.f32 %v1709, %v404
  %v1711 = vmul.f32 %v1710, %v1646
  %1713 = vrot.lane.b32.xlu0 %v1710, 64
  %v1714 = vpop.permute.xlu0 %1713
  %v1716 = vmul.f32 %v1710, %v1714
  %1718 = vrot.lane.b32.xlu0 %v1716, 32
  %v1719 = vpop.permute.xlu0 %1718
  %v1721 = vadd.f32 %v1711, %v1719
  %v1722 = vtanh.pop %v1721
  %1724 = vrot.lane.b32.xlu0 %v1722, 64
  %v1725 = vpop.permute.xlu0 %1724
  %v1727 = vmul.f32 %v1710, %v1725
  %1729 = vrot.lane.b32.xlu0 %v1727, 32
  %v1730 = vpop.permute.xlu0 %1729
  %1732 = vst.msk [vmem:[%s995] sm:$0xff] %vm389, %v1730
  %v1733 = vld [vmem:[%s997] sm:$0xff]
  %v1734 = vpack.c.bf16 %v1727, %v1727
  %1736 = vrot.lane.b32.xlu0 %v1734, 32
  %v1737 = vpop.permute.xlu0 %1736
  %v1739 = vsel %vm389, %v1737, 0
  %1741 = vmatprep.subr.bf16.mxu0 0
  %1742 = vmatpush1.bf16.msra.mxu0 %v1287
  %1743 = vmatprep.subr.bf16.mxu0 0
  %1744 = vmatpush1.bf16.msra.mxu0 %v1288
  %1745 = vmatprep.subr.bf16.mxu0 0
  %1746 = vmatpush1.bf16.msra.mxu0 0
  %1747 = vmatprep.subr.bf16.mxu0 0
  %1748 = vmatpush1.bf16.msra.mxu0 0
  %1749 = vmatprep.subr.bf16.mxu0 0
  %1750 = vmatpush1.bf16.msra.mxu0 0
  %1751 = vmatprep.subr.bf16.mxu0 0
  %1752 = vmatpush1.bf16.msra.mxu0 0
  %1753 = vmatprep.subr.bf16.mxu0 0
  %1754 = vmatpush1.bf16.msra.mxu0 0
  %1755 = vmatprep.subr.bf16.mxu0 0
  %1756 = vmatpush1.bf16.msra.mxu0 0
  %1757 = vmatprep.subr.bf16.mxu0 0
  %1758 = vmatpush1.bf16.msra.mxu0 0
  %1759 = vmatprep.subr.bf16.mxu0 0
  %1760 = vmatpush1.bf16.msra.mxu0 0
  %1761 = vmatprep.subr.bf16.mxu0 0
  %1762 = vmatpush1.bf16.msra.mxu0 0
  %1763 = vmatprep.subr.bf16.mxu0 0
  %1764 = vmatpush1.bf16.msra.mxu0 0
  %1765 = vmatprep.subr.bf16.mxu0 0
  %1766 = vmatpush1.bf16.msra.mxu0 0
  %1767 = vmatprep.subr.bf16.mxu0 0
  %1768 = vmatpush1.bf16.msra.mxu0 0
  %1769 = vmatprep.subr.bf16.mxu0 0
  %1770 = vmatpush1.bf16.msra.mxu0 0
  %1771 = vmatprep.subr.bf16.mxu0 0
  %1772 = vmatpush1.bf16.msra.mxu0 0
  %1773 = vmatprep.mubr.bf16.mxu0 0
  %1774 = vmatmul.mubr.bf16.gmra.mrb[0].mxu0 %v1739
  %v1775 = vpop.f32.mrb[0].mxu0
  %v1776 = vadd.f32 0.0, %v1775
  %v1777 = vpop.f32.mrb[0].mxu0
  %v1778 = vpop.f32.mrb[0].mxu0
  %v1779 = vpop.f32.mrb[0].mxu0
  %1780 = vdwg.mxu0
  %v1781 = vadd.f32 %v1733, %v1776
  %v1782 = vmul.f32 %v403, %v1781
  %v1783 = vtanh.pop %v1782
  %v1784 = vmul.f32 %v403, %v1783
  %v1785 = vadd.f32 %v1784, %v404
  %v1786 = vmul.f32 %v1785, %v1721
  %1788 = vrot.lane.b32.xlu0 %v1785, 64
  %v1789 = vpop.permute.xlu0 %1788
  %v1791 = vmul.f32 %v1785, %v1789
  %1793 = vrot.lane.b32.xlu0 %v1791, 32
  %v1794 = vpop.permute.xlu0 %1793
  %v1796 = vadd.f32 %v1786, %v1794
  %v1797 = vtanh.pop %v1796
  %1799 = vrot.lane.b32.xlu0 %v1797, 64
  %v1800 = vpop.permute.xlu0 %1799
  %v1802 = vmul.f32 %v1785, %v1800
  %1804 = vrot.lane.b32.xlu0 %v1802, 32
  %v1805 = vpop.permute.xlu0 %1804
  %1807 = vst.msk [vmem:[%s1072] sm:$0xff] %vm389, %v1805
  %v1808 = vld [vmem:[%s1074] sm:$0xff]
  %v1809 = vpack.c.bf16 %v1802, %v1802
  %1811 = vrot.lane.b32.xlu0 %v1809, 32
  %v1812 = vpop.permute.xlu0 %1811
  %v1814 = vsel %vm389, %v1812, 0
  %1816 = vmatprep.subr.bf16.mxu0 0
  %1817 = vmatpush1.bf16.msra.mxu0 %v1287
  %1818 = vmatprep.subr.bf16.mxu0 0
  %1819 = vmatpush1.bf16.msra.mxu0 %v1288
  %1820 = vmatprep.subr.bf16.mxu0 0
  %1821 = vmatpush1.bf16.msra.mxu0 0
  %1822 = vmatprep.subr.bf16.mxu0 0
  %1823 = vmatpush1.bf16.msra.mxu0 0
  %1824 = vmatprep.subr.bf16.mxu0 0
  %1825 = vmatpush1.bf16.msra.mxu0 0
  %1826 = vmatprep.subr.bf16.mxu0 0
  %1827 = vmatpush1.bf16.msra.mxu0 0
  %1828 = vmatprep.subr.bf16.mxu0 0
  %1829 = vmatpush1.bf16.msra.mxu0 0
  %1830 = vmatprep.subr.bf16.mxu0 0
  %1831 = vmatpush1.bf16.msra.mxu0 0
  %1832 = vmatprep.subr.bf16.mxu0 0
  %1833 = vmatpush1.bf16.msra.mxu0 0
  %1834 = vmatprep.subr.bf16.mxu0 0
  %1835 = vmatpush1.bf16.msra.mxu0 0
  %1836 = vmatprep.subr.bf16.mxu0 0
  %1837 = vmatpush1.bf16.msra.mxu0 0
  %1838 = vmatprep.subr.bf16.mxu0 0
  %1839 = vmatpush1.bf16.msra.mxu0 0
  %1840 = vmatprep.subr.bf16.mxu0 0
  %1841 = vmatpush1.bf16.msra.mxu0 0
  %1842 = vmatprep.subr.bf16.mxu0 0
  %1843 = vmatpush1.bf16.msra.mxu0 0
  %1844 = vmatprep.subr.bf16.mxu0 0
  %1845 = vmatpush1.bf16.msra.mxu0 0
  %1846 = vmatprep.subr.bf16.mxu0 0
  %1847 = vmatpush1.bf16.msra.mxu0 0
  %1848 = vmatprep.mubr.bf16.mxu0 0
  %1849 = vmatmul.mubr.bf16.gmra.mrb[0].mxu0 %v1814
  %v1850 = vpop.f32.mrb[0].mxu0
  %v1851 = vadd.f32 0.0, %v1850
  %v1852 = vpop.f32.mrb[0].mxu0
  %v1853 = vpop.f32.mrb[0].mxu0
  %v1854 = vpop.f32.mrb[0].mxu0
  %1855 = vdwg.mxu0
  %v1856 = vadd.f32 %v1808, %v1851
  %v1857 = vmul.f32 %v403, %v1856
  %v1858 = vtanh.pop %v1857
  %v1859 = vmul.f32 %v403, %v1858
  %v1860 = vadd.f32 %v1859, %v404
  %v1861 = vmul.f32 %v1860, %v1796
  %1863 = vrot.lane.b32.xlu0 %v1860, 64
  %v1864 = vpop.permute.xlu0 %1863
  %v1866 = vmul.f32 %v1860, %v1864
  %1868 = vrot.lane.b32.xlu0 %v1866, 32
  %v1869 = vpop.permute.xlu0 %1868
  %v1871 = vadd.f32 %v1861, %v1869
  %v1872 = vtanh.pop %v1871
  %1874 = vrot.lane.b32.xlu0 %v1872, 64
  %v1875 = vpop.permute.xlu0 %1874
  %v1877 = vmul.f32 %v1860, %v1875
  %1879 = vrot.lane.b32.xlu0 %v1877, 32
  %v1880 = vpop.permute.xlu0 %1879
  %1882 = vst.msk [vmem:[%s1149] sm:$0xff] %vm389, %v1880
  %v1883 = vld [vmem:[#allocation2] sm:$0xff]
  %v1884 = vld [vmem:[#allocation2 + $0x8] sm:$0xff]
  %v1885 = vld [vmem:[#allocation2 + $0x10] sm:$0xff]
  %v1886 = vld [vmem:[#allocation2 + $0x18] sm:$0xff]
  %v1887 = vld [vmem:[#allocation2 + $0x20] sm:$0xff]
  %v1888 = vld [vmem:[#allocation2 + $0x28] sm:$0xff]
  %v1889 = vld [vmem:[#allocation2 + $0x30] sm:$0xff]
  %v1890 = vld [vmem:[#allocation2 + $0x38] sm:$0xff]
  %v1891 = vpack.c.bf16 %v1884, %v1883
  %v1892 = vpack.c.bf16 %v1886, %v1885
  %v1893 = vpack.c.bf16 %v1888, %v1887
  %v1894 = vpack.c.bf16 %v1890, %v1889
  %s1895 = scalar_lea.vmem %s6, 32
  %v1896 = vld [vmem:[%s1895] sm:$0xf]
  %v1897 = vld [vmem:[%s1895 + $0x4] sm:$0xf]
  %v1898 = vld [vmem:[%s1895 + $0x8] sm:$0xf]
  %v1899 = vld [vmem:[%s1895 + $0xc] sm:$0xf]
  %s1900 = scalar_lea.vmem %s8, 2
  %v1901 = vld [vmem:[%s1900] sm:$0x1]
  %v1903 = vlaneseq
  %v1904 = vshrl.u32 %v1903, 7
  %v1905 = vsub.s32 0, %v1904
  %v1906 = vrot.slane %v1901, %v1905
  %v1912 = vunpack.c.l.b16 %v1896
  %v1913 = vunpack.c.l.b16 %v1897
  %v1914 = vunpack.c.l.b16 %v1898
  %v1915 = vunpack.c.l.b16 %v1899
  %v1916 = vpack.c.b16 %v1913, %v1912
  %v1917 = vpack.c.b16 %v1915, %v1914
  %v1921 = vsel %vm389, %v1891, 0
  %v1924 = vsel %vm389, %v1892, 0
  %v1927 = vsel %vm389, %v1893, 0
  %v1930 = vsel %vm389, %v1894, 0
  %1932 = vmatprep.subr.bf16.mxu0 0
  %1933 = vmatpush1.bf16.msra.mxu0 %v1916
  %1934 = vmatprep.subr.bf16.mxu0 0
  %1935 = vmatpush1.bf16.msra.mxu0 %v1917
  %1936 = vmatprep.subr.bf16.mxu0 0
  %1937 = vmatpush1.bf16.msra.mxu0 0
  %1938 = vmatprep.subr.bf16.mxu0 0
  %1939 = vmatpush1.bf16.msra.mxu0 0
  %1940 = vmatprep.subr.bf16.mxu0 0
  %1941 = vmatpush1.bf16.msra.mxu0 0
  %1942 = vmatprep.subr.bf16.mxu0 0
  %1943 = vmatpush1.bf16.msra.mxu0 0
  %1944 = vmatprep.subr.bf16.mxu0 0
  %1945 = vmatpush1.bf16.msra.mxu0 0
  %1946 = vmatprep.subr.bf16.mxu0 0
  %1947 = vmatpush1.bf16.msra.mxu0 0
  %1948 = vmatprep.subr.bf16.mxu0 0
  %1949 = vmatpush1.bf16.msra.mxu0 0
  %1950 = vmatprep.subr.bf16.mxu0 0
  %1951 = vmatpush1.bf16.msra.mxu0 0
  %1952 = vmatprep.subr.bf16.mxu0 0
  %1953 = vmatpush1.bf16.msra.mxu0 0
  %1954 = vmatprep.subr.bf16.mxu0 0
  %1955 = vmatpush1.bf16.msra.mxu0 0
  %1956 = vmatprep.subr.bf16.mxu0 0
  %1957 = vmatpush1.bf16.msra.mxu0 0
  %1958 = vmatprep.subr.bf16.mxu0 0
  %1959 = vmatpush1.bf16.msra.mxu0 0
  %1960 = vmatprep.subr.bf16.mxu0 0
  %1961 = vmatpush1.bf16.msra.mxu0 0
  %1962 = vmatprep.subr.bf16.mxu0 0
  %1963 = vmatpush1.bf16.msra.mxu0 0
  %1964 = vmatprep.mubr.bf16.mxu0 0
  %1965 = vmatmul.mubr.bf16.gmra.mrb[0].mxu0 %v1921
  %v1966 = vpop.f32.mrb[0].mxu0
  %v1967 = vadd.f32 %v1906, %v1966
  %v1968 = vpop.f32.mrb[0].mxu0
  %v1969 = vpop.f32.mrb[0].mxu0
  %v1970 = vadd.f32 %v1906, %v1969
  %v1971 = vpop.f32.mrb[0].mxu0
  %1972 = vmatprep.mubr.bf16.mxu0 0
  %1973 = vmatmul.mubr.bf16.gmra.mrb[0].mxu0 %v1924
  %v1974 = vpop.f32.mrb[0].mxu0
  %v1975 = vadd.f32 %v1906, %v1974
  %v1976 = vpop.f32.mrb[0].mxu0
  %v1977 = vpop.f32.mrb[0].mxu0
  %v1978 = vadd.f32 %v1906, %v1977
  %v1979 = vpop.f32.mrb[0].mxu0
  %1980 = vmatprep.mubr.bf16.mxu0 0
  %1981 = vmatmul.mubr.bf16.gmra.mrb[0].mxu0 %v1927
  %v1982 = vpop.f32.mrb[0].mxu0
  %v1983 = vadd.f32 %v1906, %v1982
  %v1984 = vpop.f32.mrb[0].mxu0
  %v1985 = vpop.f32.mrb[0].mxu0
  %v1986 = vadd.f32 %v1906, %v1985
  %v1987 = vpop.f32.mrb[0].mxu0
  %1988 = vmatprep.mubr.bf16.mxu0 0
  %1989 = vmatmul.mubr.bf16.gmra.mrb[0].mxu0 %v1930
  %v1990 = vpop.f32.mrb[0].mxu0
  %v1991 = vadd.f32 %v1906, %v1990
  %v1992 = vpop.f32.mrb[0].mxu0
  %v1993 = vpop.f32.mrb[0].mxu0
  %v1994 = vadd.f32 %v1906, %v1993
  %v1995 = vpop.f32.mrb[0].mxu0
  %1996 = vdwg.mxu0
  %1997 = vst [vmem:[#allocation3] sm:$0xff] %v1967
  %1998 = vst [vmem:[#allocation3 + $0x8] sm:$0xff] %v1970
  %1999 = vst [vmem:[#allocation3 + $0x10] sm:$0xff] %v1975
  %2000 = vst [vmem:[#allocation3 + $0x18] sm:$0xff] %v1978
  %2001 = vst [vmem:[#allocation3 + $0x20] sm:$0xff] %v1983
  %2002 = vst [vmem:[#allocation3 + $0x28] sm:$0xff] %v1986
  %2003 = vst [vmem:[#allocation3 + $0x30] sm:$0xff] %v1991
  %2004 = vst [vmem:[#allocation3 + $0x38] sm:$0xff] %v1994
  %s2005 = scalar_lea.vmem %s7, 32
  %v2006 = vld [vmem:[%s2005] sm:$0xf]
  %v2007 = vld [vmem:[%s2005 + $0x4] sm:$0xf]
  %v2008 = vld [vmem:[%s2005 + $0x8] sm:$0xf]
  %v2009 = vld [vmem:[%s2005 + $0xc] sm:$0xf]
  %v2010 = vld [vmem:[#allocation3] sm:$0xff]
  %v2015 = vunpack.c.l.b16 %v2006
  %v2016 = vunpack.c.l.b16 %v2007
  %v2017 = vunpack.c.l.b16 %v2008
  %v2018 = vunpack.c.l.b16 %v2009
  %v2019 = vpack.c.b16 %v2016, %v2015
  %v2020 = vpack.c.b16 %v2018, %v2017
  %2023 = vmatprep.subr.bf16.mxu0 0
  %2024 = vmatpush1.bf16.msra.mxu0 %v2019
  %2025 = vmatprep.subr.bf16.mxu0 0
  %2026 = vmatpush1.bf16.msra.mxu0 %v2020
  %2027 = vmatprep.subr.bf16.mxu0 0
  %2028 = vmatpush1.bf16.msra.mxu0 0
  %2029 = vmatprep.subr.bf16.mxu0 0
  %2030 = vmatpush1.bf16.msra.mxu0 0
  %2031 = vmatprep.subr.bf16.mxu0 0
  %2032 = vmatpush1.bf16.msra.mxu0 0
  %2033 = vmatprep.subr.bf16.mxu0 0
  %2034 = vmatpush1.bf16.msra.mxu0 0
  %2035 = vmatprep.subr.bf16.mxu0 0
  %2036 = vmatpush1.bf16.msra.mxu0 0
  %2037 = vmatprep.subr.bf16.mxu0 0
  %2038 = vmatpush1.bf16.msra.mxu0 0
  %2039 = vmatprep.subr.bf16.mxu0 0
  %2040 = vmatpush1.bf16.msra.mxu0 0
  %2041 = vmatprep.subr.bf16.mxu0 0
  %2042 = vmatpush1.bf16.msra.mxu0 0
  %2043 = vmatprep.subr.bf16.mxu0 0
  %2044 = vmatpush1.bf16.msra.mxu0 0
  %2045 = vmatprep.subr.bf16.mxu0 0
  %2046 = vmatpush1.bf16.msra.mxu0 0
  %2047 = vmatprep.subr.bf16.mxu0 0
  %2048 = vmatpush1.bf16.msra.mxu0 0
  %2049 = vmatprep.subr.bf16.mxu0 0
  %2050 = vmatpush1.bf16.msra.mxu0 0
  %2051 = vmatprep.subr.bf16.mxu0 0
  %2052 = vmatpush1.bf16.msra.mxu0 0
  %2053 = vmatprep.subr.bf16.mxu0 0
  %2054 = vmatpush1.bf16.msra.mxu0 0
  %2055 = vmatprep.mubr.bf16.mxu0 0
  %2056 = vmatmul.mubr.bf16.gmra.mrb[0].mxu0 %v543
  %v2057 = vpop.f32.mrb[0].mxu0
  %v2058 = vadd.f32 0.0, %v2057
  %v2059 = vpop.f32.mrb[0].mxu0
  %v2060 = vpop.f32.mrb[0].mxu0
  %v2061 = vpop.f32.mrb[0].mxu0
  %2062 = vdwg.mxu0
  %v2063 = vadd.f32 %v2010, %v2058
  %v2064 = vmul.f32 %v403, %v2063
  %v2065 = vtanh.pop %v2064
  %v2066 = vmul.f32 %v403, %v2065
  %v2067 = vadd.f32 %v2066, %v404
  %v2068 = vmul.f32 %v2067, 0.0
  %2070 = vrot.lane.b32.xlu0 %v2067, 64
  %v2071 = vpop.permute.xlu0 %2070
  %v2073 = vmul.f32 %v2067, %v2071
  %2075 = vrot.lane.b32.xlu0 %v2073, 32
  %v2076 = vpop.permute.xlu0 %2075
  %v2078 = vadd.f32 %v2068, %v2076
  %v2079 = vtanh.pop %v2078
  %2081 = vrot.lane.b32.xlu0 %v2079, 64
  %v2082 = vpop.permute.xlu0 %2081
  %v2084 = vmul.f32 %v2067, %v2082
  %v2085 = vld [vmem:[%s612] sm:$0xff]
  %v2086 = vpack.c.bf16 %v2084, %v2084
  %2088 = vrot.lane.b32.xlu0 %v2086, 32
  %v2089 = vpop.permute.xlu0 %2088
  %v2091 = vsel %vm389, %v2089, 0
  %2093 = vmatprep.subr.bf16.mxu0 0
  %2094 = vmatpush1.bf16.msra.mxu0 %v2019
  %2095 = vmatprep.subr.bf16.mxu0 0
  %2096 = vmatpush1.bf16.msra.mxu0 %v2020
  %2097 = vmatprep.subr.bf16.mxu0 0
  %2098 = vmatpush1.bf16.msra.mxu0 0
  %2099 = vmatprep.subr.bf16.mxu0 0
  %2100 = vmatpush1.bf16.msra.mxu0 0
  %2101 = vmatprep.subr.bf16.mxu0 0
  %2102 = vmatpush1.bf16.msra.mxu0 0
  %2103 = vmatprep.subr.bf16.mxu0 0
  %2104 = vmatpush1.bf16.msra.mxu0 0
  %2105 = vmatprep.subr.bf16.mxu0 0
  %2106 = vmatpush1.bf16.msra.mxu0 0
  %2107 = vmatprep.subr.bf16.mxu0 0
  %2108 = vmatpush1.bf16.msra.mxu0 0
  %2109 = vmatprep.subr.bf16.mxu0 0
  %2110 = vmatpush1.bf16.msra.mxu0 0
  %2111 = vmatprep.subr.bf16.mxu0 0
  %2112 = vmatpush1.bf16.msra.mxu0 0
  %2113 = vmatprep.subr.bf16.mxu0 0
  %2114 = vmatpush1.bf16.msra.mxu0 0
  %2115 = vmatprep.subr.bf16.mxu0 0
  %2116 = vmatpush1.bf16.msra.mxu0 0
  %2117 = vmatprep.subr.bf16.mxu0 0
  %2118 = vmatpush1.bf16.msra.mxu0 0
  %2119 = vmatprep.subr.bf16.mxu0 0
  %2120 = vmatpush1.bf16.msra.mxu0 0
  %2121 = vmatprep.subr.bf16.mxu0 0
  %2122 = vmatpush1.bf16.msra.mxu0 0
  %2123 = vmatprep.subr.bf16.mxu0 0
  %2124 = vmatpush1.bf16.msra.mxu0 0
  %2125 = vmatprep.mubr.bf16.mxu0 0
  %2126 = vmatmul.mubr.bf16.gmra.mrb[0].mxu0 %v2091
  %v2127 = vpop.f32.mrb[0].mxu0
  %v2128 = vadd.f32 0.0, %v2127
  %v2129 = vpop.f32.mrb[0].mxu0
  %v2130 = vpop.f32.mrb[0].mxu0
  %v2131 = vpop.f32.mrb[0].mxu0
  %2132 = vdwg.mxu0
  %v2133 = vadd.f32 %v2085, %v2128
  %v2134 = vmul.f32 %v403, %v2133
  %v2135 = vtanh.pop %v2134
  %v2136 = vmul.f32 %v403, %v2135
  %v2137 = vadd.f32 %v2136, %v404
  %v2138 = vmul.f32 %v2137, %v2078
  %2140 = vrot.lane.b32.xlu0 %v2137, 64
  %v2141 = vpop.permute.xlu0 %2140
  %v2143 = vmul.f32 %v2137, %v2141
  %2145 = vrot.lane.b32.xlu0 %v2143, 32
  %v2146 = vpop.permute.xlu0 %2145
  %v2148 = vadd.f32 %v2138, %v2146
  %v2149 = vtanh.pop %v2148
  %2151 = vrot.lane.b32.xlu0 %v2149, 64
  %v2152 = vpop.permute.xlu0 %2151
  %v2154 = vmul.f32 %v2137, %v2152
  %v2155 = vld [vmem:[%s689] sm:$0xff]
  %v2156 = vpack.c.bf16 %v2154, %v2154
  %2158 = vrot.lane.b32.xlu0 %v2156, 32
  %v2159 = vpop.permute.xlu0 %2158
  %v2161 = vsel %vm389, %v2159, 0
  %2163 = vmatprep.subr.bf16.mxu0 0
  %2164 = vmatpush1.bf16.msra.mxu0 %v2019
  %2165 = vmatprep.subr.bf16.mxu0 0
  %2166 = vmatpush1.bf16.msra.mxu0 %v2020
  %2167 = vmatprep.subr.bf16.mxu0 0
  %2168 = vmatpush1.bf16.msra.mxu0 0
  %2169 = vmatprep.subr.bf16.mxu0 0
  %2170 = vmatpush1.bf16.msra.mxu0 0
  %2171 = vmatprep.subr.bf16.mxu0 0
  %2172 = vmatpush1.bf16.msra.mxu0 0
  %2173 = vmatprep.subr.bf16.mxu0 0
  %2174 = vmatpush1.bf16.msra.mxu0 0
  %2175 = vmatprep.subr.bf16.mxu0 0
  %2176 = vmatpush1.bf16.msra.mxu0 0
  %2177 = vmatprep.subr.bf16.mxu0 0
  %2178 = vmatpush1.bf16.msra.mxu0 0
  %2179 = vmatprep.subr.bf16.mxu0 0
  %2180 = vmatpush1.bf16.msra.mxu0 0
  %2181 = vmatprep.subr.bf16.mxu0 0
  %2182 = vmatpush1.bf16.msra.mxu0 0
  %2183 = vmatprep.subr.bf16.mxu0 0
  %2184 = vmatpush1.bf16.msra.mxu0 0
  %2185 = vmatprep.subr.bf16.mxu0 0
  %2186 = vmatpush1.bf16.msra.mxu0 0
  %2187 = vmatprep.subr.bf16.mxu0 0
  %2188 = vmatpush1.bf16.msra.mxu0 0
  %2189 = vmatprep.subr.bf16.mxu0 0
  %2190 = vmatpush1.bf16.msra.mxu0 0
  %2191 = vmatprep.subr.bf16.mxu0 0
  %2192 = vmatpush1.bf16.msra.mxu0 0
  %2193 = vmatprep.subr.bf16.mxu0 0
  %2194 = vmatpush1.bf16.msra.mxu0 0
  %2195 = vmatprep.mubr.bf16.mxu0 0
  %2196 = vmatmul.mubr.bf16.gmra.mrb[0].mxu0 %v2161
  %v2197 = vpop.f32.mrb[0].mxu0
  %v2198 = vadd.f32 0.0, %v2197
  %v2199 = vpop.f32.mrb[0].mxu0
  %v2200 = vpop.f32.mrb[0].mxu0
  %v2201 = vpop.f32.mrb[0].mxu0
  %2202 = vdwg.mxu0
  %v2203 = vadd.f32 %v2155, %v2198
  %v2204 = vmul.f32 %v403, %v2203
  %v2205 = vtanh.pop %v2204
  %v2206 = vmul.f32 %v403, %v2205
  %v2207 = vadd.f32 %v2206, %v404
  %v2208 = vmul.f32 %v2207, %v2148
  %2210 = vrot.lane.b32.xlu0 %v2207, 64
  %v2211 = vpop.permute.xlu0 %2210
  %v2213 = vmul.f32 %v2207, %v2211
  %2215 = vrot.lane.b32.xlu0 %v2213, 32
  %v2216 = vpop.permute.xlu0 %2215
  %v2218 = vadd.f32 %v2208, %v2216
  %v2219 = vtanh.pop %v2218
  %2221 = vrot.lane.b32.xlu0 %v2219, 64
  %v2222 = vpop.permute.xlu0 %2221
  %v2224 = vmul.f32 %v2207, %v2222
  %v2225 = vld [vmem:[%s766] sm:$0xff]
  %v2226 = vpack.c.bf16 %v2224, %v2224
  %2228 = vrot.lane.b32.xlu0 %v2226, 32
  %v2229 = vpop.permute.xlu0 %2228
  %v2231 = vsel %vm389, %v2229, 0
  %2233 = vmatprep.subr.bf16.mxu0 0
  %2234 = vmatpush1.bf16.msra.mxu0 %v2019
  %2235 = vmatprep.subr.bf16.mxu0 0
  %2236 = vmatpush1.bf16.msra.mxu0 %v2020
  %2237 = vmatprep.subr.bf16.mxu0 0
  %2238 = vmatpush1.bf16.msra.mxu0 0
  %2239 = vmatprep.subr.bf16.mxu0 0
  %2240 = vmatpush1.bf16.msra.mxu0 0
  %2241 = vmatprep.subr.bf16.mxu0 0
  %2242 = vmatpush1.bf16.msra.mxu0 0
  %2243 = vmatprep.subr.bf16.mxu0 0
  %2244 = vmatpush1.bf16.msra.mxu0 0
  %2245 = vmatprep.subr.bf16.mxu0 0
  %2246 = vmatpush1.bf16.msra.mxu0 0
  %2247 = vmatprep.subr.bf16.mxu0 0
  %2248 = vmatpush1.bf16.msra.mxu0 0
  %2249 = vmatprep.subr.bf16.mxu0 0
  %2250 = vmatpush1.bf16.msra.mxu0 0
  %2251 = vmatprep.subr.bf16.mxu0 0
  %2252 = vmatpush1.bf16.msra.mxu0 0
  %2253 = vmatprep.subr.bf16.mxu0 0
  %2254 = vmatpush1.bf16.msra.mxu0 0
  %2255 = vmatprep.subr.bf16.mxu0 0
  %2256 = vmatpush1.bf16.msra.mxu0 0
  %2257 = vmatprep.subr.bf16.mxu0 0
  %2258 = vmatpush1.bf16.msra.mxu0 0
  %2259 = vmatprep.subr.bf16.mxu0 0
  %2260 = vmatpush1.bf16.msra.mxu0 0
  %2261 = vmatprep.subr.bf16.mxu0 0
  %2262 = vmatpush1.bf16.msra.mxu0 0
  %2263 = vmatprep.subr.bf16.mxu0 0
  %2264 = vmatpush1.bf16.msra.mxu0 0
  %2265 = vmatprep.mubr.bf16.mxu0 0
  %2266 = vmatmul.mubr.bf16.gmra.mrb[0].mxu0 %v2231
  %v2267 = vpop.f32.mrb[0].mxu0
  %v2268 = vadd.f32 0.0, %v2267
  %v2269 = vpop.f32.mrb[0].mxu0
  %v2270 = vpop.f32.mrb[0].mxu0
  %v2271 = vpop.f32.mrb[0].mxu0
  %2272 = vdwg.mxu0
  %v2273 = vadd.f32 %v2225, %v2268
  %v2274 = vmul.f32 %v403, %v2273
  %v2275 = vtanh.pop %v2274
  %v2276 = vmul.f32 %v403, %v2275
  %v2277 = vadd.f32 %v2276, %v404
  %v2278 = vmul.f32 %v2277, %v2218
  %2280 = vrot.lane.b32.xlu0 %v2277, 64
  %v2281 = vpop.permute.xlu0 %2280
  %v2283 = vmul.f32 %v2277, %v2281
  %2285 = vrot.lane.b32.xlu0 %v2283, 32
  %v2286 = vpop.permute.xlu0 %2285
  %v2288 = vadd.f32 %v2278, %v2286
  %v2289 = vtanh.pop %v2288
  %2291 = vrot.lane.b32.xlu0 %v2289, 64
  %v2292 = vpop.permute.xlu0 %2291
  %v2294 = vmul.f32 %v2277, %v2292
  %v2295 = vld [vmem:[%s843] sm:$0xff]
  %v2296 = vpack.c.bf16 %v2294, %v2294
  %2298 = vrot.lane.b32.xlu0 %v2296, 32
  %v2299 = vpop.permute.xlu0 %2298
  %v2301 = vsel %vm389, %v2299, 0
  %2303 = vmatprep.subr.bf16.mxu0 0
  %2304 = vmatpush1.bf16.msra.mxu0 %v2019
  %2305 = vmatprep.subr.bf16.mxu0 0
  %2306 = vmatpush1.bf16.msra.mxu0 %v2020
  %2307 = vmatprep.subr.bf16.mxu0 0
  %2308 = vmatpush1.bf16.msra.mxu0 0
  %2309 = vmatprep.subr.bf16.mxu0 0
  %2310 = vmatpush1.bf16.msra.mxu0 0
  %2311 = vmatprep.subr.bf16.mxu0 0
  %2312 = vmatpush1.bf16.msra.mxu0 0
  %2313 = vmatprep.subr.bf16.mxu0 0
  %2314 = vmatpush1.bf16.msra.mxu0 0
  %2315 = vmatprep.subr.bf16.mxu0 0
  %2316 = vmatpush1.bf16.msra.mxu0 0
  %2317 = vmatprep.subr.bf16.mxu0 0
  %2318 = vmatpush1.bf16.msra.mxu0 0
  %2319 = vmatprep.subr.bf16.mxu0 0
  %2320 = vmatpush1.bf16.msra.mxu0 0
  %2321 = vmatprep.subr.bf16.mxu0 0
  %2322 = vmatpush1.bf16.msra.mxu0 0
  %2323 = vmatprep.subr.bf16.mxu0 0
  %2324 = vmatpush1.bf16.msra.mxu0 0
  %2325 = vmatprep.subr.bf16.mxu0 0
  %2326 = vmatpush1.bf16.msra.mxu0 0
  %2327 = vmatprep.subr.bf16.mxu0 0
  %2328 = vmatpush1.bf16.msra.mxu0 0
  %2329 = vmatprep.subr.bf16.mxu0 0
  %2330 = vmatpush1.bf16.msra.mxu0 0
  %2331 = vmatprep.subr.bf16.mxu0 0
  %2332 = vmatpush1.bf16.msra.mxu0 0
  %2333 = vmatprep.subr.bf16.mxu0 0
  %2334 = vmatpush1.bf16.msra.mxu0 0
  %2335 = vmatprep.mubr.bf16.mxu0 0
  %2336 = vmatmul.mubr.bf16.gmra.mrb[0].mxu0 %v2301
  %v2337 = vpop.f32.mrb[0].mxu0
  %v2338 = vadd.f32 0.0, %v2337
  %v2339 = vpop.f32.mrb[0].mxu0
  %v2340 = vpop.f32.mrb[0].mxu0
  %v2341 = vpop.f32.mrb[0].mxu0
  %2342 = vdwg.mxu0
  %v2343 = vadd.f32 %v2295, %v2338
  %v2344 = vmul.f32 %v403, %v2343
  %v2345 = vtanh.pop %v2344
  %v2346 = vmul.f32 %v403, %v2345
  %v2347 = vadd.f32 %v2346, %v404
  %v2348 = vmul.f32 %v2347, %v2288
  %2350 = vrot.lane.b32.xlu0 %v2347, 64
  %v2351 = vpop.permute.xlu0 %2350
  %v2353 = vmul.f32 %v2347, %v2351
  %2355 = vrot.lane.b32.xlu0 %v2353, 32
  %v2356 = vpop.permute.xlu0 %2355
  %v2358 = vadd.f32 %v2348, %v2356
  %v2359 = vtanh.pop %v2358
  %2361 = vrot.lane.b32.xlu0 %v2359, 64
  %v2362 = vpop.permute.xlu0 %2361
  %v2364 = vmul.f32 %v2347, %v2362
  %v2365 = vld [vmem:[%s920] sm:$0xff]
  %v2366 = vpack.c.bf16 %v2364, %v2364
  %2368 = vrot.lane.b32.xlu0 %v2366, 32
  %v2369 = vpop.permute.xlu0 %2368
  %v2371 = vsel %vm389, %v2369, 0
  %2373 = vmatprep.subr.bf16.mxu0 0
  %2374 = vmatpush1.bf16.msra.mxu0 %v2019
  %2375 = vmatprep.subr.bf16.mxu0 0
  %2376 = vmatpush1.bf16.msra.mxu0 %v2020
  %2377 = vmatprep.subr.bf16.mxu0 0
  %2378 = vmatpush1.bf16.msra.mxu0 0
  %2379 = vmatprep.subr.bf16.mxu0 0
  %2380 = vmatpush1.bf16.msra.mxu0 0
  %2381 = vmatprep.subr.bf16.mxu0 0
  %2382 = vmatpush1.bf16.msra.mxu0 0
  %2383 = vmatprep.subr.bf16.mxu0 0
  %2384 = vmatpush1.bf16.msra.mxu0 0
  %2385 = vmatprep.subr.bf16.mxu0 0
  %2386 = vmatpush1.bf16.msra.mxu0 0
  %2387 = vmatprep.subr.bf16.mxu0 0
  %2388 = vmatpush1.bf16.msra.mxu0 0
  %2389 = vmatprep.subr.bf16.mxu0 0
  %2390 = vmatpush1.bf16.msra.mxu0 0
  %2391 = vmatprep.subr.bf16.mxu0 0
  %2392 = vmatpush1.bf16.msra.mxu0 0
  %2393 = vmatprep.subr.bf16.mxu0 0
  %2394 = vmatpush1.bf16.msra.mxu0 0
  %2395 = vmatprep.subr.bf16.mxu0 0
  %2396 = vmatpush1.bf16.msra.mxu0 0
  %2397 = vmatprep.subr.bf16.mxu0 0
  %2398 = vmatpush1.bf16.msra.mxu0 0
  %2399 = vmatprep.subr.bf16.mxu0 0
  %2400 = vmatpush1.bf16.msra.mxu0 0
  %2401 = vmatprep.subr.bf16.mxu0 0
  %2402 = vmatpush1.bf16.msra.mxu0 0
  %2403 = vmatprep.subr.bf16.mxu0 0
  %2404 = vmatpush1.bf16.msra.mxu0 0
  %2405 = vmatprep.mubr.bf16.mxu0 0
  %2406 = vmatmul.mubr.bf16.gmra.mrb[0].mxu0 %v2371
  %v2407 = vpop.f32.mrb[0].mxu0
  %v2408 = vadd.f32 0.0, %v2407
  %v2409 = vpop.f32.mrb[0].mxu0
  %v2410 = vpop.f32.mrb[0].mxu0
  %v2411 = vpop.f32.mrb[0].mxu0
  %2412 = vdwg.mxu0
  %v2413 = vadd.f32 %v2365, %v2408
  %v2414 = vmul.f32 %v403, %v2413
  %v2415 = vtanh.pop %v2414
  %v2416 = vmul.f32 %v403, %v2415
  %v2417 = vadd.f32 %v2416, %v404
  %v2418 = vmul.f32 %v2417, %v2358
  %2420 = vrot.lane.b32.xlu0 %v2417, 64
  %v2421 = vpop.permute.xlu0 %2420
  %v2423 = vmul.f32 %v2417, %v2421
  %2425 = vrot.lane.b32.xlu0 %v2423, 32
  %v2426 = vpop.permute.xlu0 %2425
  %v2428 = vadd.f32 %v2418, %v2426
  %v2429 = vtanh.pop %v2428
  %2431 = vrot.lane.b32.xlu0 %v2429, 64
  %v2432 = vpop.permute.xlu0 %2431
  %v2434 = vmul.f32 %v2417, %v2432
  %v2435 = vld [vmem:[%s997] sm:$0xff]
  %v2436 = vpack.c.bf16 %v2434, %v2434
  %2438 = vrot.lane.b32.xlu0 %v2436, 32
  %v2439 = vpop.permute.xlu0 %2438
  %v2441 = vsel %vm389, %v2439, 0
  %2443 = vmatprep.subr.bf16.mxu0 0
  %2444 = vmatpush1.bf16.msra.mxu0 %v2019
  %2445 = vmatprep.subr.bf16.mxu0 0
  %2446 = vmatpush1.bf16.msra.mxu0 %v2020
  %2447 = vmatprep.subr.bf16.mxu0 0
  %2448 = vmatpush1.bf16.msra.mxu0 0
  %2449 = vmatprep.subr.bf16.mxu0 0
  %2450 = vmatpush1.bf16.msra.mxu0 0
  %2451 = vmatprep.subr.bf16.mxu0 0
  %2452 = vmatpush1.bf16.msra.mxu0 0
  %2453 = vmatprep.subr.bf16.mxu0 0
  %2454 = vmatpush1.bf16.msra.mxu0 0
  %2455 = vmatprep.subr.bf16.mxu0 0
  %2456 = vmatpush1.bf16.msra.mxu0 0
  %2457 = vmatprep.subr.bf16.mxu0 0
  %2458 = vmatpush1.bf16.msra.mxu0 0
  %2459 = vmatprep.subr.bf16.mxu0 0
  %2460 = vmatpush1.bf16.msra.mxu0 0
  %2461 = vmatprep.subr.bf16.mxu0 0
  %2462 = vmatpush1.bf16.msra.mxu0 0
  %2463 = vmatprep.subr.bf16.mxu0 0
  %2464 = vmatpush1.bf16.msra.mxu0 0
  %2465 = vmatprep.subr.bf16.mxu0 0
  %2466 = vmatpush1.bf16.msra.mxu0 0
  %2467 = vmatprep.subr.bf16.mxu0 0
  %2468 = vmatpush1.bf16.msra.mxu0 0
  %2469 = vmatprep.subr.bf16.mxu0 0
  %2470 = vmatpush1.bf16.msra.mxu0 0
  %2471 = vmatprep.subr.bf16.mxu0 0
  %2472 = vmatpush1.bf16.msra.mxu0 0
  %2473 = vmatprep.subr.bf16.mxu0 0
  %2474 = vmatpush1.bf16.msra.mxu0 0
  %2475 = vmatprep.mubr.bf16.mxu0 0
  %2476 = vmatmul.mubr.bf16.gmra.mrb[0].mxu0 %v2441
  %v2477 = vpop.f32.mrb[0].mxu0
  %v2478 = vadd.f32 0.0, %v2477
  %v2479 = vpop.f32.mrb[0].mxu0
  %v2480 = vpop.f32.mrb[0].mxu0
  %v2481 = vpop.f32.mrb[0].mxu0
  %2482 = vdwg.mxu0
  %v2483 = vadd.f32 %v2435, %v2478
  %v2484 = vmul.f32 %v403, %v2483
  %v2485 = vtanh.pop %v2484
  %v2486 = vmul.f32 %v403, %v2485
  %v2487 = vadd.f32 %v2486, %v404
  %v2488 = vmul.f32 %v2487, %v2428
  %2490 = vrot.lane.b32.xlu0 %v2487, 64
  %v2491 = vpop.permute.xlu0 %2490
  %v2493 = vmul.f32 %v2487, %v2491
  %2495 = vrot.lane.b32.xlu0 %v2493, 32
  %v2496 = vpop.permute.xlu0 %2495
  %v2498 = vadd.f32 %v2488, %v2496
  %v2499 = vtanh.pop %v2498
  %2501 = vrot.lane.b32.xlu0 %v2499, 64
  %v2502 = vpop.permute.xlu0 %2501
  %v2504 = vmul.f32 %v2487, %v2502
  %v2505 = vld [vmem:[%s1074] sm:$0xff]
  %v2506 = vpack.c.bf16 %v2504, %v2504
  %2508 = vrot.lane.b32.xlu0 %v2506, 32
  %v2509 = vpop.permute.xlu0 %2508
  %v2511 = vsel %vm389, %v2509, 0
  %2513 = vmatprep.subr.bf16.mxu0 0
  %2514 = vmatpush1.bf16.msra.mxu0 %v2019
  %2515 = vmatprep.subr.bf16.mxu0 0
  %2516 = vmatpush1.bf16.msra.mxu0 %v2020
  %2517 = vmatprep.subr.bf16.mxu0 0
  %2518 = vmatpush1.bf16.msra.mxu0 0
  %2519 = vmatprep.subr.bf16.mxu0 0
  %2520 = vmatpush1.bf16.msra.mxu0 0
  %2521 = vmatprep.subr.bf16.mxu0 0
  %2522 = vmatpush1.bf16.msra.mxu0 0
  %2523 = vmatprep.subr.bf16.mxu0 0
  %2524 = vmatpush1.bf16.msra.mxu0 0
  %2525 = vmatprep.subr.bf16.mxu0 0
  %2526 = vmatpush1.bf16.msra.mxu0 0
  %2527 = vmatprep.subr.bf16.mxu0 0
  %2528 = vmatpush1.bf16.msra.mxu0 0
  %2529 = vmatprep.subr.bf16.mxu0 0
  %2530 = vmatpush1.bf16.msra.mxu0 0
  %2531 = vmatprep.subr.bf16.mxu0 0
  %2532 = vmatpush1.bf16.msra.mxu0 0
  %2533 = vmatprep.subr.bf16.mxu0 0
  %2534 = vmatpush1.bf16.msra.mxu0 0
  %2535 = vmatprep.subr.bf16.mxu0 0
  %2536 = vmatpush1.bf16.msra.mxu0 0
  %2537 = vmatprep.subr.bf16.mxu0 0
  %2538 = vmatpush1.bf16.msra.mxu0 0
  %2539 = vmatprep.subr.bf16.mxu0 0
  %2540 = vmatpush1.bf16.msra.mxu0 0
  %2541 = vmatprep.subr.bf16.mxu0 0
  %2542 = vmatpush1.bf16.msra.mxu0 0
  %2543 = vmatprep.subr.bf16.mxu0 0
  %2544 = vmatpush1.bf16.msra.mxu0 0
  %2545 = vmatprep.mubr.bf16.mxu0 0
  %2546 = vmatmul.mubr.bf16.gmra.mrb[0].mxu0 %v2511
  %v2547 = vpop.f32.mrb[0].mxu0
  %v2548 = vadd.f32 0.0, %v2547
  %v2549 = vpop.f32.mrb[0].mxu0
  %v2550 = vpop.f32.mrb[0].mxu0
  %v2551 = vpop.f32.mrb[0].mxu0
  %2552 = vdwg.mxu0
  %v2553 = vadd.f32 %v2505, %v2548
  %v2554 = vmul.f32 %v403, %v2553
  %v2555 = vtanh.pop %v2554
  %v2556 = vmul.f32 %v403, %v2555
  %v2557 = vadd.f32 %v2556, %v404
  %v2558 = vmul.f32 %v2557, %v2498
  %2560 = vrot.lane.b32.xlu0 %v2557, 64
  %v2561 = vpop.permute.xlu0 %2560
  %v2563 = vmul.f32 %v2557, %v2561
  %2565 = vrot.lane.b32.xlu0 %v2563, 32
  %v2566 = vpop.permute.xlu0 %2565
  %v2568 = vadd.f32 %v2558, %v2566
  %v2569 = vtanh.pop %v2568
  %2571 = vrot.lane.b32.xlu0 %v2569, 64
  %v2572 = vpop.permute.xlu0 %2571
  %v2574 = vmul.f32 %v2557, %v2572
  %2576 = vrot.lane.b32.xlu0 %v2574, 32
  %v2577 = vpop.permute.xlu0 %2576
  %2579 = vst.msk [vmem:[%s11] sm:$0xff] %vm389, %v2577
  %v2580 = vld [vmem:[%s9] sm:$0xff]
  %v2581 = vld [vmem:[%s9 + $0x8] sm:$0xff]
  %v2582 = vld [vmem:[%s9 + $0x10] sm:$0xff]
  %v2583 = vld [vmem:[%s9 + $0x18] sm:$0xff]
  %v2584 = vld [vmem:[%s10] sm:$0x1]
  %v2586 = vlaneseq
  %v2587 = vshrl.u32 %v2586, 7
  %v2588 = vsub.s32 0, %v2587
  %v2589 = vrot.slane %v2584, %v2588
  %v2591 = vsel %vm389, %v2577, 0
  %2593 = vmatprep.subr.mxu0 0.0
  %2594 = vmatpush1.msra.mxu0 %v2580
  %2595 = vmatprep.subr.mxu0 0.0
  %2596 = vmatpush1.msra.mxu0 %v2581
  %2597 = vmatprep.subr.mxu0 0.0
  %2598 = vmatpush1.msra.mxu0 %v2582
  %2599 = vmatprep.subr.mxu0 0.0
  %2600 = vmatpush1.msra.mxu0 %v2583
  %2601 = vmatprep.subr.mxu0 0.0
  %2602 = vmatpush1.msra.mxu0 0.0
  %2603 = vmatprep.subr.mxu0 0.0
  %2604 = vmatpush1.msra.mxu0 0.0
  %2605 = vmatprep.subr.mxu0 0.0
  %2606 = vmatpush1.msra.mxu0 0.0
  %2607 = vmatprep.subr.mxu0 0.0
  %2608 = vmatpush1.msra.mxu0 0.0
  %2609 = vmatprep.subr.mxu0 0.0
  %2610 = vmatpush1.msra.mxu0 0.0
  %2611 = vmatprep.subr.mxu0 0.0
  %2612 = vmatpush1.msra.mxu0 0.0
  %2613 = vmatprep.subr.mxu0 0.0
  %2614 = vmatpush1.msra.mxu0 0.0
  %2615 = vmatprep.subr.mxu0 0.0
  %2616 = vmatpush1.msra.mxu0 0.0
  %2617 = vmatprep.subr.mxu0 0.0
  %2618 = vmatpush1.msra.mxu0 0.0
  %2619 = vmatprep.subr.mxu0 0.0
  %2620 = vmatpush1.msra.mxu0 0.0
  %2621 = vmatprep.subr.mxu0 0.0
  %2622 = vmatpush1.msra.mxu0 0.0
  %2623 = vmatprep.subr.mxu0 0.0
  %2624 = vmatpush1.msra.mxu0 0.0
  %2625 = vmatprep.subr.mxu0 0.0
  %2626 = vmatpush1.msra.mxu0 0.0
  %2627 = vmatprep.subr.mxu0 0.0
  %2628 = vmatpush1.msra.mxu0 0.0
  %2629 = vmatprep.subr.mxu0 0.0
  %2630 = vmatpush1.msra.mxu0 0.0
  %2631 = vmatprep.subr.mxu0 0.0
  %2632 = vmatpush1.msra.mxu0 0.0
  %2633 = vmatprep.subr.mxu0 0.0
  %2634 = vmatpush1.msra.mxu0 0.0
  %2635 = vmatprep.subr.mxu0 0.0
  %2636 = vmatpush1.msra.mxu0 0.0
  %2637 = vmatprep.subr.mxu0 0.0
  %2638 = vmatpush1.msra.mxu0 0.0
  %2639 = vmatprep.subr.mxu0 0.0
  %2640 = vmatpush1.msra.mxu0 0.0
  %2641 = vmatprep.subr.mxu0 0.0
  %2642 = vmatpush1.msra.mxu0 0.0
  %2643 = vmatprep.subr.mxu0 0.0
  %2644 = vmatpush1.msra.mxu0 0.0
  %2645 = vmatprep.subr.mxu0 0.0
  %2646 = vmatpush1.msra.mxu0 0.0
  %2647 = vmatprep.subr.mxu0 0.0
  %2648 = vmatpush1.msra.mxu0 0.0
  %2649 = vmatprep.subr.mxu0 0.0
  %2650 = vmatpush1.msra.mxu0 0.0
  %2651 = vmatprep.subr.mxu0 0.0
  %2652 = vmatpush1.msra.mxu0 0.0
  %2653 = vmatprep.subr.mxu0 0.0
  %2654 = vmatpush1.msra.mxu0 0.0
  %2655 = vmatprep.subr.mxu0 0.0
  %2656 = vmatpush1.msra.mxu0 0.0
  %2657 = vmatprep.mubr.f32.mxu0 0.0
  %2658 = vmatmul.mubr.f32.gmra.mrb[0].mxu0 %v2591
  %v2659 = vpop.f32.mrb[0].mxu0
  %v2660 = vadd.f32 %v2589, %v2659
  %v2661 = vpop.f32.mrb[0].mxu0
  %2662 = vdwg.mxu0
  %2663 = vst [vmem:[%s12] sm:$0xff] %v2660
  // Predicated region
  $region46: #{_lambda_.1} parent=0 // pred_check
    _
  $region47: #{_lambda_.1} parent=0 // pred_check_branch
    %2665 = sbr.rel (0) target = $region49
  $region48: #{_lambda_.1} parent=0 // pred_region
    _
  $region49: #{_lambda_.1} parent=0 // pred_fallthru
    _
  // Predicated region
  $region50: #{_lambda_.1} parent=0 // pred_check
    _
  $region51: #{_lambda_.1} parent=0 // pred_check_branch
    %2667 = sbr.rel (0) target = $region53
  $region52: #{_lambda_.1} parent=0 // pred_region
    _
  $region53: #{_lambda_.1} parent=0 // pred_fallthru
    _
  // Predicated region
  $region54: #{_lambda_.1} parent=0 // pred_check
    _
  $region55: #{_lambda_.1} parent=0 // pred_check_branch
    %2669 = sbr.rel (0) target = $region57
  $region56: #{_lambda_.1} parent=0 // pred_region
    _
  $region57: #{_lambda_.1} parent=0 // pred_fallthru
    _
  // Predicated region
  $region58: #{_lambda_.1} parent=0 // pred_check
    _
  $region59: #{_lambda_.1} parent=0 // pred_check_branch
    %2671 = sbr.rel (0) target = $region61
  $region60: #{_lambda_.1} parent=0 // pred_region
    _
  $region61: #{_lambda_.1} parent=0 // pred_fallthru
    _

</llo_original>
